<compile_context>
chip_gen: v5e
topology: v5e:2x2
jax: 0.10.0
libtpu: 0.0.40
codegen_flags: <defaults>
</compile_context>

<pallas_src>
import functools

import jax
import jax.numpy as jnp
from jax.experimental import pallas as pl
from jax.experimental.pallas import tpu as pltpu

D_MODEL = 512
NHEAD = 4
HEAD_DIM = D_MODEL // NHEAD  # 128


def _mha_kernel(q_ref, k_ref, v_ref,
                wq_ref, bq_ref, wk_ref, bk_ref, wv_ref, bv_ref,
                wo_ref, bo_ref,
                out_ref,
                *, b_blk, seq):
    """One batch-block: rows = b_blk*seq, features = D_MODEL."""
    scale = 1.0 / (HEAD_DIM ** 0.5)

    # bf16 activations into the MXU, f32 accumulation, f32 bias add.
    q = q_ref[...].astype(jnp.bfloat16)          # (b_blk*seq, D)
    k = k_ref[...].astype(jnp.bfloat16)
    v = v_ref[...].astype(jnp.bfloat16)

    Q = jnp.dot(q, wq_ref[...], preferred_element_type=jnp.float32) + bq_ref[...]
    K = jnp.dot(k, wk_ref[...], preferred_element_type=jnp.float32) + bk_ref[...]
    V = jnp.dot(v, wv_ref[...], preferred_element_type=jnp.float32) + bv_ref[...]

    # Fold the softmax scale into Q once (touches rows*D elems, not NHEAD*S*S);
    # this VALU pass is hidden under the projection matmuls.
    Q = Q * scale

    # Per-batch views for attention; cast to bf16 once after the f32 bias add.
    Qb = Q.reshape(b_blk, seq, D_MODEL).astype(jnp.bfloat16)
    Kb = K.reshape(b_blk, seq, D_MODEL).astype(jnp.bfloat16)
    Vb = V.reshape(b_blk, seq, D_MODEL).astype(jnp.bfloat16)

    acc = jnp.zeros((b_blk * seq, D_MODEL), jnp.float32)

    for h in range(NHEAD):                       # static unroll; 128-lane head slices
        lo = h * HEAD_DIM
        hi = lo + HEAD_DIM
        Qh = Qb[:, :, lo:hi]                     # (b_blk, seq, HEAD_DIM)
        Kh = Kb[:, :, lo:hi]
        Vh = Vb[:, :, lo:hi]

        # scores: contract the last dims, batch over b (implicit K^T handled by MXU).
        s = jax.lax.dot_general(
            Qh, Kh, (((2,), (2,)), ((0,), (0,))),
            preferred_element_type=jnp.float32)  # (b_blk, seq, seq), f32

        # Numerically-stable softmax in f32 (attn_mask=None configuration).
        s = s - jnp.max(s, axis=-1, keepdims=True)
        e = jnp.exp(s)
        p = e * pl.reciprocal(jnp.sum(e, axis=-1, keepdims=True), approx=True)

        # context: (b_blk, seq, HEAD_DIM) with f32 accumulation.
        ctx = jax.lax.dot_general(
            p.astype(jnp.bfloat16), Vh, (((2,), (1,)), ((0,), (0,))),
            preferred_element_type=jnp.float32)

        # Accumulate the output projection per head (skips the head concat).
        # Static ref slice -> only the aligned 128-row tile of W_out is loaded.
        wo_h = wo_ref[pl.ds(lo, HEAD_DIM), :]
        acc = acc + jnp.dot(
            ctx.reshape(b_blk * seq, HEAD_DIM).astype(jnp.bfloat16),
            wo_h,
            preferred_element_type=jnp.float32)

    out_ref[...] = (acc + bo_ref[...]).astype(out_ref.dtype)


def _pick_batch_block(batch, seq):
    """Batch block so projection GEMMs see a tall M dimension while the
    per-block (S, S) score slabs stay VMEM-friendly; also prefers >=2 grid
    steps so the batch axis can be split across TensorCores."""
    score_cap = max(1, (4 * 1024 * 1024) // max(seq * seq * 4, 1))
    bb = max(1, min(batch, max(1, 512 // max(seq, 1)), score_cap))

    def ok(b):
        # (8,128) constraint: row block must be a multiple of 8 sublanes or
        # cover the full (B*S) dimension.
        return batch % b == 0 and ((b * seq) % 8 == 0 or b == batch)

    while bb > 1 and not ok(bb):
        bb -= 1
    # If the whole batch landed in one block, try halving so the grid has >=2
    # "parallel" steps (megacore / multi-TC can then split the work).
    if bb == batch and batch > 1:
        half = bb // 2
        while half > 1 and not ok(half):
            half -= 1
        if ok(half):
            bb = half
    return bb


@jax.jit
def multihead_attention(query, key, value, params):
    B, S, D = query.shape
    assert D == D_MODEL
    wq, bq, wk, bk, wv, bv, wo, bo = params

    b_blk = _pick_batch_block(B, S)
    grid = (B // b_blk,)
    rows = b_blk * S

    # Fold batch into the matmul M dimension (free layout change in XLA).
    q2 = query.reshape(B * S, D)
    k2 = key.reshape(B * S, D)
    v2 = value.reshape(B * S, D)

    # Cast weights to bf16 once so both the MXU and the weight DMAs are bf16.
    wq_b, wk_b, wv_b, wo_b = (w.astype(jnp.bfloat16) for w in (wq, wk, wv, wo))

    row_spec = pl.BlockSpec((rows, D), lambda i: (i, 0))
    w_spec = pl.BlockSpec((D, D), lambda i: (0, 0))
    b_spec = pl.BlockSpec((1, D), lambda i: (0, 0))

    flops = 8 * B * S * D * D + 4 * B * S * S * D
    bytes_accessed = 4 * B * S * D * 4 + 4 * D * D * 2 + 4 * D * 4
    cost = pl.CostEstimate(flops=flops,
                           transcendentals=B * NHEAD * S * S,
                           bytes_accessed=bytes_accessed)

    kernel = functools.partial(_mha_kernel, b_blk=b_blk, seq=S)

    out2 = pl.pallas_call(
        kernel,
        out_shape=jax.ShapeDtypeStruct((B * S, D), query.dtype),
        grid=grid,
        in_specs=[row_spec, row_spec, row_spec,
                  w_spec, b_spec, w_spec, b_spec, w_spec, b_spec,
                  w_spec, b_spec],
        out_specs=row_spec,
        compiler_params=pltpu.CompilerParams(
            dimension_semantics=("parallel",),
            vmem_limit_bytes=64 * 1024 * 1024),
        cost_estimate=cost,
    )(q2, k2, v2, wq_b, bq, wk_b, bk, wv_b, bv, wo_b, bo)

    return out2.reshape(B, S, D)


def reference_mha(query, key, value, params):
    """Plain-JAX f32 reference matching the PyTorch forward."""
    wq, bq, wk, bk, wv, bv, wo, bo = params
    B, S, D = query.shape

    def proj(x, w, b):
        y = x @ w + b
        return y.reshape(B, S, NHEAD, HEAD_DIM).transpose(0, 2, 1, 3)

    Q = proj(query, wq, bq)
    K = proj(key, wk, bk)
    V = proj(value, wv, bv)
    scores = jnp.einsum("bhqd,bhkd->bhqk", Q, K) / (HEAD_DIM ** 0.5)
    w = jax.nn.softmax(scores, axis=-1)
    o = jnp.einsum("bhqk,bhkd->bhqd", w, V)
    o = o.transpose(0, 2, 1, 3).reshape(B, S, D)
    return o @ wo + bo


def init_params(key):
    ks = jax.random.split(key, 8)

    def w(k):
        return jax.random.normal(k, (D_MODEL, D_MODEL), jnp.float32) * 0.02

    def b(k):
        return jax.random.normal(k, (1, D_MODEL), jnp.float32) * 0.02

    return (w(ks[0]), b(ks[1]),   # q
            w(ks[2]), b(ks[3]),   # k
            w(ks[4]), b(ks[5]),   # v
            w(ks[6]), b(ks[7]))   # out


if __name__ == "__main__":
    key = jax.random.PRNGKey(0)
    kq, kk, kv, kp = jax.random.split(key, 4)

    B, S = 2, 8
    query = jax.random.normal(kq, (B, S, D_MODEL), jnp.float32)
    key_in = jax.random.normal(kk, (B, S, D_MODEL), jnp.float32)
    value = jax.random.normal(kv, (B, S, D_MODEL), jnp.float32)
    params = init_params(kp)

    out = multihead_attention(query, key_in, value, params)
    out = jax.block_until_ready(out)

    ref = reference_mha(query, key_in, value, params)
    assert out.shape == (B, S, D_MODEL)
    # bf16 matmuls (f32 accumulation) -> compare with a relative error bound.
    rel_err = jnp.max(jnp.abs(out - ref)) / jnp.max(jnp.abs(ref))
    assert rel_err < 2e-2, f"mismatch vs reference: rel_err={rel_err}"

    print("KERNEL_OK")
</pallas_src>

<mosaic_0001>
module attributes {stable_mosaic.version = 11 : i64} {
  func.func @_mha_kernel(%arg0: i32, %arg1: memref<8x512xf32, #tpu.memory_space<vmem>>, %arg2: memref<8x512xf32, #tpu.memory_space<vmem>>, %arg3: memref<8x512xf32, #tpu.memory_space<vmem>>, %arg4: memref<512x512xbf16, #tpu.memory_space<vmem>>, %arg5: memref<1x512xf32, #tpu.memory_space<vmem>>, %arg6: memref<512x512xbf16, #tpu.memory_space<vmem>>, %arg7: memref<1x512xf32, #tpu.memory_space<vmem>>, %arg8: memref<512x512xbf16, #tpu.memory_space<vmem>>, %arg9: memref<1x512xf32, #tpu.memory_space<vmem>>, %arg10: memref<512x512xbf16, #tpu.memory_space<vmem>>, %arg11: memref<1x512xf32, #tpu.memory_space<vmem>>, %arg12: memref<8x512xf32, #tpu.memory_space<vmem>>) attributes {dimension_semantics = [#tpu.dimension_semantics<parallel>], iteration_bounds = array<i64: 2>, scalar_prefetch = 0 : i64, scratch_operands = 0 : i64, tpu.core_type = #tpu.core_type<tc>, window_params = [{transform_indices = @transform_0, window_bounds = array<i64: 8, 512>}, {transform_indices = @transform_1, window_bounds = array<i64: 8, 512>}, {transform_indices = @transform_2, window_bounds = array<i64: 8, 512>}, {pipeline_mode = #tpu.pipeline_mode<synchronous>, transform_indices = @transform_3, window_bounds = array<i64: 512, 512>}, {pipeline_mode = #tpu.pipeline_mode<synchronous>, transform_indices = @transform_4, window_bounds = array<i64: 1, 512>}, {pipeline_mode = #tpu.pipeline_mode<synchronous>, transform_indices = @transform_5, window_bounds = array<i64: 512, 512>}, {pipeline_mode = #tpu.pipeline_mode<synchronous>, transform_indices = @transform_6, window_bounds = array<i64: 1, 512>}, {pipeline_mode = #tpu.pipeline_mode<synchronous>, transform_indices = @transform_7, window_bounds = array<i64: 512, 512>}, {pipeline_mode = #tpu.pipeline_mode<synchronous>, transform_indices = @transform_8, window_bounds = array<i64: 1, 512>}, {pipeline_mode = #tpu.pipeline_mode<synchronous>, transform_indices = @transform_9, window_bounds = array<i64: 512, 512>}, {pipeline_mode = #tpu.pipeline_mode<synchronous>, transform_indices = @transform_10, window_bounds = array<i64: 1, 512>}, {transform_indices = @transform_11, window_bounds = array<i64: 8, 512>}]} {
    %c0 = arith.constant 0 : index
    %c0_0 = arith.constant 0 : index
    %0 = vector.load %arg1[%c0, %c0_0] : memref<8x512xf32, #tpu.memory_space<vmem>>, vector<8x512xf32>
    %1 = arith.truncf %0 : vector<8x512xf32> to vector<8x512xbf16>
    %c0_1 = arith.constant 0 : index
    %c0_2 = arith.constant 0 : index
    %2 = vector.load %arg2[%c0_1, %c0_2] : memref<8x512xf32, #tpu.memory_space<vmem>>, vector<8x512xf32>
    %3 = arith.truncf %2 : vector<8x512xf32> to vector<8x512xbf16>
    %c0_3 = arith.constant 0 : index
    %c0_4 = arith.constant 0 : index
    %4 = vector.load %arg3[%c0_3, %c0_4] : memref<8x512xf32, #tpu.memory_space<vmem>>, vector<8x512xf32>
    %5 = arith.truncf %4 : vector<8x512xf32> to vector<8x512xbf16>
    %c0_5 = arith.constant 0 : index
    %c0_6 = arith.constant 0 : index
    %6 = vector.load %arg4[%c0_5, %c0_6] : memref<512x512xbf16, #tpu.memory_space<vmem>>, vector<512x512xbf16>
    %cst = arith.constant dense<0.000000e+00> : vector<8x512xf32>
    %7 = tpu.matmul %1, %6, %cst {dimension_numbers = #tpu.dot_dimension_numbers<[1], [0], [0], [1], [0, 0, 1, 1], [], []>} : vector<8x512xbf16>, vector<512x512xbf16>, vector<8x512xf32> -> vector<8x512xf32>
    %c0_7 = arith.constant 0 : index
    %c0_8 = arith.constant 0 : index
    %8 = vector.load %arg5[%c0_7, %c0_8] : memref<1x512xf32, #tpu.memory_space<vmem>>, vector<1x512xf32>
    %9 = vector.broadcast %8 : vector<1x512xf32> to vector<8x512xf32>
    %10 = arith.addf %7, %9 : vector<8x512xf32>
    %c0_9 = arith.constant 0 : index
    %c0_10 = arith.constant 0 : index
    %11 = vector.load %arg6[%c0_9, %c0_10] : memref<512x512xbf16, #tpu.memory_space<vmem>>, vector<512x512xbf16>
    %cst_11 = arith.constant dense<0.000000e+00> : vector<8x512xf32>
    %12 = tpu.matmul %3, %11, %cst_11 {dimension_numbers = #tpu.dot_dimension_numbers<[1], [0], [0], [1], [0, 0, 1, 1], [], []>} : vector<8x512xbf16>, vector<512x512xbf16>, vector<8x512xf32> -> vector<8x512xf32>
    %c0_12 = arith.constant 0 : index
    %c0_13 = arith.constant 0 : index
    %13 = vector.load %arg7[%c0_12, %c0_13] : memref<1x512xf32, #tpu.memory_space<vmem>>, vector<1x512xf32>
    %14 = vector.broadcast %13 : vector<1x512xf32> to vector<8x512xf32>
    %15 = arith.addf %12, %14 : vector<8x512xf32>
    %c0_14 = arith.constant 0 : index
    %c0_15 = arith.constant 0 : index
    %16 = vector.load %arg8[%c0_14, %c0_15] : memref<512x512xbf16, #tpu.memory_space<vmem>>, vector<512x512xbf16>
    %cst_16 = arith.constant dense<0.000000e+00> : vector<8x512xf32>
    %17 = tpu.matmul %5, %16, %cst_16 {dimension_numbers = #tpu.dot_dimension_numbers<[1], [0], [0], [1], [0, 0, 1, 1], [], []>} : vector<8x512xbf16>, vector<512x512xbf16>, vector<8x512xf32> -> vector<8x512xf32>
    %c0_17 = arith.constant 0 : index
    %c0_18 = arith.constant 0 : index
    %18 = vector.load %arg9[%c0_17, %c0_18] : memref<1x512xf32, #tpu.memory_space<vmem>>, vector<1x512xf32>
    %19 = vector.broadcast %18 : vector<1x512xf32> to vector<8x512xf32>
    %20 = arith.addf %17, %19 : vector<8x512xf32>
    %cst_19 = arith.constant 0.0883883461 : f32
    %21 = vector.broadcast %cst_19 : f32 to vector<8x512xf32>
    %22 = arith.mulf %10, %21 : vector<8x512xf32>
    %23 = vector.shape_cast %22 : vector<8x512xf32> to vector<1x8x512xf32>
    %24 = arith.truncf %23 : vector<1x8x512xf32> to vector<1x8x512xbf16>
    %25 = vector.shape_cast %15 : vector<8x512xf32> to vector<1x8x512xf32>
    %26 = arith.truncf %25 : vector<1x8x512xf32> to vector<1x8x512xbf16>
    %27 = vector.shape_cast %20 : vector<8x512xf32> to vector<1x8x512xf32>
    %28 = arith.truncf %27 : vector<1x8x512xf32> to vector<1x8x512xbf16>
    %cst_20 = arith.constant 0.000000e+00 : f32
    %29 = vector.broadcast %cst_20 : f32 to vector<8x512xf32>
    %30 = vector.extract_strided_slice %24 {offsets = [0, 0, 0], sizes = [1, 8, 128], strides = [1, 1, 1]} : vector<1x8x512xbf16> to vector<1x8x128xbf16>
    %31 = vector.extract_strided_slice %26 {offsets = [0, 0, 0], sizes = [1, 8, 128], strides = [1, 1, 1]} : vector<1x8x512xbf16> to vector<1x8x128xbf16>
    %32 = vector.extract_strided_slice %28 {offsets = [0, 0, 0], sizes = [1, 8, 128], strides = [1, 1, 1]} : vector<1x8x512xbf16> to vector<1x8x128xbf16>
    %cst_21 = arith.constant dense<0.000000e+00> : vector<1x8x8xf32>
    %33 = tpu.matmul %30, %31, %cst_21 {dimension_numbers = #tpu.dot_dimension_numbers<[2], [2], [1], [1], [0, 0, 0, 1, 1, 1], [0], [0]>} : vector<1x8x128xbf16>, vector<1x8x128xbf16>, vector<1x8x8xf32> -> vector<1x8x8xf32>
    %cst_22 = arith.constant dense<0xFF800000> : vector<1x8xf32>
    %34 = vector.multi_reduction <maximumf>, %33, %cst_22 [2] : vector<1x8x8xf32> to vector<1x8xf32>
    %35 = vector.shape_cast %34 : vector<1x8xf32> to vector<1x8x1xf32>
    %36 = vector.broadcast %35 : vector<1x8x1xf32> to vector<1x8x8xf32>
    %37 = arith.subf %33, %36 : vector<1x8x8xf32>
    %38 = math.exp %37 : vector<1x8x8xf32>
    %cst_23 = arith.constant dense<0.000000e+00> : vector<1x8xf32>
    %39 = vector.multi_reduction <add>, %38, %cst_23 [2] : vector<1x8x8xf32> to vector<1x8xf32>
    %40 = vector.shape_cast %39 : vector<1x8xf32> to vector<1x8x1xf32>
    %41 = tpu.reciprocal %40 {approx = true} : vector<1x8x1xf32> -> vector<1x8x1xf32>
    %42 = vector.broadcast %41 : vector<1x8x1xf32> to vector<1x8x8xf32>
    %43 = arith.mulf %38, %42 : vector<1x8x8xf32>
    %44 = arith.truncf %43 : vector<1x8x8xf32> to vector<1x8x8xbf16>
    %cst_24 = arith.constant dense<0.000000e+00> : vector<1x8x128xf32>
    %45 = tpu.matmul %44, %32, %cst_24 {dimension_numbers = #tpu.dot_dimension_numbers<[2], [1], [1], [2], [0, 0, 0, 1, 1, 2], [0], [0]>} : vector<1x8x8xbf16>, vector<1x8x128xbf16>, vector<1x8x128xf32> -> vector<1x8x128xf32>
    %c0_25 = arith.constant 0 : index
    %c0_26 = arith.constant 0 : index
    %46 = vector.load %arg10[%c0_25, %c0_26] : memref<512x512xbf16, #tpu.memory_space<vmem>>, vector<128x512xbf16>
    %47 = vector.shape_cast %45 : vector<1x8x128xf32> to vector<8x128xf32>
    %48 = arith.truncf %47 : vector<8x128xf32> to vector<8x128xbf16>
    %cst_27 = arith.constant dense<0.000000e+00> : vector<8x512xf32>
    %49 = tpu.matmul %48, %46, %cst_27 {dimension_numbers = #tpu.dot_dimension_numbers<[1], [0], [0], [1], [0, 0, 1, 1], [], []>} : vector<8x128xbf16>, vector<128x512xbf16>, vector<8x512xf32> -> vector<8x512xf32>
    %50 = arith.addf %29, %49 : vector<8x512xf32>
    %51 = vector.extract_strided_slice %24 {offsets = [0, 0, 128], sizes = [1, 8, 128], strides = [1, 1, 1]} : vector<1x8x512xbf16> to vector<1x8x128xbf16>
    %52 = vector.extract_strided_slice %26 {offsets = [0, 0, 128], sizes = [1, 8, 128], strides = [1, 1, 1]} : vector<1x8x512xbf16> to vector<1x8x128xbf16>
    %53 = vector.extract_strided_slice %28 {offsets = [0, 0, 128], sizes = [1, 8, 128], strides = [1, 1, 1]} : vector<1x8x512xbf16> to vector<1x8x128xbf16>
    %cst_28 = arith.constant dense<0.000000e+00> : vector<1x8x8xf32>
    %54 = tpu.matmul %51, %52, %cst_28 {dimension_numbers = #tpu.dot_dimension_numbers<[2], [2], [1], [1], [0, 0, 0, 1, 1, 1], [0], [0]>} : vector<1x8x128xbf16>, vector<1x8x128xbf16>, vector<1x8x8xf32> -> vector<1x8x8xf32>
    %cst_29 = arith.constant dense<0xFF800000> : vector<1x8xf32>
    %55 = vector.multi_reduction <maximumf>, %54, %cst_29 [2] : vector<1x8x8xf32> to vector<1x8xf32>
    %56 = vector.shape_cast %55 : vector<1x8xf32> to vector<1x8x1xf32>
    %57 = vector.broadcast %56 : vector<1x8x1xf32> to vector<1x8x8xf32>
    %58 = arith.subf %54, %57 : vector<1x8x8xf32>
    %59 = math.exp %58 : vector<1x8x8xf32>
    %cst_30 = arith.constant dense<0.000000e+00> : vector<1x8xf32>
    %60 = vector.multi_reduction <add>, %59, %cst_30 [2] : vector<1x8x8xf32> to vector<1x8xf32>
    %61 = vector.shape_cast %60 : vector<1x8xf32> to vector<1x8x1xf32>
    %62 = tpu.reciprocal %61 {approx = true} : vector<1x8x1xf32> -> vector<1x8x1xf32>
    %63 = vector.broadcast %62 : vector<1x8x1xf32> to vector<1x8x8xf32>
    %64 = arith.mulf %59, %63 : vector<1x8x8xf32>
    %65 = arith.truncf %64 : vector<1x8x8xf32> to vector<1x8x8xbf16>
    %cst_31 = arith.constant dense<0.000000e+00> : vector<1x8x128xf32>
    %66 = tpu.matmul %65, %53, %cst_31 {dimension_numbers = #tpu.dot_dimension_numbers<[2], [1], [1], [2], [0, 0, 0, 1, 1, 2], [0], [0]>} : vector<1x8x8xbf16>, vector<1x8x128xbf16>, vector<1x8x128xf32> -> vector<1x8x128xf32>
    %c128 = arith.constant 128 : index
    %c0_32 = arith.constant 0 : index
    %67 = vector.load %arg10[%c128, %c0_32] : memref<512x512xbf16, #tpu.memory_space<vmem>>, vector<128x512xbf16>
    %68 = vector.shape_cast %66 : vector<1x8x128xf32> to vector<8x128xf32>
    %69 = arith.truncf %68 : vector<8x128xf32> to vector<8x128xbf16>
    %cst_33 = arith.constant dense<0.000000e+00> : vector<8x512xf32>
    %70 = tpu.matmul %69, %67, %cst_33 {dimension_numbers = #tpu.dot_dimension_numbers<[1], [0], [0], [1], [0, 0, 1, 1], [], []>} : vector<8x128xbf16>, vector<128x512xbf16>, vector<8x512xf32> -> vector<8x512xf32>
    %71 = arith.addf %50, %70 : vector<8x512xf32>
    %72 = vector.extract_strided_slice %24 {offsets = [0, 0, 256], sizes = [1, 8, 128], strides = [1, 1, 1]} : vector<1x8x512xbf16> to vector<1x8x128xbf16>
    %73 = vector.extract_strided_slice %26 {offsets = [0, 0, 256], sizes = [1, 8, 128], strides = [1, 1, 1]} : vector<1x8x512xbf16> to vector<1x8x128xbf16>
    %74 = vector.extract_strided_slice %28 {offsets = [0, 0, 256], sizes = [1, 8, 128], strides = [1, 1, 1]} : vector<1x8x512xbf16> to vector<1x8x128xbf16>
    %cst_34 = arith.constant dense<0.000000e+00> : vector<1x8x8xf32>
    %75 = tpu.matmul %72, %73, %cst_34 {dimension_numbers = #tpu.dot_dimension_numbers<[2], [2], [1], [1], [0, 0, 0, 1, 1, 1], [0], [0]>} : vector<1x8x128xbf16>, vector<1x8x128xbf16>, vector<1x8x8xf32> -> vector<1x8x8xf32>
    %cst_35 = arith.constant dense<0xFF800000> : vector<1x8xf32>
    %76 = vector.multi_reduction <maximumf>, %75, %cst_35 [2] : vector<1x8x8xf32> to vector<1x8xf32>
    %77 = vector.shape_cast %76 : vector<1x8xf32> to vector<1x8x1xf32>
    %78 = vector.broadcast %77 : vector<1x8x1xf32> to vector<1x8x8xf32>
    %79 = arith.subf %75, %78 : vector<1x8x8xf32>
    %80 = math.exp %79 : vector<1x8x8xf32>
    %cst_36 = arith.constant dense<0.000000e+00> : vector<1x8xf32>
    %81 = vector.multi_reduction <add>, %80, %cst_36 [2] : vector<1x8x8xf32> to vector<1x8xf32>
    %82 = vector.shape_cast %81 : vector<1x8xf32> to vector<1x8x1xf32>
    %83 = tpu.reciprocal %82 {approx = true} : vector<1x8x1xf32> -> vector<1x8x1xf32>
    %84 = vector.broadcast %83 : vector<1x8x1xf32> to vector<1x8x8xf32>
    %85 = arith.mulf %80, %84 : vector<1x8x8xf32>
    %86 = arith.truncf %85 : vector<1x8x8xf32> to vector<1x8x8xbf16>
    %cst_37 = arith.constant dense<0.000000e+00> : vector<1x8x128xf32>
    %87 = tpu.matmul %86, %74, %cst_37 {dimension_numbers = #tpu.dot_dimension_numbers<[2], [1], [1], [2], [0, 0, 0, 1, 1, 2], [0], [0]>} : vector<1x8x8xbf16>, vector<1x8x128xbf16>, vector<1x8x128xf32> -> vector<1x8x128xf32>
    %c256 = arith.constant 256 : index
    %c0_38 = arith.constant 0 : index
    %88 = vector.load %arg10[%c256, %c0_38] : memref<512x512xbf16, #tpu.memory_space<vmem>>, vector<128x512xbf16>
    %89 = vector.shape_cast %87 : vector<1x8x128xf32> to vector<8x128xf32>
    %90 = arith.truncf %89 : vector<8x128xf32> to vector<8x128xbf16>
    %cst_39 = arith.constant dense<0.000000e+00> : vector<8x512xf32>
    %91 = tpu.matmul %90, %88, %cst_39 {dimension_numbers = #tpu.dot_dimension_numbers<[1], [0], [0], [1], [0, 0, 1, 1], [], []>} : vector<8x128xbf16>, vector<128x512xbf16>, vector<8x512xf32> -> vector<8x512xf32>
    %92 = arith.addf %71, %91 : vector<8x512xf32>
    %93 = vector.extract_strided_slice %24 {offsets = [0, 0, 384], sizes = [1, 8, 128], strides = [1, 1, 1]} : vector<1x8x512xbf16> to vector<1x8x128xbf16>
    %94 = vector.extract_strided_slice %26 {offsets = [0, 0, 384], sizes = [1, 8, 128], strides = [1, 1, 1]} : vector<1x8x512xbf16> to vector<1x8x128xbf16>
    %95 = vector.extract_strided_slice %28 {offsets = [0, 0, 384], sizes = [1, 8, 128], strides = [1, 1, 1]} : vector<1x8x512xbf16> to vector<1x8x128xbf16>
    %cst_40 = arith.constant dense<0.000000e+00> : vector<1x8x8xf32>
    %96 = tpu.matmul %93, %94, %cst_40 {dimension_numbers = #tpu.dot_dimension_numbers<[2], [2], [1], [1], [0, 0, 0, 1, 1, 1], [0], [0]>} : vector<1x8x128xbf16>, vector<1x8x128xbf16>, vector<1x8x8xf32> -> vector<1x8x8xf32>
    %cst_41 = arith.constant dense<0xFF800000> : vector<1x8xf32>
    %97 = vector.multi_reduction <maximumf>, %96, %cst_41 [2] : vector<1x8x8xf32> to vector<1x8xf32>
    %98 = vector.shape_cast %97 : vector<1x8xf32> to vector<1x8x1xf32>
    %99 = vector.broadcast %98 : vector<1x8x1xf32> to vector<1x8x8xf32>
    %100 = arith.subf %96, %99 : vector<1x8x8xf32>
    %101 = math.exp %100 : vector<1x8x8xf32>
    %cst_42 = arith.constant dense<0.000000e+00> : vector<1x8xf32>
    %102 = vector.multi_reduction <add>, %101, %cst_42 [2] : vector<1x8x8xf32> to vector<1x8xf32>
    %103 = vector.shape_cast %102 : vector<1x8xf32> to vector<1x8x1xf32>
    %104 = tpu.reciprocal %103 {approx = true} : vector<1x8x1xf32> -> vector<1x8x1xf32>
    %105 = vector.broadcast %104 : vector<1x8x1xf32> to vector<1x8x8xf32>
    %106 = arith.mulf %101, %105 : vector<1x8x8xf32>
    %107 = arith.truncf %106 : vector<1x8x8xf32> to vector<1x8x8xbf16>
    %cst_43 = arith.constant dense<0.000000e+00> : vector<1x8x128xf32>
    %108 = tpu.matmul %107, %95, %cst_43 {dimension_numbers = #tpu.dot_dimension_numbers<[2], [1], [1], [2], [0, 0, 0, 1, 1, 2], [0], [0]>} : vector<1x8x8xbf16>, vector<1x8x128xbf16>, vector<1x8x128xf32> -> vector<1x8x128xf32>
    %c384 = arith.constant 384 : index
    %c0_44 = arith.constant 0 : index
    %109 = vector.load %arg10[%c384, %c0_44] : memref<512x512xbf16, #tpu.memory_space<vmem>>, vector<128x512xbf16>
    %110 = vector.shape_cast %108 : vector<1x8x128xf32> to vector<8x128xf32>
    %111 = arith.truncf %110 : vector<8x128xf32> to vector<8x128xbf16>
    %cst_45 = arith.constant dense<0.000000e+00> : vector<8x512xf32>
    %112 = tpu.matmul %111, %109, %cst_45 {dimension_numbers = #tpu.dot_dimension_numbers<[1], [0], [0], [1], [0, 0, 1, 1], [], []>} : vector<8x128xbf16>, vector<128x512xbf16>, vector<8x512xf32> -> vector<8x512xf32>
    %113 = arith.addf %92, %112 : vector<8x512xf32>
    %c0_46 = arith.constant 0 : index
    %c0_47 = arith.constant 0 : index
    %114 = vector.load %arg11[%c0_46, %c0_47] : memref<1x512xf32, #tpu.memory_space<vmem>>, vector<1x512xf32>
    %115 = vector.broadcast %114 : vector<1x512xf32> to vector<8x512xf32>
    %116 = arith.addf %113, %115 : vector<8x512xf32>
    %c0_48 = arith.constant 0 : index
    %c0_49 = arith.constant 0 : index
    %117 = vector.load %arg12[%c0_48, %c0_49] : memref<8x512xf32, #tpu.memory_space<vmem>>, vector<8x512xf32>
    tpu.vector_store %arg12[%c0_48, %c0_49], %116 {strides = array<i32>} : memref<8x512xf32, #tpu.memory_space<vmem>>, vector<8x512xf32>,
    return
  }
  func.func @transform_0(%arg0: i32) -> (i32, i32) {
    %c0_i32 = arith.constant 0 : i32
    %c0_i32_0 = arith.constant 0 : i32
    return %arg0, %c0_i32 : i32, i32
  }
  func.func @transform_1(%arg0: i32) -> (i32, i32) {
    %c0_i32 = arith.constant 0 : i32
    %c0_i32_0 = arith.constant 0 : i32
    return %arg0, %c0_i32 : i32, i32
  }
  func.func @transform_2(%arg0: i32) -> (i32, i32) {
    %c0_i32 = arith.constant 0 : i32
    %c0_i32_0 = arith.constant 0 : i32
    return %arg0, %c0_i32 : i32, i32
  }
  func.func @transform_3(%arg0: i32) -> (i32, i32) {
    %c0_i32 = arith.constant 0 : i32
    %c0_i32_0 = arith.constant 0 : i32
    %c0_i32_1 = arith.constant 0 : i32
    return %c0_i32, %c0_i32_0 : i32, i32
  }
  func.func @transform_4(%arg0: i32) -> (i32, i32) {
    %c0_i32 = arith.constant 0 : i32
    %c0_i32_0 = arith.constant 0 : i32
    %c0_i32_1 = arith.constant 0 : i32
    return %c0_i32, %c0_i32_0 : i32, i32
  }
  func.func @transform_5(%arg0: i32) -> (i32, i32) {
    %c0_i32 = arith.constant 0 : i32
    %c0_i32_0 = arith.constant 0 : i32
    %c0_i32_1 = arith.constant 0 : i32
    return %c0_i32, %c0_i32_0 : i32, i32
  }
  func.func @transform_6(%arg0: i32) -> (i32, i32) {
    %c0_i32 = arith.constant 0 : i32
    %c0_i32_0 = arith.constant 0 : i32
    %c0_i32_1 = arith.constant 0 : i32
    return %c0_i32, %c0_i32_0 : i32, i32
  }
  func.func @transform_7(%arg0: i32) -> (i32, i32) {
    %c0_i32 = arith.constant 0 : i32
    %c0_i32_0 = arith.constant 0 : i32
    %c0_i32_1 = arith.constant 0 : i32
    return %c0_i32, %c0_i32_0 : i32, i32
  }
  func.func @transform_8(%arg0: i32) -> (i32, i32) {
    %c0_i32 = arith.constant 0 : i32
    %c0_i32_0 = arith.constant 0 : i32
    %c0_i32_1 = arith.constant 0 : i32
    return %c0_i32, %c0_i32_0 : i32, i32
  }
  func.func @transform_9(%arg0: i32) -> (i32, i32) {
    %c0_i32 = arith.constant 0 : i32
    %c0_i32_0 = arith.constant 0 : i32
    %c0_i32_1 = arith.constant 0 : i32
    return %c0_i32, %c0_i32_0 : i32, i32
  }
  func.func @transform_10(%arg0: i32) -> (i32, i32) {
    %c0_i32 = arith.constant 0 : i32
    %c0_i32_0 = arith.constant 0 : i32
    %c0_i32_1 = arith.constant 0 : i32
    return %c0_i32, %c0_i32_0 : i32, i32
  }
  func.func @transform_11(%arg0: i32) -> (i32, i32) {
    %c0_i32 = arith.constant 0 : i32
    %c0_i32_0 = arith.constant 0 : i32
    return %arg0, %c0_i32 : i32, i32
  }
}

</mosaic_0001>

<llo_original>
// kernel: multihead_attention.1
$region0: #{multihead_attention.1}
  #allocation0 [shape = 'u32[]', space=smem, size = 0x4, offset = 0x4, fixed_abs, tag = 'smem constant byte address 0x4 - core index']
  #allocation1 [shape = 'u32[72,128]{1,0:T(1,128)}', space=vmem, size = 0x9000, scoped, tag = 'internal scratch']
  %s0 = inlined_call_operand.vmem [shape: f32[16,512], index: 0, kind: input, shape index: {}]
  %s1 = inlined_call_operand.vmem [shape: f32[16,512], index: 1, kind: input, shape index: {}]
  %s2 = inlined_call_operand.vmem [shape: f32[16,512], index: 2, kind: input, shape index: {}]
  %s3 = inlined_call_operand.vmem [shape: bf16[512,512], index: 3, kind: input, shape index: {}]
  %s4 = inlined_call_operand.vmem [shape: f32[1,512], index: 4, kind: input, shape index: {}]
  %s5 = inlined_call_operand.vmem [shape: bf16[512,512], index: 5, kind: input, shape index: {}]
  %s6 = inlined_call_operand.vmem [shape: f32[1,512], index: 6, kind: input, shape index: {}]
  %s7 = inlined_call_operand.vmem [shape: bf16[512,512], index: 7, kind: input, shape index: {}]
  %s8 = inlined_call_operand.vmem [shape: f32[1,512], index: 8, kind: input, shape index: {}]
  %s9 = inlined_call_operand.vmem [shape: bf16[512,512], index: 9, kind: input, shape index: {}]
  %s10 = inlined_call_operand.vmem [shape: f32[1,512], index: 10, kind: input, shape index: {}]
  %s11 = inlined_call_operand.hbm [shape: f32[16,512], index: 11, kind: output, shape index: {}]
  %s12 = sld [smem:[#allocation0]]
  $region77: #{multihead_attention.1} parent=0
    _
  %s14 = ssub.s32 1, %s12
  %s15 = scalar_select 0, %s14, %s12
  $region1: #{multihead_attention.1} parent=0
    #allocation2 [shape = 'u8[32768]{0}', space=vmem, size = 0x8000, scoped, tag = 'output window, operand 0']
    #allocation3 [shape = 's32[2]{0}', space=sflag, size = 0x8, scoped, tag = 'scoped memory for multihead_attention.1']
    %16 = vsyncpa [#allocation3], 0
    %s17 = scalar_lea.sflag [#allocation3], 1
    %18 = vsyncpa %s17, 0
    loop: start=0, step=1, limit=4
    $region2: #{multihead_attention.1} parent=1 // loop_pre_header
      _
    $region3: #{multihead_attention.1} parent=1 // loop_header
      %s20 = sphi 0, %s24
      %p21 = scmp.ge.s32.totalorder %s20, 4
      %s30 = sphi 0, %s32
      %s33 = sphi 0, %s30
      %s34 = sphi 0, %s33
      %s50 = sphi 0, %s34
      %s56 = sphi 0, %s58
      %s59 = sphi 0, %s56
      %s60 = sphi 0, %s59
      %s76 = sphi 0, %s60
      %s82 = sphi 0, %s84
      %s85 = sphi 0, %s82
      %s86 = sphi 0, %s85
      %s102 = sphi 0, %s86
      %s106 = sphi 0, %s106
      %s108 = sphi 0, %s106
      %s109 = sphi 0, %s108
      %s123 = sphi 0, %s109
      %s127 = sphi 0, %s127
      %s129 = sphi 0, %s127
      %s130 = sphi 0, %s129
      %s144 = sphi 0, %s130
      %s148 = sphi 0, %s148
      %s150 = sphi 0, %s148
      %s151 = sphi 0, %s150
      %s165 = sphi 0, %s151
      %s169 = sphi 0, %s169
      %s171 = sphi 0, %s169
      %s172 = sphi 0, %s171
      %s186 = sphi 0, %s172
      %s190 = sphi 0, %s190
      %s192 = sphi 0, %s190
      %s193 = sphi 0, %s192
      %s207 = sphi 0, %s193
      %s211 = sphi 0, %s211
      %s213 = sphi 0, %s211
      %s214 = sphi 0, %s213
      %s228 = sphi 0, %s214
      %s232 = sphi 0, %s232
      %s234 = sphi 0, %s232
      %s235 = sphi 0, %s234
      %s249 = sphi 0, %s235
      %s253 = sphi 0, %s253
      %s255 = sphi 0, %s253
      %s256 = sphi 0, %s255
      %s270 = sphi 0, %s256
      %s276 = sphi 0, %s278
      %s279 = sphi 0, %s276
      %s280 = sphi 0, %s279
      %s296 = sphi 0, %s280
    $region4: #{multihead_attention.1} parent=1 // loop_header_branch
      %23 = sbr.rel (%p21) target = $region8
    $region5: #{multihead_attention.1} parent=1 // loop_body
      %s25 = ssub.s32 %s20, 1
      %s26 = ssub.s32 %s20, 2
      %s27 = sadd.s32 %s20, 1
      %s28 = ssub.s32 %s20, %s27
      %p29 = scmp.eq.s32.totalorder %s28, 0
      %s31 = sadd.s32 %s30, 1
      %s32 = scalar_select %p29, %s30, %s31
      %p35 = pneg %p29
      %p36 = scmp.eq.s32.totalorder %s20, 1
      %p37 = por %p35, %p36
      %p38 = scmp.ne.s32.totalorder %s30, %s33
      %p39 = scmp.eq.s32.totalorder %s20, 0
      %p40 = por %p38, %p39
      %p41 = scmp.ne.s32.totalorder %s30, %s33
      %p42 = scmp.eq.s32.totalorder %s25, 1
      %p43 = por %p41, %p42
      %p44 = scmp.ne.s32.totalorder %s33, %s34
      %p45 = scmp.eq.s32.totalorder %s25, 0
      %p46 = por %p44, %p45
      %p47 = scmp.ne.s32.totalorder %s33, %s34
      %p48 = scmp.eq.s32.totalorder %s26, 1
      %p49 = por %p47, %p48
      %p51 = scmp.ne.s32.totalorder %s34, %s50
      %p52 = scmp.eq.s32.totalorder %s26, 0
      %p53 = por %p51, %p52
      %s54 = ssub.s32 %s20, %s27
      %p55 = scmp.eq.s32.totalorder %s54, 0
      %s57 = sadd.s32 %s56, 1
      %s58 = scalar_select %p55, %s56, %s57
      %p61 = pneg %p55
      %p62 = scmp.eq.s32.totalorder %s20, 1
      %p63 = por %p61, %p62
      %p64 = scmp.ne.s32.totalorder %s56, %s59
      %p65 = scmp.eq.s32.totalorder %s20, 0
      %p66 = por %p64, %p65
      %p67 = scmp.ne.s32.totalorder %s56, %s59
      %p68 = scmp.eq.s32.totalorder %s25, 1
      %p69 = por %p67, %p68
      %p70 = scmp.ne.s32.totalorder %s59, %s60
      %p71 = scmp.eq.s32.totalorder %s25, 0
      %p72 = por %p70, %p71
      %p73 = scmp.ne.s32.totalorder %s59, %s60
      %p74 = scmp.eq.s32.totalorder %s26, 1
      %p75 = por %p73, %p74
      %p77 = scmp.ne.s32.totalorder %s60, %s76
      %p78 = scmp.eq.s32.totalorder %s26, 0
      %p79 = por %p77, %p78
      %s80 = ssub.s32 %s20, %s27
      %p81 = scmp.eq.s32.totalorder %s80, 0
      %s83 = sadd.s32 %s82, 1
      %s84 = scalar_select %p81, %s82, %s83
      %p87 = pneg %p81
      %p88 = scmp.eq.s32.totalorder %s20, 1
      %p89 = por %p87, %p88
      %p90 = scmp.ne.s32.totalorder %s82, %s85
      %p91 = scmp.eq.s32.totalorder %s20, 0
      %p92 = por %p90, %p91
      %p93 = scmp.ne.s32.totalorder %s82, %s85
      %p94 = scmp.eq.s32.totalorder %s25, 1
      %p95 = por %p93, %p94
      %p96 = scmp.ne.s32.totalorder %s85, %s86
      %p97 = scmp.eq.s32.totalorder %s25, 0
      %p98 = por %p96, %p97
      %p99 = scmp.ne.s32.totalorder %s85, %s86
      %p100 = scmp.eq.s32.totalorder %s26, 1
      %p101 = por %p99, %p100
      %p103 = scmp.ne.s32.totalorder %s86, %s102
      %p104 = scmp.eq.s32.totalorder %s26, 0
      %p105 = por %p103, %p104
      %s107 = sadd.s32 %s106, 1
      %p110 = scmp.eq.s32.totalorder %s20, 1
      %p111 = scmp.ne.s32.totalorder %s106, %s108
      %p112 = scmp.eq.s32.totalorder %s20, 0
      %p113 = por %p111, %p112
      %p114 = scmp.ne.s32.totalorder %s106, %s108
      %p115 = scmp.eq.s32.totalorder %s25, 1
      %p116 = por %p114, %p115
      %p117 = scmp.ne.s32.totalorder %s108, %s109
      %p118 = scmp.eq.s32.totalorder %s25, 0
      %p119 = por %p117, %p118
      %p120 = scmp.ne.s32.totalorder %s108, %s109
      %p121 = scmp.eq.s32.totalorder %s26, 1
      %p122 = por %p120, %p121
      %p124 = scmp.ne.s32.totalorder %s109, %s123
      %p125 = scmp.eq.s32.totalorder %s26, 0
      %p126 = por %p124, %p125
      %s128 = sadd.s32 %s127, 1
      %p131 = scmp.eq.s32.totalorder %s20, 1
      %p132 = scmp.ne.s32.totalorder %s127, %s129
      %p133 = scmp.eq.s32.totalorder %s20, 0
      %p134 = por %p132, %p133
      %p135 = scmp.ne.s32.totalorder %s127, %s129
      %p136 = scmp.eq.s32.totalorder %s25, 1
      %p137 = por %p135, %p136
      %p138 = scmp.ne.s32.totalorder %s129, %s130
      %p139 = scmp.eq.s32.totalorder %s25, 0
      %p140 = por %p138, %p139
      %p141 = scmp.ne.s32.totalorder %s129, %s130
      %p142 = scmp.eq.s32.totalorder %s26, 1
      %p143 = por %p141, %p142
      %p145 = scmp.ne.s32.totalorder %s130, %s144
      %p146 = scmp.eq.s32.totalorder %s26, 0
      %p147 = por %p145, %p146
      %s149 = sadd.s32 %s148, 1
      %p152 = scmp.eq.s32.totalorder %s20, 1
      %p153 = scmp.ne.s32.totalorder %s148, %s150
      %p154 = scmp.eq.s32.totalorder %s20, 0
      %p155 = por %p153, %p154
      %p156 = scmp.ne.s32.totalorder %s148, %s150
      %p157 = scmp.eq.s32.totalorder %s25, 1
      %p158 = por %p156, %p157
      %p159 = scmp.ne.s32.totalorder %s150, %s151
      %p160 = scmp.eq.s32.totalorder %s25, 0
      %p161 = por %p159, %p160
      %p162 = scmp.ne.s32.totalorder %s150, %s151
      %p163 = scmp.eq.s32.totalorder %s26, 1
      %p164 = por %p162, %p163
      %p166 = scmp.ne.s32.totalorder %s151, %s165
      %p167 = scmp.eq.s32.totalorder %s26, 0
      %p168 = por %p166, %p167
      %s170 = sadd.s32 %s169, 1
      %p173 = scmp.eq.s32.totalorder %s20, 1
      %p174 = scmp.ne.s32.totalorder %s169, %s171
      %p175 = scmp.eq.s32.totalorder %s20, 0
      %p176 = por %p174, %p175
      %p177 = scmp.ne.s32.totalorder %s169, %s171
      %p178 = scmp.eq.s32.totalorder %s25, 1
      %p179 = por %p177, %p178
      %p180 = scmp.ne.s32.totalorder %s171, %s172
      %p181 = scmp.eq.s32.totalorder %s25, 0
      %p182 = por %p180, %p181
      %p183 = scmp.ne.s32.totalorder %s171, %s172
      %p184 = scmp.eq.s32.totalorder %s26, 1
      %p185 = por %p183, %p184
      %p187 = scmp.ne.s32.totalorder %s172, %s186
      %p188 = scmp.eq.s32.totalorder %s26, 0
      %p189 = por %p187, %p188
      %s191 = sadd.s32 %s190, 1
      %p194 = scmp.eq.s32.totalorder %s20, 1
      %p195 = scmp.ne.s32.totalorder %s190, %s192
      %p196 = scmp.eq.s32.totalorder %s20, 0
      %p197 = por %p195, %p196
      %p198 = scmp.ne.s32.totalorder %s190, %s192
      %p199 = scmp.eq.s32.totalorder %s25, 1
      %p200 = por %p198, %p199
      %p201 = scmp.ne.s32.totalorder %s192, %s193
      %p202 = scmp.eq.s32.totalorder %s25, 0
      %p203 = por %p201, %p202
      %p204 = scmp.ne.s32.totalorder %s192, %s193
      %p205 = scmp.eq.s32.totalorder %s26, 1
      %p206 = por %p204, %p205
      %p208 = scmp.ne.s32.totalorder %s193, %s207
      %p209 = scmp.eq.s32.totalorder %s26, 0
      %p210 = por %p208, %p209
      %s212 = sadd.s32 %s211, 1
      %p215 = scmp.eq.s32.totalorder %s20, 1
      %p216 = scmp.ne.s32.totalorder %s211, %s213
      %p217 = scmp.eq.s32.totalorder %s20, 0
      %p218 = por %p216, %p217
      %p219 = scmp.ne.s32.totalorder %s211, %s213
      %p220 = scmp.eq.s32.totalorder %s25, 1
      %p221 = por %p219, %p220
      %p222 = scmp.ne.s32.totalorder %s213, %s214
      %p223 = scmp.eq.s32.totalorder %s25, 0
      %p224 = por %p222, %p223
      %p225 = scmp.ne.s32.totalorder %s213, %s214
      %p226 = scmp.eq.s32.totalorder %s26, 1
      %p227 = por %p225, %p226
      %p229 = scmp.ne.s32.totalorder %s214, %s228
      %p230 = scmp.eq.s32.totalorder %s26, 0
      %p231 = por %p229, %p230
      %s233 = sadd.s32 %s232, 1
      %p236 = scmp.eq.s32.totalorder %s20, 1
      %p237 = scmp.ne.s32.totalorder %s232, %s234
      %p238 = scmp.eq.s32.totalorder %s20, 0
      %p239 = por %p237, %p238
      %p240 = scmp.ne.s32.totalorder %s232, %s234
      %p241 = scmp.eq.s32.totalorder %s25, 1
      %p242 = por %p240, %p241
      %p243 = scmp.ne.s32.totalorder %s234, %s235
      %p244 = scmp.eq.s32.totalorder %s25, 0
      %p245 = por %p243, %p244
      %p246 = scmp.ne.s32.totalorder %s234, %s235
      %p247 = scmp.eq.s32.totalorder %s26, 1
      %p248 = por %p246, %p247
      %p250 = scmp.ne.s32.totalorder %s235, %s249
      %p251 = scmp.eq.s32.totalorder %s26, 0
      %p252 = por %p250, %p251
      %s254 = sadd.s32 %s253, 1
      %p257 = scmp.eq.s32.totalorder %s20, 1
      %p258 = scmp.ne.s32.totalorder %s253, %s255
      %p259 = scmp.eq.s32.totalorder %s20, 0
      %p260 = por %p258, %p259
      %p261 = scmp.ne.s32.totalorder %s253, %s255
      %p262 = scmp.eq.s32.totalorder %s25, 1
      %p263 = por %p261, %p262
      %p264 = scmp.ne.s32.totalorder %s255, %s256
      %p265 = scmp.eq.s32.totalorder %s25, 0
      %p266 = por %p264, %p265
      %p267 = scmp.ne.s32.totalorder %s255, %s256
      %p268 = scmp.eq.s32.totalorder %s26, 1
      %p269 = por %p267, %p268
      %p271 = scmp.ne.s32.totalorder %s256, %s270
      %p272 = scmp.eq.s32.totalorder %s26, 0
      %p273 = por %p271, %p272
      %s274 = ssub.s32 %s20, %s27
      %p275 = scmp.eq.s32.totalorder %s274, 0
      %s277 = sadd.s32 %s276, 1
      %s278 = scalar_select %p275, %s276, %s277
      %p281 = pneg %p275
      %p282 = scmp.eq.s32.totalorder %s20, 1
      %p283 = por %p281, %p282
      %p284 = scmp.ne.s32.totalorder %s276, %s279
      %p285 = scmp.eq.s32.totalorder %s20, 0
      %p286 = por %p284, %p285
      %p287 = scmp.ne.s32.totalorder %s276, %s279
      %p288 = scmp.eq.s32.totalorder %s25, 1
      %p289 = por %p287, %p288
      %p290 = scmp.ne.s32.totalorder %s279, %s280
      %p291 = scmp.eq.s32.totalorder %s25, 0
      %p292 = por %p290, %p291
      %p293 = scmp.ne.s32.totalorder %s279, %s280
      %p294 = scmp.eq.s32.totalorder %s26, 1
      %p295 = por %p293, %p294
      %p297 = scmp.ne.s32.totalorder %s280, %s296
      %p298 = scmp.eq.s32.totalorder %s26, 0
      %p299 = por %p297, %p298
      %p300 = scmp.le.s32.totalorder 1, %s20
      %p301 = scmp.lt.s32.totalorder %s20, 3
      %p302 = pnand %p300, %p301
      %p303 = pneg %p302
      // Predicated region
      $region9: #{multihead_attention.1} parent=5 // pred_check
        _
      $region10: #{multihead_attention.1} parent=5 // pred_check_branch
        %305 = sbr.rel (%p302) target = $region12
      $region11: #{multihead_attention.1} parent=5 // pred_region
        %s306 = ssub.s32 %s20, 1
        // Predicated region
        $region13: #{multihead_attention.1} parent=11 // pred_check
          %p307 = pneg %p119
        $region14: #{multihead_attention.1} parent=11 // pred_check_branch
          %309 = sbr.rel (%p307) target = $region16
        $region15: #{multihead_attention.1} parent=11 // pred_region
          _
        $region16: #{multihead_attention.1} parent=11 // pred_fallthru
          _
        // Predicated region
        $region17: #{multihead_attention.1} parent=11 // pred_check
          %p310 = pneg %p140
        $region18: #{multihead_attention.1} parent=11 // pred_check_branch
          %312 = sbr.rel (%p310) target = $region20
        $region19: #{multihead_attention.1} parent=11 // pred_region
          _
        $region20: #{multihead_attention.1} parent=11 // pred_fallthru
          _
        // Predicated region
        $region21: #{multihead_attention.1} parent=11 // pred_check
          %p313 = pneg %p161
        $region22: #{multihead_attention.1} parent=11 // pred_check_branch
          %315 = sbr.rel (%p313) target = $region24
        $region23: #{multihead_attention.1} parent=11 // pred_region
          _
        $region24: #{multihead_attention.1} parent=11 // pred_fallthru
          _
        // Predicated region
        $region25: #{multihead_attention.1} parent=11 // pred_check
          %p316 = pneg %p182
        $region26: #{multihead_attention.1} parent=11 // pred_check_branch
          %318 = sbr.rel (%p316) target = $region28
        $region27: #{multihead_attention.1} parent=11 // pred_region
          _
        $region28: #{multihead_attention.1} parent=11 // pred_fallthru
          _
        // Predicated region
        $region29: #{multihead_attention.1} parent=11 // pred_check
          %p319 = pneg %p203
        $region30: #{multihead_attention.1} parent=11 // pred_check_branch
          %321 = sbr.rel (%p319) target = $region32
        $region31: #{multihead_attention.1} parent=11 // pred_region
          _
        $region32: #{multihead_attention.1} parent=11 // pred_fallthru
          _
        // Predicated region
        $region33: #{multihead_attention.1} parent=11 // pred_check
          %p322 = pneg %p224
        $region34: #{multihead_attention.1} parent=11 // pred_check_branch
          %324 = sbr.rel (%p322) target = $region36
        $region35: #{multihead_attention.1} parent=11 // pred_region
          _
        $region36: #{multihead_attention.1} parent=11 // pred_fallthru
          _
        // Predicated region
        $region37: #{multihead_attention.1} parent=11 // pred_check
          %p325 = pneg %p245
        $region38: #{multihead_attention.1} parent=11 // pred_check_branch
          %327 = sbr.rel (%p325) target = $region40
        $region39: #{multihead_attention.1} parent=11 // pred_region
          _
        $region40: #{multihead_attention.1} parent=11 // pred_fallthru
          _
        // Predicated region
        $region41: #{multihead_attention.1} parent=11 // pred_check
          %p328 = pneg %p266
        $region42: #{multihead_attention.1} parent=11 // pred_check_branch
          %330 = sbr.rel (%p328) target = $region44
        $region43: #{multihead_attention.1} parent=11 // pred_region
          _
        $region44: #{multihead_attention.1} parent=11 // pred_fallthru
          _
      $region12: #{multihead_attention.1} parent=5 // pred_fallthru
        _
      %p331 = scmp.lt.s32.totalorder %s20, 2
      // Predicated region
      $region45: #{multihead_attention.1} parent=5 // pred_check
        %p332 = pneg %p331
      $region46: #{multihead_attention.1} parent=5 // pred_check_branch
        %334 = sbr.rel (%p332) target = $region48
      $region47: #{multihead_attention.1} parent=5 // pred_region
        // Predicated region
        $region49: #{multihead_attention.1} parent=47 // pred_check
          %p335 = pneg %p40
        $region50: #{multihead_attention.1} parent=47 // pred_check_branch
          %337 = sbr.rel (%p335) target = $region52
        $region51: #{multihead_attention.1} parent=47 // pred_region
          %p338 = scmp.lt.s32.totalorder %s20, 1
          %s339 = scalar_select %p338, %s20, 1
          %s340 = smul.addr %s339, 4
          %s341 = smul.addr %s340, 8
          %s342 = scalar_lea.vmem %s0, %s341
        $region52: #{multihead_attention.1} parent=47 // pred_fallthru
          _
        // Predicated region
        $region53: #{multihead_attention.1} parent=47 // pred_check
          %p343 = pneg %p66
        $region54: #{multihead_attention.1} parent=47 // pred_check_branch
          %345 = sbr.rel (%p343) target = $region56
        $region55: #{multihead_attention.1} parent=47 // pred_region
          %p346 = scmp.lt.s32.totalorder %s20, 1
          %s347 = scalar_select %p346, %s20, 1
          %s348 = smul.addr %s347, 4
          %s349 = smul.addr %s348, 8
          %s350 = scalar_lea.vmem %s1, %s349
        $region56: #{multihead_attention.1} parent=47 // pred_fallthru
          _
        // Predicated region
        $region57: #{multihead_attention.1} parent=47 // pred_check
          %p351 = pneg %p92
        $region58: #{multihead_attention.1} parent=47 // pred_check_branch
          %353 = sbr.rel (%p351) target = $region60
        $region59: #{multihead_attention.1} parent=47 // pred_region
          %p354 = scmp.lt.s32.totalorder %s20, 1
          %s355 = scalar_select %p354, %s20, 1
          %s356 = smul.addr %s355, 4
          %s357 = smul.addr %s356, 8
          %s358 = scalar_lea.vmem %s2, %s357
        $region60: #{multihead_attention.1} parent=47 // pred_fallthru
          _
      $region48: #{multihead_attention.1} parent=5 // pred_fallthru
        _
      %p359 = scmp.le.s32.totalorder 1, %s20
      %p360 = scmp.lt.s32.totalorder %s20, 3
      %p361 = pnand %p359, %p360
      %p362 = pneg %p361
      // Predicated region
      $region61: #{multihead_attention.1} parent=5 // pred_check
        _
      $region62: #{multihead_attention.1} parent=5 // pred_check_branch
        %364 = sbr.rel (%p361) target = $region64
      $region63: #{multihead_attention.1} parent=5 // pred_region
        %s365 = ssub.s32 %s20, 1
        %p366 = scmp.lt.s32.totalorder %s25, 1
        %s367 = scalar_select %p366, %s25, 1
        %s368 = smul.addr %s367, 4
        %s369 = smul.addr %s368, 8
        %s370 = scalar_lea.vmem %s0, %s369
        %p371 = pneg %p46
        %p372 = pneg %p43
        %p373 = scmp.lt.s32.totalorder %s25, 1
        %s374 = scalar_select %p373, %s25, 1
        %s375 = smul.addr %s374, 4
        %s376 = smul.addr %s375, 8
        %s377 = scalar_lea.vmem %s1, %s376
        %p378 = pneg %p72
        %p379 = pneg %p69
        %p380 = scmp.lt.s32.totalorder %s25, 1
        %s381 = scalar_select %p380, %s25, 1
        %s382 = smul.addr %s381, 4
        %s383 = smul.addr %s382, 8
        %s384 = scalar_lea.vmem %s2, %s383
        %p385 = pneg %p98
        %p386 = pneg %p95
        %p387 = pneg %p119
        %p388 = pneg %p116
        %p389 = pneg %p140
        %p390 = pneg %p137
        %p391 = pneg %p161
        %p392 = pneg %p158
        %p393 = pneg %p182
        %p394 = pneg %p179
        %p395 = pneg %p203
        %p396 = pneg %p200
        %p397 = pneg %p224
        %p398 = pneg %p221
        %p399 = pneg %p245
        %p400 = pneg %p242
        %p401 = pneg %p266
        %p402 = pneg %p263
        %p403 = pneg %p292
        %p404 = pneg %p289
        %s405 = sand.u32 %s279, 1
        %s406 = scalar_lea.sflag [#allocation3], %s405
        %s407 = sand.u32 %s279, 1
        %s408 = smul.addr %s407, 32
        %s409 = scalar_lea.vmem [#allocation2], %s408
        %p410 = scmp.lt.s32.totalorder %s25, 1
        %s411 = scalar_select %p410, %s25, 1
        %s412 = smul.addr %s411, 4
        %s413 = smul.addr %s412, 8
        %s414 = scalar_lea.vmem %s0, %s413
        %p415 = scmp.lt.s32.totalorder %s25, 1
        %s416 = scalar_select %p415, %s25, 1
        %s417 = smul.addr %s416, 4
        %s418 = smul.addr %s417, 8
        %s419 = scalar_lea.vmem %s1, %s418
        %p420 = scmp.lt.s32.totalorder %s25, 1
        %s421 = scalar_select %p420, %s25, 1
        %s422 = smul.addr %s421, 4
        %s423 = smul.addr %s422, 8
        %s424 = scalar_lea.vmem %s2, %s423
        %v426 = vld [vmem:[%s414] sm:$0xff]
        %v427 = vld [vmem:[%s414 + $0x8] sm:$0xff]
        %v428 = vld [vmem:[%s414 + $0x10] sm:$0xff]
        %v429 = vld [vmem:[%s414 + $0x18] sm:$0xff]
        %v430 = vpack.c.bf16 %v426, %v426
        %v431 = vpack.c.bf16 %v427, %v427
        %v432 = vpack.c.bf16 %v428, %v428
        %v433 = vpack.c.bf16 %v429, %v429
        %v434 = vld [vmem:[%s419] sm:$0xff]
        %v435 = vld [vmem:[%s419 + $0x8] sm:$0xff]
        %v436 = vld [vmem:[%s419 + $0x10] sm:$0xff]
        %v437 = vld [vmem:[%s419 + $0x18] sm:$0xff]
        %v438 = vpack.c.bf16 %v434, %v434
        %v439 = vpack.c.bf16 %v435, %v435
        %v440 = vpack.c.bf16 %v436, %v436
        %v441 = vpack.c.bf16 %v437, %v437
        %v442 = vld [vmem:[%s424] sm:$0xff]
        %v443 = vld [vmem:[%s424 + $0x8] sm:$0xff]
        %v444 = vld [vmem:[%s424 + $0x10] sm:$0xff]
        %v445 = vld [vmem:[%s424 + $0x18] sm:$0xff]
        %v446 = vpack.c.bf16 %v442, %v442
        %v447 = vpack.c.bf16 %v443, %v443
        %v448 = vpack.c.bf16 %v444, %v444
        %v449 = vpack.c.bf16 %v445, %v445
        %v450 = vld [vmem:[%s3] sm:$0xff]
        %v451 = vld [vmem:[%s3 + $0x8] sm:$0xff]
        %v452 = vld [vmem:[%s3 + $0x10] sm:$0xff]
        %v453 = vld [vmem:[%s3 + $0x18] sm:$0xff]
        %v454 = vld [vmem:[%s3 + $0x20] sm:$0xff]
        %v455 = vld [vmem:[%s3 + $0x28] sm:$0xff]
        %v456 = vld [vmem:[%s3 + $0x30] sm:$0xff]
        %v457 = vld [vmem:[%s3 + $0x38] sm:$0xff]
        %v458 = vld [vmem:[%s3 + $0x40] sm:$0xff]
        %v459 = vld [vmem:[%s3 + $0x48] sm:$0xff]
        %v460 = vld [vmem:[%s3 + $0x50] sm:$0xff]
        %v461 = vld [vmem:[%s3 + $0x58] sm:$0xff]
        %v462 = vld [vmem:[%s3 + $0x60] sm:$0xff]
        %v463 = vld [vmem:[%s3 + $0x68] sm:$0xff]
        %v464 = vld [vmem:[%s3 + $0x70] sm:$0xff]
        %v465 = vld [vmem:[%s3 + $0x78] sm:$0xff]
        %v466 = vld [vmem:[%s3 + $0x80] sm:$0xff]
        %v467 = vld [vmem:[%s3 + $0x88] sm:$0xff]
        %v468 = vld [vmem:[%s3 + $0x90] sm:$0xff]
        %v469 = vld [vmem:[%s3 + $0x98] sm:$0xff]
        %v470 = vld [vmem:[%s3 + $0xa0] sm:$0xff]
        %v471 = vld [vmem:[%s3 + $0xa8] sm:$0xff]
        %v472 = vld [vmem:[%s3 + $0xb0] sm:$0xff]
        %v473 = vld [vmem:[%s3 + $0xb8] sm:$0xff]
        %v474 = vld [vmem:[%s3 + $0xc0] sm:$0xff]
        %v475 = vld [vmem:[%s3 + $0xc8] sm:$0xff]
        %v476 = vld [vmem:[%s3 + $0xd0] sm:$0xff]
        %v477 = vld [vmem:[%s3 + $0xd8] sm:$0xff]
        %v478 = vld [vmem:[%s3 + $0xe0] sm:$0xff]
        %v479 = vld [vmem:[%s3 + $0xe8] sm:$0xff]
        %v480 = vld [vmem:[%s3 + $0xf0] sm:$0xff]
        %v481 = vld [vmem:[%s3 + $0xf8] sm:$0xff]
        %v482 = vld [vmem:[%s3 + $0x100] sm:$0xff]
        %v483 = vld [vmem:[%s3 + $0x108] sm:$0xff]
        %v484 = vld [vmem:[%s3 + $0x110] sm:$0xff]
        %v485 = vld [vmem:[%s3 + $0x118] sm:$0xff]
        %v486 = vld [vmem:[%s3 + $0x120] sm:$0xff]
        %v487 = vld [vmem:[%s3 + $0x128] sm:$0xff]
        %v488 = vld [vmem:[%s3 + $0x130] sm:$0xff]
        %v489 = vld [vmem:[%s3 + $0x138] sm:$0xff]
        %v490 = vld [vmem:[%s3 + $0x140] sm:$0xff]
        %v491 = vld [vmem:[%s3 + $0x148] sm:$0xff]
        %v492 = vld [vmem:[%s3 + $0x150] sm:$0xff]
        %v493 = vld [vmem:[%s3 + $0x158] sm:$0xff]
        %v494 = vld [vmem:[%s3 + $0x160] sm:$0xff]
        %v495 = vld [vmem:[%s3 + $0x168] sm:$0xff]
        %v496 = vld [vmem:[%s3 + $0x170] sm:$0xff]
        %v497 = vld [vmem:[%s3 + $0x178] sm:$0xff]
        %v498 = vld [vmem:[%s3 + $0x180] sm:$0xff]
        %v499 = vld [vmem:[%s3 + $0x188] sm:$0xff]
        %v500 = vld [vmem:[%s3 + $0x190] sm:$0xff]
        %v501 = vld [vmem:[%s3 + $0x198] sm:$0xff]
        %v502 = vld [vmem:[%s3 + $0x1a0] sm:$0xff]
        %v503 = vld [vmem:[%s3 + $0x1a8] sm:$0xff]
        %v504 = vld [vmem:[%s3 + $0x1b0] sm:$0xff]
        %v505 = vld [vmem:[%s3 + $0x1b8] sm:$0xff]
        %v506 = vld [vmem:[%s3 + $0x1c0] sm:$0xff]
        %v507 = vld [vmem:[%s3 + $0x1c8] sm:$0xff]
        %v508 = vld [vmem:[%s3 + $0x1d0] sm:$0xff]
        %v509 = vld [vmem:[%s3 + $0x1d8] sm:$0xff]
        %v510 = vld [vmem:[%s3 + $0x1e0] sm:$0xff]
        %v511 = vld [vmem:[%s3 + $0x1e8] sm:$0xff]
        %v512 = vld [vmem:[%s3 + $0x1f0] sm:$0xff]
        %v513 = vld [vmem:[%s3 + $0x1f8] sm:$0xff]
        %v514 = vld [vmem:[%s3 + $0x200] sm:$0xff]
        %v515 = vld [vmem:[%s3 + $0x208] sm:$0xff]
        %v516 = vld [vmem:[%s3 + $0x210] sm:$0xff]
        %v517 = vld [vmem:[%s3 + $0x218] sm:$0xff]
        %v518 = vld [vmem:[%s3 + $0x220] sm:$0xff]
        %v519 = vld [vmem:[%s3 + $0x228] sm:$0xff]
        %v520 = vld [vmem:[%s3 + $0x230] sm:$0xff]
        %v521 = vld [vmem:[%s3 + $0x238] sm:$0xff]
        %v522 = vld [vmem:[%s3 + $0x240] sm:$0xff]
        %v523 = vld [vmem:[%s3 + $0x248] sm:$0xff]
        %v524 = vld [vmem:[%s3 + $0x250] sm:$0xff]
        %v525 = vld [vmem:[%s3 + $0x258] sm:$0xff]
        %v526 = vld [vmem:[%s3 + $0x260] sm:$0xff]
        %v527 = vld [vmem:[%s3 + $0x268] sm:$0xff]
        %v528 = vld [vmem:[%s3 + $0x270] sm:$0xff]
        %v529 = vld [vmem:[%s3 + $0x278] sm:$0xff]
        %v530 = vld [vmem:[%s3 + $0x280] sm:$0xff]
        %v531 = vld [vmem:[%s3 + $0x288] sm:$0xff]
        %v532 = vld [vmem:[%s3 + $0x290] sm:$0xff]
        %v533 = vld [vmem:[%s3 + $0x298] sm:$0xff]
        %v534 = vld [vmem:[%s3 + $0x2a0] sm:$0xff]
        %v535 = vld [vmem:[%s3 + $0x2a8] sm:$0xff]
        %v536 = vld [vmem:[%s3 + $0x2b0] sm:$0xff]
        %v537 = vld [vmem:[%s3 + $0x2b8] sm:$0xff]
        %v538 = vld [vmem:[%s3 + $0x2c0] sm:$0xff]
        %v539 = vld [vmem:[%s3 + $0x2c8] sm:$0xff]
        %v540 = vld [vmem:[%s3 + $0x2d0] sm:$0xff]
        %v541 = vld [vmem:[%s3 + $0x2d8] sm:$0xff]
        %v542 = vld [vmem:[%s3 + $0x2e0] sm:$0xff]
        %v543 = vld [vmem:[%s3 + $0x2e8] sm:$0xff]
        %v544 = vld [vmem:[%s3 + $0x2f0] sm:$0xff]
        %v545 = vld [vmem:[%s3 + $0x2f8] sm:$0xff]
        %v546 = vld [vmem:[%s3 + $0x300] sm:$0xff]
        %v547 = vld [vmem:[%s3 + $0x308] sm:$0xff]
        %v548 = vld [vmem:[%s3 + $0x310] sm:$0xff]
        %v549 = vld [vmem:[%s3 + $0x318] sm:$0xff]
        %v550 = vld [vmem:[%s3 + $0x320] sm:$0xff]
        %v551 = vld [vmem:[%s3 + $0x328] sm:$0xff]
        %v552 = vld [vmem:[%s3 + $0x330] sm:$0xff]
        %v553 = vld [vmem:[%s3 + $0x338] sm:$0xff]
        %v554 = vld [vmem:[%s3 + $0x340] sm:$0xff]
        %v555 = vld [vmem:[%s3 + $0x348] sm:$0xff]
        %v556 = vld [vmem:[%s3 + $0x350] sm:$0xff]
        %v557 = vld [vmem:[%s3 + $0x358] sm:$0xff]
        %v558 = vld [vmem:[%s3 + $0x360] sm:$0xff]
        %v559 = vld [vmem:[%s3 + $0x368] sm:$0xff]
        %v560 = vld [vmem:[%s3 + $0x370] sm:$0xff]
        %v561 = vld [vmem:[%s3 + $0x378] sm:$0xff]
        %v562 = vld [vmem:[%s3 + $0x380] sm:$0xff]
        %v563 = vld [vmem:[%s3 + $0x388] sm:$0xff]
        %v564 = vld [vmem:[%s3 + $0x390] sm:$0xff]
        %v565 = vld [vmem:[%s3 + $0x398] sm:$0xff]
        %v566 = vld [vmem:[%s3 + $0x3a0] sm:$0xff]
        %v567 = vld [vmem:[%s3 + $0x3a8] sm:$0xff]
        %v568 = vld [vmem:[%s3 + $0x3b0] sm:$0xff]
        %v569 = vld [vmem:[%s3 + $0x3b8] sm:$0xff]
        %v570 = vld [vmem:[%s3 + $0x3c0] sm:$0xff]
        %v571 = vld [vmem:[%s3 + $0x3c8] sm:$0xff]
        %v572 = vld [vmem:[%s3 + $0x3d0] sm:$0xff]
        %v573 = vld [vmem:[%s3 + $0x3d8] sm:$0xff]
        %v574 = vld [vmem:[%s3 + $0x3e0] sm:$0xff]
        %v575 = vld [vmem:[%s3 + $0x3e8] sm:$0xff]
        %v576 = vld [vmem:[%s3 + $0x3f0] sm:$0xff]
        %v577 = vld [vmem:[%s3 + $0x3f8] sm:$0xff]
        %v578 = vld [vmem:[%s4] sm:$0xf]
        %v580 = vperm.slane %v578, 0
        %v581 = vperm.slane %v578, 1
        %v582 = vperm.slane %v578, 2
        %v583 = vperm.slane %v578, 3
        %v716 = vunpack.c.l.b16 %v450
        %v717 = vunpack.c.h.b16 %v450
        %v718 = vunpack.c.l.b16 %v451
        %v719 = vunpack.c.h.b16 %v451
        %v720 = vunpack.c.l.b16 %v452
        %v721 = vunpack.c.h.b16 %v452
        %v722 = vunpack.c.l.b16 %v453
        %v723 = vunpack.c.h.b16 %v453
        %v724 = vunpack.c.l.b16 %v454
        %v725 = vunpack.c.h.b16 %v454
        %v726 = vunpack.c.l.b16 %v455
        %v727 = vunpack.c.h.b16 %v455
        %v728 = vunpack.c.l.b16 %v456
        %v729 = vunpack.c.h.b16 %v456
        %v730 = vunpack.c.l.b16 %v457
        %v731 = vunpack.c.h.b16 %v457
        %v732 = vunpack.c.l.b16 %v458
        %v733 = vunpack.c.h.b16 %v458
        %v734 = vunpack.c.l.b16 %v459
        %v735 = vunpack.c.h.b16 %v459
        %v736 = vunpack.c.l.b16 %v460
        %v737 = vunpack.c.h.b16 %v460
        %v738 = vunpack.c.l.b16 %v461
        %v739 = vunpack.c.h.b16 %v461
        %v740 = vunpack.c.l.b16 %v462
        %v741 = vunpack.c.h.b16 %v462
        %v742 = vunpack.c.l.b16 %v463
        %v743 = vunpack.c.h.b16 %v463
        %v744 = vunpack.c.l.b16 %v464
        %v745 = vunpack.c.h.b16 %v464
        %v746 = vunpack.c.l.b16 %v465
        %v747 = vunpack.c.h.b16 %v465
        %v748 = vunpack.c.l.b16 %v466
        %v749 = vunpack.c.h.b16 %v466
        %v750 = vunpack.c.l.b16 %v467
        %v751 = vunpack.c.h.b16 %v467
        %v752 = vunpack.c.l.b16 %v468
        %v753 = vunpack.c.h.b16 %v468
        %v754 = vunpack.c.l.b16 %v469
        %v755 = vunpack.c.h.b16 %v469
        %v756 = vunpack.c.l.b16 %v470
        %v757 = vunpack.c.h.b16 %v470
        %v758 = vunpack.c.l.b16 %v471
        %v759 = vunpack.c.h.b16 %v471
        %v760 = vunpack.c.l.b16 %v472
        %v761 = vunpack.c.h.b16 %v472
        %v762 = vunpack.c.l.b16 %v473
        %v763 = vunpack.c.h.b16 %v473
        %v764 = vunpack.c.l.b16 %v474
        %v765 = vunpack.c.h.b16 %v474
        %v766 = vunpack.c.l.b16 %v475
        %v767 = vunpack.c.h.b16 %v475
        %v768 = vunpack.c.l.b16 %v476
        %v769 = vunpack.c.h.b16 %v476
        %v770 = vunpack.c.l.b16 %v477
        %v771 = vunpack.c.h.b16 %v477
        %v772 = vunpack.c.l.b16 %v478
        %v773 = vunpack.c.h.b16 %v478
        %v774 = vunpack.c.l.b16 %v479
        %v775 = vunpack.c.h.b16 %v479
        %v776 = vunpack.c.l.b16 %v480
        %v777 = vunpack.c.h.b16 %v480
        %v778 = vunpack.c.l.b16 %v481
        %v779 = vunpack.c.h.b16 %v481
        %v780 = vunpack.c.l.b16 %v482
        %v781 = vunpack.c.h.b16 %v482
        %v782 = vunpack.c.l.b16 %v483
        %v783 = vunpack.c.h.b16 %v483
        %v784 = vunpack.c.l.b16 %v484
        %v785 = vunpack.c.h.b16 %v484
        %v786 = vunpack.c.l.b16 %v485
        %v787 = vunpack.c.h.b16 %v485
        %v788 = vunpack.c.l.b16 %v486
        %v789 = vunpack.c.h.b16 %v486
        %v790 = vunpack.c.l.b16 %v487
        %v791 = vunpack.c.h.b16 %v487
        %v792 = vunpack.c.l.b16 %v488
        %v793 = vunpack.c.h.b16 %v488
        %v794 = vunpack.c.l.b16 %v489
        %v795 = vunpack.c.h.b16 %v489
        %v796 = vunpack.c.l.b16 %v490
        %v797 = vunpack.c.h.b16 %v490
        %v798 = vunpack.c.l.b16 %v491
        %v799 = vunpack.c.h.b16 %v491
        %v800 = vunpack.c.l.b16 %v492
        %v801 = vunpack.c.h.b16 %v492
        %v802 = vunpack.c.l.b16 %v493
        %v803 = vunpack.c.h.b16 %v493
        %v804 = vunpack.c.l.b16 %v494
        %v805 = vunpack.c.h.b16 %v494
        %v806 = vunpack.c.l.b16 %v495
        %v807 = vunpack.c.h.b16 %v495
        %v808 = vunpack.c.l.b16 %v496
        %v809 = vunpack.c.h.b16 %v496
        %v810 = vunpack.c.l.b16 %v497
        %v811 = vunpack.c.h.b16 %v497
        %v812 = vunpack.c.l.b16 %v498
        %v813 = vunpack.c.h.b16 %v498
        %v814 = vunpack.c.l.b16 %v499
        %v815 = vunpack.c.h.b16 %v499
        %v816 = vunpack.c.l.b16 %v500
        %v817 = vunpack.c.h.b16 %v500
        %v818 = vunpack.c.l.b16 %v501
        %v819 = vunpack.c.h.b16 %v501
        %v820 = vunpack.c.l.b16 %v502
        %v821 = vunpack.c.h.b16 %v502
        %v822 = vunpack.c.l.b16 %v503
        %v823 = vunpack.c.h.b16 %v503
        %v824 = vunpack.c.l.b16 %v504
        %v825 = vunpack.c.h.b16 %v504
        %v826 = vunpack.c.l.b16 %v505
        %v827 = vunpack.c.h.b16 %v505
        %v828 = vunpack.c.l.b16 %v506
        %v829 = vunpack.c.h.b16 %v506
        %v830 = vunpack.c.l.b16 %v507
        %v831 = vunpack.c.h.b16 %v507
        %v832 = vunpack.c.l.b16 %v508
        %v833 = vunpack.c.h.b16 %v508
        %v834 = vunpack.c.l.b16 %v509
        %v835 = vunpack.c.h.b16 %v509
        %v836 = vunpack.c.l.b16 %v510
        %v837 = vunpack.c.h.b16 %v510
        %v838 = vunpack.c.l.b16 %v511
        %v839 = vunpack.c.h.b16 %v511
        %v840 = vunpack.c.l.b16 %v512
        %v841 = vunpack.c.h.b16 %v512
        %v842 = vunpack.c.l.b16 %v513
        %v843 = vunpack.c.h.b16 %v513
        %v844 = vunpack.c.l.b16 %v514
        %v845 = vunpack.c.h.b16 %v514
        %v846 = vunpack.c.l.b16 %v515
        %v847 = vunpack.c.h.b16 %v515
        %v848 = vunpack.c.l.b16 %v516
        %v849 = vunpack.c.h.b16 %v516
        %v850 = vunpack.c.l.b16 %v517
        %v851 = vunpack.c.h.b16 %v517
        %v852 = vunpack.c.l.b16 %v518
        %v853 = vunpack.c.h.b16 %v518
        %v854 = vunpack.c.l.b16 %v519
        %v855 = vunpack.c.h.b16 %v519
        %v856 = vunpack.c.l.b16 %v520
        %v857 = vunpack.c.h.b16 %v520
        %v858 = vunpack.c.l.b16 %v521
        %v859 = vunpack.c.h.b16 %v521
        %v860 = vunpack.c.l.b16 %v522
        %v861 = vunpack.c.h.b16 %v522
        %v862 = vunpack.c.l.b16 %v523
        %v863 = vunpack.c.h.b16 %v523
        %v864 = vunpack.c.l.b16 %v524
        %v865 = vunpack.c.h.b16 %v524
        %v866 = vunpack.c.l.b16 %v525
        %v867 = vunpack.c.h.b16 %v525
        %v868 = vunpack.c.l.b16 %v526
        %v869 = vunpack.c.h.b16 %v526
        %v870 = vunpack.c.l.b16 %v527
        %v871 = vunpack.c.h.b16 %v527
        %v872 = vunpack.c.l.b16 %v528
        %v873 = vunpack.c.h.b16 %v528
        %v874 = vunpack.c.l.b16 %v529
        %v875 = vunpack.c.h.b16 %v529
        %v876 = vunpack.c.l.b16 %v530
        %v877 = vunpack.c.h.b16 %v530
        %v878 = vunpack.c.l.b16 %v531
        %v879 = vunpack.c.h.b16 %v531
        %v880 = vunpack.c.l.b16 %v532
        %v881 = vunpack.c.h.b16 %v532
        %v882 = vunpack.c.l.b16 %v533
        %v883 = vunpack.c.h.b16 %v533
        %v884 = vunpack.c.l.b16 %v534
        %v885 = vunpack.c.h.b16 %v534
        %v886 = vunpack.c.l.b16 %v535
        %v887 = vunpack.c.h.b16 %v535
        %v888 = vunpack.c.l.b16 %v536
        %v889 = vunpack.c.h.b16 %v536
        %v890 = vunpack.c.l.b16 %v537
        %v891 = vunpack.c.h.b16 %v537
        %v892 = vunpack.c.l.b16 %v538
        %v893 = vunpack.c.h.b16 %v538
        %v894 = vunpack.c.l.b16 %v539
        %v895 = vunpack.c.h.b16 %v539
        %v896 = vunpack.c.l.b16 %v540
        %v897 = vunpack.c.h.b16 %v540
        %v898 = vunpack.c.l.b16 %v541
        %v899 = vunpack.c.h.b16 %v541
        %v900 = vunpack.c.l.b16 %v542
        %v901 = vunpack.c.h.b16 %v542
        %v902 = vunpack.c.l.b16 %v543
        %v903 = vunpack.c.h.b16 %v543
        %v904 = vunpack.c.l.b16 %v544
        %v905 = vunpack.c.h.b16 %v544
        %v906 = vunpack.c.l.b16 %v545
        %v907 = vunpack.c.h.b16 %v545
        %v908 = vunpack.c.l.b16 %v546
        %v909 = vunpack.c.h.b16 %v546
        %v910 = vunpack.c.l.b16 %v547
        %v911 = vunpack.c.h.b16 %v547
        %v912 = vunpack.c.l.b16 %v548
        %v913 = vunpack.c.h.b16 %v548
        %v914 = vunpack.c.l.b16 %v549
        %v915 = vunpack.c.h.b16 %v549
        %v916 = vunpack.c.l.b16 %v550
        %v917 = vunpack.c.h.b16 %v550
        %v918 = vunpack.c.l.b16 %v551
        %v919 = vunpack.c.h.b16 %v551
        %v920 = vunpack.c.l.b16 %v552
        %v921 = vunpack.c.h.b16 %v552
        %v922 = vunpack.c.l.b16 %v553
        %v923 = vunpack.c.h.b16 %v553
        %v924 = vunpack.c.l.b16 %v554
        %v925 = vunpack.c.h.b16 %v554
        %v926 = vunpack.c.l.b16 %v555
        %v927 = vunpack.c.h.b16 %v555
        %v928 = vunpack.c.l.b16 %v556
        %v929 = vunpack.c.h.b16 %v556
        %v930 = vunpack.c.l.b16 %v557
        %v931 = vunpack.c.h.b16 %v557
        %v932 = vunpack.c.l.b16 %v558
        %v933 = vunpack.c.h.b16 %v558
        %v934 = vunpack.c.l.b16 %v559
        %v935 = vunpack.c.h.b16 %v559
        %v936 = vunpack.c.l.b16 %v560
        %v937 = vunpack.c.h.b16 %v560
        %v938 = vunpack.c.l.b16 %v561
        %v939 = vunpack.c.h.b16 %v561
        %v940 = vunpack.c.l.b16 %v562
        %v941 = vunpack.c.h.b16 %v562
        %v942 = vunpack.c.l.b16 %v563
        %v943 = vunpack.c.h.b16 %v563
        %v944 = vunpack.c.l.b16 %v564
        %v945 = vunpack.c.h.b16 %v564
        %v946 = vunpack.c.l.b16 %v565
        %v947 = vunpack.c.h.b16 %v565
        %v948 = vunpack.c.l.b16 %v566
        %v949 = vunpack.c.h.b16 %v566
        %v950 = vunpack.c.l.b16 %v567
        %v951 = vunpack.c.h.b16 %v567
        %v952 = vunpack.c.l.b16 %v568
        %v953 = vunpack.c.h.b16 %v568
        %v954 = vunpack.c.l.b16 %v569
        %v955 = vunpack.c.h.b16 %v569
        %v956 = vunpack.c.l.b16 %v570
        %v957 = vunpack.c.h.b16 %v570
        %v958 = vunpack.c.l.b16 %v571
        %v959 = vunpack.c.h.b16 %v571
        %v960 = vunpack.c.l.b16 %v572
        %v961 = vunpack.c.h.b16 %v572
        %v962 = vunpack.c.l.b16 %v573
        %v963 = vunpack.c.h.b16 %v573
        %v964 = vunpack.c.l.b16 %v574
        %v965 = vunpack.c.h.b16 %v574
        %v966 = vunpack.c.l.b16 %v575
        %v967 = vunpack.c.h.b16 %v575
        %v968 = vunpack.c.l.b16 %v576
        %v969 = vunpack.c.h.b16 %v576
        %v970 = vunpack.c.l.b16 %v577
        %v971 = vunpack.c.h.b16 %v577
        %v972 = vpack.c.b16 %v720, %v716
        %v973 = vpack.c.b16 %v721, %v717
        %v974 = vpack.c.b16 %v722, %v718
        %v975 = vpack.c.b16 %v723, %v719
        %v976 = vpack.c.b16 %v728, %v724
        %v977 = vpack.c.b16 %v729, %v725
        %v978 = vpack.c.b16 %v730, %v726
        %v979 = vpack.c.b16 %v731, %v727
        %v980 = vpack.c.b16 %v736, %v732
        %v981 = vpack.c.b16 %v737, %v733
        %v982 = vpack.c.b16 %v738, %v734
        %v983 = vpack.c.b16 %v739, %v735
        %v984 = vpack.c.b16 %v744, %v740
        %v985 = vpack.c.b16 %v745, %v741
        %v986 = vpack.c.b16 %v746, %v742
        %v987 = vpack.c.b16 %v747, %v743
        %v988 = vpack.c.b16 %v752, %v748
        %v989 = vpack.c.b16 %v753, %v749
        %v990 = vpack.c.b16 %v754, %v750
        %v991 = vpack.c.b16 %v755, %v751
        %v992 = vpack.c.b16 %v760, %v756
        %v993 = vpack.c.b16 %v761, %v757
        %v994 = vpack.c.b16 %v762, %v758
        %v995 = vpack.c.b16 %v763, %v759
        %v996 = vpack.c.b16 %v768, %v764
        %v997 = vpack.c.b16 %v769, %v765
        %v998 = vpack.c.b16 %v770, %v766
        %v999 = vpack.c.b16 %v771, %v767
        %v1000 = vpack.c.b16 %v776, %v772
        %v1001 = vpack.c.b16 %v777, %v773
        %v1002 = vpack.c.b16 %v778, %v774
        %v1003 = vpack.c.b16 %v779, %v775
        %v1004 = vpack.c.b16 %v784, %v780
        %v1005 = vpack.c.b16 %v785, %v781
        %v1006 = vpack.c.b16 %v786, %v782
        %v1007 = vpack.c.b16 %v787, %v783
        %v1008 = vpack.c.b16 %v792, %v788
        %v1009 = vpack.c.b16 %v793, %v789
        %v1010 = vpack.c.b16 %v794, %v790
        %v1011 = vpack.c.b16 %v795, %v791
        %v1012 = vpack.c.b16 %v800, %v796
        %v1013 = vpack.c.b16 %v801, %v797
        %v1014 = vpack.c.b16 %v802, %v798
        %v1015 = vpack.c.b16 %v803, %v799
        %v1016 = vpack.c.b16 %v808, %v804
        %v1017 = vpack.c.b16 %v809, %v805
        %v1018 = vpack.c.b16 %v810, %v806
        %v1019 = vpack.c.b16 %v811, %v807
        %v1020 = vpack.c.b16 %v816, %v812
        %v1021 = vpack.c.b16 %v817, %v813
        %v1022 = vpack.c.b16 %v818, %v814
        %v1023 = vpack.c.b16 %v819, %v815
        %v1024 = vpack.c.b16 %v824, %v820
        %v1025 = vpack.c.b16 %v825, %v821
        %v1026 = vpack.c.b16 %v826, %v822
        %v1027 = vpack.c.b16 %v827, %v823
        %v1028 = vpack.c.b16 %v832, %v828
        %v1029 = vpack.c.b16 %v833, %v829
        %v1030 = vpack.c.b16 %v834, %v830
        %v1031 = vpack.c.b16 %v835, %v831
        %v1032 = vpack.c.b16 %v840, %v836
        %v1033 = vpack.c.b16 %v841, %v837
        %v1034 = vpack.c.b16 %v842, %v838
        %v1035 = vpack.c.b16 %v843, %v839
        %v1036 = vpack.c.b16 %v848, %v844
        %v1037 = vpack.c.b16 %v849, %v845
        %v1038 = vpack.c.b16 %v850, %v846
        %v1039 = vpack.c.b16 %v851, %v847
        %v1040 = vpack.c.b16 %v856, %v852
        %v1041 = vpack.c.b16 %v857, %v853
        %v1042 = vpack.c.b16 %v858, %v854
        %v1043 = vpack.c.b16 %v859, %v855
        %v1044 = vpack.c.b16 %v864, %v860
        %v1045 = vpack.c.b16 %v865, %v861
        %v1046 = vpack.c.b16 %v866, %v862
        %v1047 = vpack.c.b16 %v867, %v863
        %v1048 = vpack.c.b16 %v872, %v868
        %v1049 = vpack.c.b16 %v873, %v869
        %v1050 = vpack.c.b16 %v874, %v870
        %v1051 = vpack.c.b16 %v875, %v871
        %v1052 = vpack.c.b16 %v880, %v876
        %v1053 = vpack.c.b16 %v881, %v877
        %v1054 = vpack.c.b16 %v882, %v878
        %v1055 = vpack.c.b16 %v883, %v879
        %v1056 = vpack.c.b16 %v888, %v884
        %v1057 = vpack.c.b16 %v889, %v885
        %v1058 = vpack.c.b16 %v890, %v886
        %v1059 = vpack.c.b16 %v891, %v887
        %v1060 = vpack.c.b16 %v896, %v892
        %v1061 = vpack.c.b16 %v897, %v893
        %v1062 = vpack.c.b16 %v898, %v894
        %v1063 = vpack.c.b16 %v899, %v895
        %v1064 = vpack.c.b16 %v904, %v900
        %v1065 = vpack.c.b16 %v905, %v901
        %v1066 = vpack.c.b16 %v906, %v902
        %v1067 = vpack.c.b16 %v907, %v903
        %v1068 = vpack.c.b16 %v912, %v908
        %v1069 = vpack.c.b16 %v913, %v909
        %v1070 = vpack.c.b16 %v914, %v910
        %v1071 = vpack.c.b16 %v915, %v911
        %v1072 = vpack.c.b16 %v920, %v916
        %v1073 = vpack.c.b16 %v921, %v917
        %v1074 = vpack.c.b16 %v922, %v918
        %v1075 = vpack.c.b16 %v923, %v919
        %v1076 = vpack.c.b16 %v928, %v924
        %v1077 = vpack.c.b16 %v929, %v925
        %v1078 = vpack.c.b16 %v930, %v926
        %v1079 = vpack.c.b16 %v931, %v927
        %v1080 = vpack.c.b16 %v936, %v932
        %v1081 = vpack.c.b16 %v937, %v933
        %v1082 = vpack.c.b16 %v938, %v934
        %v1083 = vpack.c.b16 %v939, %v935
        %v1084 = vpack.c.b16 %v944, %v940
        %v1085 = vpack.c.b16 %v945, %v941
        %v1086 = vpack.c.b16 %v946, %v942
        %v1087 = vpack.c.b16 %v947, %v943
        %v1088 = vpack.c.b16 %v952, %v948
        %v1089 = vpack.c.b16 %v953, %v949
        %v1090 = vpack.c.b16 %v954, %v950
        %v1091 = vpack.c.b16 %v955, %v951
        %v1092 = vpack.c.b16 %v960, %v956
        %v1093 = vpack.c.b16 %v961, %v957
        %v1094 = vpack.c.b16 %v962, %v958
        %v1095 = vpack.c.b16 %v963, %v959
        %v1096 = vpack.c.b16 %v968, %v964
        %v1097 = vpack.c.b16 %v969, %v965
        %v1098 = vpack.c.b16 %v970, %v966
        %v1099 = vpack.c.b16 %v971, %v967
        %1228 = vmatpush.bf16.msra.mxu0 %v1000
        %1229 = vmatpush.bf16.msra.mxu0 %v996
        %1230 = vmatpush.bf16.msra.mxu0 %v992
        %1231 = vmatpush.bf16.msra.mxu0 %v988
        %1232 = vmatpush.bf16.msra.mxu0 %v984
        %1233 = vmatpush.bf16.msra.mxu0 %v980
        %1234 = vmatpush.bf16.msra.mxu0 %v976
        %1235 = vmatpush.bf16.msra.mxu0 %v972
        %1236 = vmatmul.bf16.gmra.mxu0 %v430
        %v1237 = vpop.f32.mrf.mxu0
        %v1238 = vadd.f32 %v580, %v1237
        %v1239 = vpop.f32.mrf.mxu0
        %1240 = vdwg.mxu0
        %1241 = vmatpush.bf16.msra.mxu0 %v1032
        %1242 = vmatpush.bf16.msra.mxu0 %v1028
        %1243 = vmatpush.bf16.msra.mxu0 %v1024
        %1244 = vmatpush.bf16.msra.mxu0 %v1020
        %1245 = vmatpush.bf16.msra.mxu0 %v1016
        %1246 = vmatpush.bf16.msra.mxu0 %v1012
        %1247 = vmatpush.bf16.msra.mxu0 %v1008
        %1248 = vmatpush.bf16.msra.mxu0 %v1004
        %1249 = vmatmul.bf16.gmra.mxu0 %v431
        %v1250 = vpop.f32.mrf.mxu0
        %v1251 = vadd.f32 %v1238, %v1250
        %v1252 = vpop.f32.mrf.mxu0
        %1253 = vdwg.mxu0
        %1254 = vmatpush.bf16.msra.mxu0 %v1064
        %1255 = vmatpush.bf16.msra.mxu0 %v1060
        %1256 = vmatpush.bf16.msra.mxu0 %v1056
        %1257 = vmatpush.bf16.msra.mxu0 %v1052
        %1258 = vmatpush.bf16.msra.mxu0 %v1048
        %1259 = vmatpush.bf16.msra.mxu0 %v1044
        %1260 = vmatpush.bf16.msra.mxu0 %v1040
        %1261 = vmatpush.bf16.msra.mxu0 %v1036
        %1262 = vmatmul.bf16.gmra.mxu0 %v432
        %v1263 = vpop.f32.mrf.mxu0
        %v1264 = vadd.f32 %v1251, %v1263
        %v1265 = vpop.f32.mrf.mxu0
        %1266 = vdwg.mxu0
        %1267 = vmatpush.bf16.msra.mxu0 %v1096
        %1268 = vmatpush.bf16.msra.mxu0 %v1092
        %1269 = vmatpush.bf16.msra.mxu0 %v1088
        %1270 = vmatpush.bf16.msra.mxu0 %v1084
        %1271 = vmatpush.bf16.msra.mxu0 %v1080
        %1272 = vmatpush.bf16.msra.mxu0 %v1076
        %1273 = vmatpush.bf16.msra.mxu0 %v1072
        %1274 = vmatpush.bf16.msra.mxu0 %v1068
        %1275 = vmatmul.bf16.gmra.mxu0 %v433
        %v1276 = vpop.f32.mrf.mxu0
        %v1277 = vadd.f32 %v1264, %v1276
        %v1278 = vpop.f32.mrf.mxu0
        %1279 = vdwg.mxu0
        %1280 = vmatpush.bf16.msra.mxu0 %v1001
        %1281 = vmatpush.bf16.msra.mxu0 %v997
        %1282 = vmatpush.bf16.msra.mxu0 %v993
        %1283 = vmatpush.bf16.msra.mxu0 %v989
        %1284 = vmatpush.bf16.msra.mxu0 %v985
        %1285 = vmatpush.bf16.msra.mxu0 %v981
        %1286 = vmatpush.bf16.msra.mxu0 %v977
        %1287 = vmatpush.bf16.msra.mxu0 %v973
        %1288 = vmatmul.bf16.gmra.mxu0 %v430
        %v1289 = vpop.f32.mrf.mxu0
        %v1290 = vadd.f32 %v581, %v1289
        %v1291 = vpop.f32.mrf.mxu0
        %1292 = vdwg.mxu0
        %1293 = vmatpush.bf16.msra.mxu0 %v1033
        %1294 = vmatpush.bf16.msra.mxu0 %v1029
        %1295 = vmatpush.bf16.msra.mxu0 %v1025
        %1296 = vmatpush.bf16.msra.mxu0 %v1021
        %1297 = vmatpush.bf16.msra.mxu0 %v1017
        %1298 = vmatpush.bf16.msra.mxu0 %v1013
        %1299 = vmatpush.bf16.msra.mxu0 %v1009
        %1300 = vmatpush.bf16.msra.mxu0 %v1005
        %1301 = vmatmul.bf16.gmra.mxu0 %v431
        %v1302 = vpop.f32.mrf.mxu0
        %v1303 = vadd.f32 %v1290, %v1302
        %v1304 = vpop.f32.mrf.mxu0
        %1305 = vdwg.mxu0
        %1306 = vmatpush.bf16.msra.mxu0 %v1065
        %1307 = vmatpush.bf16.msra.mxu0 %v1061
        %1308 = vmatpush.bf16.msra.mxu0 %v1057
        %1309 = vmatpush.bf16.msra.mxu0 %v1053
        %1310 = vmatpush.bf16.msra.mxu0 %v1049
        %1311 = vmatpush.bf16.msra.mxu0 %v1045
        %1312 = vmatpush.bf16.msra.mxu0 %v1041
        %1313 = vmatpush.bf16.msra.mxu0 %v1037
        %1314 = vmatmul.bf16.gmra.mxu0 %v432
        %v1315 = vpop.f32.mrf.mxu0
        %v1316 = vadd.f32 %v1303, %v1315
        %v1317 = vpop.f32.mrf.mxu0
        %1318 = vdwg.mxu0
        %1319 = vmatpush.bf16.msra.mxu0 %v1097
        %1320 = vmatpush.bf16.msra.mxu0 %v1093
        %1321 = vmatpush.bf16.msra.mxu0 %v1089
        %1322 = vmatpush.bf16.msra.mxu0 %v1085
        %1323 = vmatpush.bf16.msra.mxu0 %v1081
        %1324 = vmatpush.bf16.msra.mxu0 %v1077
        %1325 = vmatpush.bf16.msra.mxu0 %v1073
        %1326 = vmatpush.bf16.msra.mxu0 %v1069
        %1327 = vmatmul.bf16.gmra.mxu0 %v433
        %v1328 = vpop.f32.mrf.mxu0
        %v1329 = vadd.f32 %v1316, %v1328
        %v1330 = vpop.f32.mrf.mxu0
        %1331 = vdwg.mxu0
        %1332 = vmatpush.bf16.msra.mxu0 %v1002
        %1333 = vmatpush.bf16.msra.mxu0 %v998
        %1334 = vmatpush.bf16.msra.mxu0 %v994
        %1335 = vmatpush.bf16.msra.mxu0 %v990
        %1336 = vmatpush.bf16.msra.mxu0 %v986
        %1337 = vmatpush.bf16.msra.mxu0 %v982
        %1338 = vmatpush.bf16.msra.mxu0 %v978
        %1339 = vmatpush.bf16.msra.mxu0 %v974
        %1340 = vmatmul.bf16.gmra.mxu0 %v430
        %v1341 = vpop.f32.mrf.mxu0
        %v1342 = vadd.f32 %v582, %v1341
        %v1343 = vpop.f32.mrf.mxu0
        %1344 = vdwg.mxu0
        %1345 = vmatpush.bf16.msra.mxu0 %v1034
        %1346 = vmatpush.bf16.msra.mxu0 %v1030
        %1347 = vmatpush.bf16.msra.mxu0 %v1026
        %1348 = vmatpush.bf16.msra.mxu0 %v1022
        %1349 = vmatpush.bf16.msra.mxu0 %v1018
        %1350 = vmatpush.bf16.msra.mxu0 %v1014
        %1351 = vmatpush.bf16.msra.mxu0 %v1010
        %1352 = vmatpush.bf16.msra.mxu0 %v1006
        %1353 = vmatmul.bf16.gmra.mxu0 %v431
        %v1354 = vpop.f32.mrf.mxu0
        %v1355 = vadd.f32 %v1342, %v1354
        %v1356 = vpop.f32.mrf.mxu0
        %1357 = vdwg.mxu0
        %1358 = vmatpush.bf16.msra.mxu0 %v1066
        %1359 = vmatpush.bf16.msra.mxu0 %v1062
        %1360 = vmatpush.bf16.msra.mxu0 %v1058
        %1361 = vmatpush.bf16.msra.mxu0 %v1054
        %1362 = vmatpush.bf16.msra.mxu0 %v1050
        %1363 = vmatpush.bf16.msra.mxu0 %v1046
        %1364 = vmatpush.bf16.msra.mxu0 %v1042
        %1365 = vmatpush.bf16.msra.mxu0 %v1038
        %1366 = vmatmul.bf16.gmra.mxu0 %v432
        %v1367 = vpop.f32.mrf.mxu0
        %v1368 = vadd.f32 %v1355, %v1367
        %v1369 = vpop.f32.mrf.mxu0
        %1370 = vdwg.mxu0
        %1371 = vmatpush.bf16.msra.mxu0 %v1098
        %1372 = vmatpush.bf16.msra.mxu0 %v1094
        %1373 = vmatpush.bf16.msra.mxu0 %v1090
        %1374 = vmatpush.bf16.msra.mxu0 %v1086
        %1375 = vmatpush.bf16.msra.mxu0 %v1082
        %1376 = vmatpush.bf16.msra.mxu0 %v1078
        %1377 = vmatpush.bf16.msra.mxu0 %v1074
        %1378 = vmatpush.bf16.msra.mxu0 %v1070
        %1379 = vmatmul.bf16.gmra.mxu0 %v433
        %v1380 = vpop.f32.mrf.mxu0
        %v1381 = vadd.f32 %v1368, %v1380
        %v1382 = vpop.f32.mrf.mxu0
        %1383 = vdwg.mxu0
        %1384 = vmatpush.bf16.msra.mxu0 %v1003
        %1385 = vmatpush.bf16.msra.mxu0 %v999
        %1386 = vmatpush.bf16.msra.mxu0 %v995
        %1387 = vmatpush.bf16.msra.mxu0 %v991
        %1388 = vmatpush.bf16.msra.mxu0 %v987
        %1389 = vmatpush.bf16.msra.mxu0 %v983
        %1390 = vmatpush.bf16.msra.mxu0 %v979
        %1391 = vmatpush.bf16.msra.mxu0 %v975
        %1392 = vmatmul.bf16.gmra.mxu0 %v430
        %v1393 = vpop.f32.mrf.mxu0
        %v1394 = vadd.f32 %v583, %v1393
        %v1395 = vpop.f32.mrf.mxu0
        %1396 = vdwg.mxu0
        %1397 = vmatpush.bf16.msra.mxu0 %v1035
        %1398 = vmatpush.bf16.msra.mxu0 %v1031
        %1399 = vmatpush.bf16.msra.mxu0 %v1027
        %1400 = vmatpush.bf16.msra.mxu0 %v1023
        %1401 = vmatpush.bf16.msra.mxu0 %v1019
        %1402 = vmatpush.bf16.msra.mxu0 %v1015
        %1403 = vmatpush.bf16.msra.mxu0 %v1011
        %1404 = vmatpush.bf16.msra.mxu0 %v1007
        %1405 = vmatmul.bf16.gmra.mxu0 %v431
        %v1406 = vpop.f32.mrf.mxu0
        %v1407 = vadd.f32 %v1394, %v1406
        %v1408 = vpop.f32.mrf.mxu0
        %1409 = vdwg.mxu0
        %1410 = vmatpush.bf16.msra.mxu0 %v1067
        %1411 = vmatpush.bf16.msra.mxu0 %v1063
        %1412 = vmatpush.bf16.msra.mxu0 %v1059
        %1413 = vmatpush.bf16.msra.mxu0 %v1055
        %1414 = vmatpush.bf16.msra.mxu0 %v1051
        %1415 = vmatpush.bf16.msra.mxu0 %v1047
        %1416 = vmatpush.bf16.msra.mxu0 %v1043
        %1417 = vmatpush.bf16.msra.mxu0 %v1039
        %1418 = vmatmul.bf16.gmra.mxu0 %v432
        %v1419 = vpop.f32.mrf.mxu0
        %v1420 = vadd.f32 %v1407, %v1419
        %v1421 = vpop.f32.mrf.mxu0
        %1422 = vdwg.mxu0
        %1423 = vmatpush.bf16.msra.mxu0 %v1099
        %1424 = vmatpush.bf16.msra.mxu0 %v1095
        %1425 = vmatpush.bf16.msra.mxu0 %v1091
        %1426 = vmatpush.bf16.msra.mxu0 %v1087
        %1427 = vmatpush.bf16.msra.mxu0 %v1083
        %1428 = vmatpush.bf16.msra.mxu0 %v1079
        %1429 = vmatpush.bf16.msra.mxu0 %v1075
        %1430 = vmatpush.bf16.msra.mxu0 %v1071
        %1431 = vmatmul.bf16.gmra.mxu0 %v433
        %v1432 = vpop.f32.mrf.mxu0
        %v1433 = vadd.f32 %v1420, %v1432
        %v1434 = vpop.f32.mrf.mxu0
        %1435 = vdwg.mxu0
        %v1436 = vld [vmem:[%s5] sm:$0xff]
        %v1437 = vld [vmem:[%s5 + $0x8] sm:$0xff]
        %v1438 = vld [vmem:[%s5 + $0x10] sm:$0xff]
        %v1439 = vld [vmem:[%s5 + $0x18] sm:$0xff]
        %v1440 = vld [vmem:[%s5 + $0x20] sm:$0xff]
        %v1441 = vld [vmem:[%s5 + $0x28] sm:$0xff]
        %v1442 = vld [vmem:[%s5 + $0x30] sm:$0xff]
        %v1443 = vld [vmem:[%s5 + $0x38] sm:$0xff]
        %v1444 = vld [vmem:[%s5 + $0x40] sm:$0xff]
        %v1445 = vld [vmem:[%s5 + $0x48] sm:$0xff]
        %v1446 = vld [vmem:[%s5 + $0x50] sm:$0xff]
        %v1447 = vld [vmem:[%s5 + $0x58] sm:$0xff]
        %v1448 = vld [vmem:[%s5 + $0x60] sm:$0xff]
        %v1449 = vld [vmem:[%s5 + $0x68] sm:$0xff]
        %v1450 = vld [vmem:[%s5 + $0x70] sm:$0xff]
        %v1451 = vld [vmem:[%s5 + $0x78] sm:$0xff]
        %v1452 = vld [vmem:[%s5 + $0x80] sm:$0xff]
        %v1453 = vld [vmem:[%s5 + $0x88] sm:$0xff]
        %v1454 = vld [vmem:[%s5 + $0x90] sm:$0xff]
        %v1455 = vld [vmem:[%s5 + $0x98] sm:$0xff]
        %v1456 = vld [vmem:[%s5 + $0xa0] sm:$0xff]
        %v1457 = vld [vmem:[%s5 + $0xa8] sm:$0xff]
        %v1458 = vld [vmem:[%s5 + $0xb0] sm:$0xff]
        %v1459 = vld [vmem:[%s5 + $0xb8] sm:$0xff]
        %v1460 = vld [vmem:[%s5 + $0xc0] sm:$0xff]
        %v1461 = vld [vmem:[%s5 + $0xc8] sm:$0xff]
        %v1462 = vld [vmem:[%s5 + $0xd0] sm:$0xff]
        %v1463 = vld [vmem:[%s5 + $0xd8] sm:$0xff]
        %v1464 = vld [vmem:[%s5 + $0xe0] sm:$0xff]
        %v1465 = vld [vmem:[%s5 + $0xe8] sm:$0xff]
        %v1466 = vld [vmem:[%s5 + $0xf0] sm:$0xff]
        %v1467 = vld [vmem:[%s5 + $0xf8] sm:$0xff]
        %v1468 = vld [vmem:[%s5 + $0x100] sm:$0xff]
        %v1469 = vld [vmem:[%s5 + $0x108] sm:$0xff]
        %v1470 = vld [vmem:[%s5 + $0x110] sm:$0xff]
        %v1471 = vld [vmem:[%s5 + $0x118] sm:$0xff]
        %v1472 = vld [vmem:[%s5 + $0x120] sm:$0xff]
        %v1473 = vld [vmem:[%s5 + $0x128] sm:$0xff]
        %v1474 = vld [vmem:[%s5 + $0x130] sm:$0xff]
        %v1475 = vld [vmem:[%s5 + $0x138] sm:$0xff]
        %v1476 = vld [vmem:[%s5 + $0x140] sm:$0xff]
        %v1477 = vld [vmem:[%s5 + $0x148] sm:$0xff]
        %v1478 = vld [vmem:[%s5 + $0x150] sm:$0xff]
        %v1479 = vld [vmem:[%s5 + $0x158] sm:$0xff]
        %v1480 = vld [vmem:[%s5 + $0x160] sm:$0xff]
        %v1481 = vld [vmem:[%s5 + $0x168] sm:$0xff]
        %v1482 = vld [vmem:[%s5 + $0x170] sm:$0xff]
        %v1483 = vld [vmem:[%s5 + $0x178] sm:$0xff]
        %v1484 = vld [vmem:[%s5 + $0x180] sm:$0xff]
        %v1485 = vld [vmem:[%s5 + $0x188] sm:$0xff]
        %v1486 = vld [vmem:[%s5 + $0x190] sm:$0xff]
        %v1487 = vld [vmem:[%s5 + $0x198] sm:$0xff]
        %v1488 = vld [vmem:[%s5 + $0x1a0] sm:$0xff]
        %v1489 = vld [vmem:[%s5 + $0x1a8] sm:$0xff]
        %v1490 = vld [vmem:[%s5 + $0x1b0] sm:$0xff]
        %v1491 = vld [vmem:[%s5 + $0x1b8] sm:$0xff]
        %v1492 = vld [vmem:[%s5 + $0x1c0] sm:$0xff]
        %v1493 = vld [vmem:[%s5 + $0x1c8] sm:$0xff]
        %v1494 = vld [vmem:[%s5 + $0x1d0] sm:$0xff]
        %v1495 = vld [vmem:[%s5 + $0x1d8] sm:$0xff]
        %v1496 = vld [vmem:[%s5 + $0x1e0] sm:$0xff]
        %v1497 = vld [vmem:[%s5 + $0x1e8] sm:$0xff]
        %v1498 = vld [vmem:[%s5 + $0x1f0] sm:$0xff]
        %v1499 = vld [vmem:[%s5 + $0x1f8] sm:$0xff]
        %v1500 = vld [vmem:[%s5 + $0x200] sm:$0xff]
        %v1501 = vld [vmem:[%s5 + $0x208] sm:$0xff]
        %v1502 = vld [vmem:[%s5 + $0x210] sm:$0xff]
        %v1503 = vld [vmem:[%s5 + $0x218] sm:$0xff]
        %v1504 = vld [vmem:[%s5 + $0x220] sm:$0xff]
        %v1505 = vld [vmem:[%s5 + $0x228] sm:$0xff]
        %v1506 = vld [vmem:[%s5 + $0x230] sm:$0xff]
        %v1507 = vld [vmem:[%s5 + $0x238] sm:$0xff]
        %v1508 = vld [vmem:[%s5 + $0x240] sm:$0xff]
        %v1509 = vld [vmem:[%s5 + $0x248] sm:$0xff]
        %v1510 = vld [vmem:[%s5 + $0x250] sm:$0xff]
        %v1511 = vld [vmem:[%s5 + $0x258] sm:$0xff]
        %v1512 = vld [vmem:[%s5 + $0x260] sm:$0xff]
        %v1513 = vld [vmem:[%s5 + $0x268] sm:$0xff]
        %v1514 = vld [vmem:[%s5 + $0x270] sm:$0xff]
        %v1515 = vld [vmem:[%s5 + $0x278] sm:$0xff]
        %v1516 = vld [vmem:[%s5 + $0x280] sm:$0xff]
        %v1517 = vld [vmem:[%s5 + $0x288] sm:$0xff]
        %v1518 = vld [vmem:[%s5 + $0x290] sm:$0xff]
        %v1519 = vld [vmem:[%s5 + $0x298] sm:$0xff]
        %v1520 = vld [vmem:[%s5 + $0x2a0] sm:$0xff]
        %v1521 = vld [vmem:[%s5 + $0x2a8] sm:$0xff]
        %v1522 = vld [vmem:[%s5 + $0x2b0] sm:$0xff]
        %v1523 = vld [vmem:[%s5 + $0x2b8] sm:$0xff]
        %v1524 = vld [vmem:[%s5 + $0x2c0] sm:$0xff]
        %v1525 = vld [vmem:[%s5 + $0x2c8] sm:$0xff]
        %v1526 = vld [vmem:[%s5 + $0x2d0] sm:$0xff]
        %v1527 = vld [vmem:[%s5 + $0x2d8] sm:$0xff]
        %v1528 = vld [vmem:[%s5 + $0x2e0] sm:$0xff]
        %v1529 = vld [vmem:[%s5 + $0x2e8] sm:$0xff]
        %v1530 = vld [vmem:[%s5 + $0x2f0] sm:$0xff]
        %v1531 = vld [vmem:[%s5 + $0x2f8] sm:$0xff]
        %v1532 = vld [vmem:[%s5 + $0x300] sm:$0xff]
        %v1533 = vld [vmem:[%s5 + $0x308] sm:$0xff]
        %v1534 = vld [vmem:[%s5 + $0x310] sm:$0xff]
        %v1535 = vld [vmem:[%s5 + $0x318] sm:$0xff]
        %v1536 = vld [vmem:[%s5 + $0x320] sm:$0xff]
        %v1537 = vld [vmem:[%s5 + $0x328] sm:$0xff]
        %v1538 = vld [vmem:[%s5 + $0x330] sm:$0xff]
        %v1539 = vld [vmem:[%s5 + $0x338] sm:$0xff]
        %v1540 = vld [vmem:[%s5 + $0x340] sm:$0xff]
        %v1541 = vld [vmem:[%s5 + $0x348] sm:$0xff]
        %v1542 = vld [vmem:[%s5 + $0x350] sm:$0xff]
        %v1543 = vld [vmem:[%s5 + $0x358] sm:$0xff]
        %v1544 = vld [vmem:[%s5 + $0x360] sm:$0xff]
        %v1545 = vld [vmem:[%s5 + $0x368] sm:$0xff]
        %v1546 = vld [vmem:[%s5 + $0x370] sm:$0xff]
        %v1547 = vld [vmem:[%s5 + $0x378] sm:$0xff]
        %v1548 = vld [vmem:[%s5 + $0x380] sm:$0xff]
        %v1549 = vld [vmem:[%s5 + $0x388] sm:$0xff]
        %v1550 = vld [vmem:[%s5 + $0x390] sm:$0xff]
        %v1551 = vld [vmem:[%s5 + $0x398] sm:$0xff]
        %v1552 = vld [vmem:[%s5 + $0x3a0] sm:$0xff]
        %v1553 = vld [vmem:[%s5 + $0x3a8] sm:$0xff]
        %v1554 = vld [vmem:[%s5 + $0x3b0] sm:$0xff]
        %v1555 = vld [vmem:[%s5 + $0x3b8] sm:$0xff]
        %v1556 = vld [vmem:[%s5 + $0x3c0] sm:$0xff]
        %v1557 = vld [vmem:[%s5 + $0x3c8] sm:$0xff]
        %v1558 = vld [vmem:[%s5 + $0x3d0] sm:$0xff]
        %v1559 = vld [vmem:[%s5 + $0x3d8] sm:$0xff]
        %v1560 = vld [vmem:[%s5 + $0x3e0] sm:$0xff]
        %v1561 = vld [vmem:[%s5 + $0x3e8] sm:$0xff]
        %v1562 = vld [vmem:[%s5 + $0x3f0] sm:$0xff]
        %v1563 = vld [vmem:[%s5 + $0x3f8] sm:$0xff]
        %v1564 = vld [vmem:[%s6] sm:$0xf]
        %v1566 = vperm.slane %v1564, 0
        %v1567 = vperm.slane %v1564, 1
        %v1568 = vperm.slane %v1564, 2
        %v1569 = vperm.slane %v1564, 3
        %v1702 = vunpack.c.l.b16 %v1436
        %v1703 = vunpack.c.h.b16 %v1436
        %v1704 = vunpack.c.l.b16 %v1437
        %v1705 = vunpack.c.h.b16 %v1437
        %v1706 = vunpack.c.l.b16 %v1438
        %v1707 = vunpack.c.h.b16 %v1438
        %v1708 = vunpack.c.l.b16 %v1439
        %v1709 = vunpack.c.h.b16 %v1439
        %v1710 = vunpack.c.l.b16 %v1440
        %v1711 = vunpack.c.h.b16 %v1440
        %v1712 = vunpack.c.l.b16 %v1441
        %v1713 = vunpack.c.h.b16 %v1441
        %v1714 = vunpack.c.l.b16 %v1442
        %v1715 = vunpack.c.h.b16 %v1442
        %v1716 = vunpack.c.l.b16 %v1443
        %v1717 = vunpack.c.h.b16 %v1443
        %v1718 = vunpack.c.l.b16 %v1444
        %v1719 = vunpack.c.h.b16 %v1444
        %v1720 = vunpack.c.l.b16 %v1445
        %v1721 = vunpack.c.h.b16 %v1445
        %v1722 = vunpack.c.l.b16 %v1446
        %v1723 = vunpack.c.h.b16 %v1446
        %v1724 = vunpack.c.l.b16 %v1447
        %v1725 = vunpack.c.h.b16 %v1447
        %v1726 = vunpack.c.l.b16 %v1448
        %v1727 = vunpack.c.h.b16 %v1448
        %v1728 = vunpack.c.l.b16 %v1449
        %v1729 = vunpack.c.h.b16 %v1449
        %v1730 = vunpack.c.l.b16 %v1450
        %v1731 = vunpack.c.h.b16 %v1450
        %v1732 = vunpack.c.l.b16 %v1451
        %v1733 = vunpack.c.h.b16 %v1451
        %v1734 = vunpack.c.l.b16 %v1452
        %v1735 = vunpack.c.h.b16 %v1452
        %v1736 = vunpack.c.l.b16 %v1453
        %v1737 = vunpack.c.h.b16 %v1453
        %v1738 = vunpack.c.l.b16 %v1454
        %v1739 = vunpack.c.h.b16 %v1454
        %v1740 = vunpack.c.l.b16 %v1455
        %v1741 = vunpack.c.h.b16 %v1455
        %v1742 = vunpack.c.l.b16 %v1456
        %v1743 = vunpack.c.h.b16 %v1456
        %v1744 = vunpack.c.l.b16 %v1457
        %v1745 = vunpack.c.h.b16 %v1457
        %v1746 = vunpack.c.l.b16 %v1458
        %v1747 = vunpack.c.h.b16 %v1458
        %v1748 = vunpack.c.l.b16 %v1459
        %v1749 = vunpack.c.h.b16 %v1459
        %v1750 = vunpack.c.l.b16 %v1460
        %v1751 = vunpack.c.h.b16 %v1460
        %v1752 = vunpack.c.l.b16 %v1461
        %v1753 = vunpack.c.h.b16 %v1461
        %v1754 = vunpack.c.l.b16 %v1462
        %v1755 = vunpack.c.h.b16 %v1462
        %v1756 = vunpack.c.l.b16 %v1463
        %v1757 = vunpack.c.h.b16 %v1463
        %v1758 = vunpack.c.l.b16 %v1464
        %v1759 = vunpack.c.h.b16 %v1464
        %v1760 = vunpack.c.l.b16 %v1465
        %v1761 = vunpack.c.h.b16 %v1465
        %v1762 = vunpack.c.l.b16 %v1466
        %v1763 = vunpack.c.h.b16 %v1466
        %v1764 = vunpack.c.l.b16 %v1467
        %v1765 = vunpack.c.h.b16 %v1467
        %v1766 = vunpack.c.l.b16 %v1468
        %v1767 = vunpack.c.h.b16 %v1468
        %v1768 = vunpack.c.l.b16 %v1469
        %v1769 = vunpack.c.h.b16 %v1469
        %v1770 = vunpack.c.l.b16 %v1470
        %v1771 = vunpack.c.h.b16 %v1470
        %v1772 = vunpack.c.l.b16 %v1471
        %v1773 = vunpack.c.h.b16 %v1471
        %v1774 = vunpack.c.l.b16 %v1472
        %v1775 = vunpack.c.h.b16 %v1472
        %v1776 = vunpack.c.l.b16 %v1473
        %v1777 = vunpack.c.h.b16 %v1473
        %v1778 = vunpack.c.l.b16 %v1474
        %v1779 = vunpack.c.h.b16 %v1474
        %v1780 = vunpack.c.l.b16 %v1475
        %v1781 = vunpack.c.h.b16 %v1475
        %v1782 = vunpack.c.l.b16 %v1476
        %v1783 = vunpack.c.h.b16 %v1476
        %v1784 = vunpack.c.l.b16 %v1477
        %v1785 = vunpack.c.h.b16 %v1477
        %v1786 = vunpack.c.l.b16 %v1478
        %v1787 = vunpack.c.h.b16 %v1478
        %v1788 = vunpack.c.l.b16 %v1479
        %v1789 = vunpack.c.h.b16 %v1479
        %v1790 = vunpack.c.l.b16 %v1480
        %v1791 = vunpack.c.h.b16 %v1480
        %v1792 = vunpack.c.l.b16 %v1481
        %v1793 = vunpack.c.h.b16 %v1481
        %v1794 = vunpack.c.l.b16 %v1482
        %v1795 = vunpack.c.h.b16 %v1482
        %v1796 = vunpack.c.l.b16 %v1483
        %v1797 = vunpack.c.h.b16 %v1483
        %v1798 = vunpack.c.l.b16 %v1484
        %v1799 = vunpack.c.h.b16 %v1484
        %v1800 = vunpack.c.l.b16 %v1485
        %v1801 = vunpack.c.h.b16 %v1485
        %v1802 = vunpack.c.l.b16 %v1486
        %v1803 = vunpack.c.h.b16 %v1486
        %v1804 = vunpack.c.l.b16 %v1487
        %v1805 = vunpack.c.h.b16 %v1487
        %v1806 = vunpack.c.l.b16 %v1488
        %v1807 = vunpack.c.h.b16 %v1488
        %v1808 = vunpack.c.l.b16 %v1489
        %v1809 = vunpack.c.h.b16 %v1489
        %v1810 = vunpack.c.l.b16 %v1490
        %v1811 = vunpack.c.h.b16 %v1490
        %v1812 = vunpack.c.l.b16 %v1491
        %v1813 = vunpack.c.h.b16 %v1491
        %v1814 = vunpack.c.l.b16 %v1492
        %v1815 = vunpack.c.h.b16 %v1492
        %v1816 = vunpack.c.l.b16 %v1493
        %v1817 = vunpack.c.h.b16 %v1493
        %v1818 = vunpack.c.l.b16 %v1494
        %v1819 = vunpack.c.h.b16 %v1494
        %v1820 = vunpack.c.l.b16 %v1495
        %v1821 = vunpack.c.h.b16 %v1495
        %v1822 = vunpack.c.l.b16 %v1496
        %v1823 = vunpack.c.h.b16 %v1496
        %v1824 = vunpack.c.l.b16 %v1497
        %v1825 = vunpack.c.h.b16 %v1497
        %v1826 = vunpack.c.l.b16 %v1498
        %v1827 = vunpack.c.h.b16 %v1498
        %v1828 = vunpack.c.l.b16 %v1499
        %v1829 = vunpack.c.h.b16 %v1499
        %v1830 = vunpack.c.l.b16 %v1500
        %v1831 = vunpack.c.h.b16 %v1500
        %v1832 = vunpack.c.l.b16 %v1501
        %v1833 = vunpack.c.h.b16 %v1501
        %v1834 = vunpack.c.l.b16 %v1502
        %v1835 = vunpack.c.h.b16 %v1502
        %v1836 = vunpack.c.l.b16 %v1503
        %v1837 = vunpack.c.h.b16 %v1503
        %v1838 = vunpack.c.l.b16 %v1504
        %v1839 = vunpack.c.h.b16 %v1504
        %v1840 = vunpack.c.l.b16 %v1505
        %v1841 = vunpack.c.h.b16 %v1505
        %v1842 = vunpack.c.l.b16 %v1506
        %v1843 = vunpack.c.h.b16 %v1506
        %v1844 = vunpack.c.l.b16 %v1507
        %v1845 = vunpack.c.h.b16 %v1507
        %v1846 = vunpack.c.l.b16 %v1508
        %v1847 = vunpack.c.h.b16 %v1508
        %v1848 = vunpack.c.l.b16 %v1509
        %v1849 = vunpack.c.h.b16 %v1509
        %v1850 = vunpack.c.l.b16 %v1510
        %v1851 = vunpack.c.h.b16 %v1510
        %v1852 = vunpack.c.l.b16 %v1511
        %v1853 = vunpack.c.h.b16 %v1511
        %v1854 = vunpack.c.l.b16 %v1512
        %v1855 = vunpack.c.h.b16 %v1512
        %v1856 = vunpack.c.l.b16 %v1513
        %v1857 = vunpack.c.h.b16 %v1513
        %v1858 = vunpack.c.l.b16 %v1514
        %v1859 = vunpack.c.h.b16 %v1514
        %v1860 = vunpack.c.l.b16 %v1515
        %v1861 = vunpack.c.h.b16 %v1515
        %v1862 = vunpack.c.l.b16 %v1516
        %v1863 = vunpack.c.h.b16 %v1516
        %v1864 = vunpack.c.l.b16 %v1517
        %v1865 = vunpack.c.h.b16 %v1517
        %v1866 = vunpack.c.l.b16 %v1518
        %v1867 = vunpack.c.h.b16 %v1518
        %v1868 = vunpack.c.l.b16 %v1519
        %v1869 = vunpack.c.h.b16 %v1519
        %v1870 = vunpack.c.l.b16 %v1520
        %v1871 = vunpack.c.h.b16 %v1520
        %v1872 = vunpack.c.l.b16 %v1521
        %v1873 = vunpack.c.h.b16 %v1521
        %v1874 = vunpack.c.l.b16 %v1522
        %v1875 = vunpack.c.h.b16 %v1522
        %v1876 = vunpack.c.l.b16 %v1523
        %v1877 = vunpack.c.h.b16 %v1523
        %v1878 = vunpack.c.l.b16 %v1524
        %v1879 = vunpack.c.h.b16 %v1524
        %v1880 = vunpack.c.l.b16 %v1525
        %v1881 = vunpack.c.h.b16 %v1525
        %v1882 = vunpack.c.l.b16 %v1526
        %v1883 = vunpack.c.h.b16 %v1526
        %v1884 = vunpack.c.l.b16 %v1527
        %v1885 = vunpack.c.h.b16 %v1527
        %v1886 = vunpack.c.l.b16 %v1528
        %v1887 = vunpack.c.h.b16 %v1528
        %v1888 = vunpack.c.l.b16 %v1529
        %v1889 = vunpack.c.h.b16 %v1529
        %v1890 = vunpack.c.l.b16 %v1530
        %v1891 = vunpack.c.h.b16 %v1530
        %v1892 = vunpack.c.l.b16 %v1531
        %v1893 = vunpack.c.h.b16 %v1531
        %v1894 = vunpack.c.l.b16 %v1532
        %v1895 = vunpack.c.h.b16 %v1532
        %v1896 = vunpack.c.l.b16 %v1533
        %v1897 = vunpack.c.h.b16 %v1533
        %v1898 = vunpack.c.l.b16 %v1534
        %v1899 = vunpack.c.h.b16 %v1534
        %v1900 = vunpack.c.l.b16 %v1535
        %v1901 = vunpack.c.h.b16 %v1535
        %v1902 = vunpack.c.l.b16 %v1536
        %v1903 = vunpack.c.h.b16 %v1536
        %v1904 = vunpack.c.l.b16 %v1537
        %v1905 = vunpack.c.h.b16 %v1537
        %v1906 = vunpack.c.l.b16 %v1538
        %v1907 = vunpack.c.h.b16 %v1538
        %v1908 = vunpack.c.l.b16 %v1539
        %v1909 = vunpack.c.h.b16 %v1539
        %v1910 = vunpack.c.l.b16 %v1540
        %v1911 = vunpack.c.h.b16 %v1540
        %v1912 = vunpack.c.l.b16 %v1541
        %v1913 = vunpack.c.h.b16 %v1541
        %v1914 = vunpack.c.l.b16 %v1542
        %v1915 = vunpack.c.h.b16 %v1542
        %v1916 = vunpack.c.l.b16 %v1543
        %v1917 = vunpack.c.h.b16 %v1543
        %v1918 = vunpack.c.l.b16 %v1544
        %v1919 = vunpack.c.h.b16 %v1544
        %v1920 = vunpack.c.l.b16 %v1545
        %v1921 = vunpack.c.h.b16 %v1545
        %v1922 = vunpack.c.l.b16 %v1546
        %v1923 = vunpack.c.h.b16 %v1546
        %v1924 = vunpack.c.l.b16 %v1547
        %v1925 = vunpack.c.h.b16 %v1547
        %v1926 = vunpack.c.l.b16 %v1548
        %v1927 = vunpack.c.h.b16 %v1548
        %v1928 = vunpack.c.l.b16 %v1549
        %v1929 = vunpack.c.h.b16 %v1549
        %v1930 = vunpack.c.l.b16 %v1550
        %v1931 = vunpack.c.h.b16 %v1550
        %v1932 = vunpack.c.l.b16 %v1551
        %v1933 = vunpack.c.h.b16 %v1551
        %v1934 = vunpack.c.l.b16 %v1552
        %v1935 = vunpack.c.h.b16 %v1552
        %v1936 = vunpack.c.l.b16 %v1553
        %v1937 = vunpack.c.h.b16 %v1553
        %v1938 = vunpack.c.l.b16 %v1554
        %v1939 = vunpack.c.h.b16 %v1554
        %v1940 = vunpack.c.l.b16 %v1555
        %v1941 = vunpack.c.h.b16 %v1555
        %v1942 = vunpack.c.l.b16 %v1556
        %v1943 = vunpack.c.h.b16 %v1556
        %v1944 = vunpack.c.l.b16 %v1557
        %v1945 = vunpack.c.h.b16 %v1557
        %v1946 = vunpack.c.l.b16 %v1558
        %v1947 = vunpack.c.h.b16 %v1558
        %v1948 = vunpack.c.l.b16 %v1559
        %v1949 = vunpack.c.h.b16 %v1559
        %v1950 = vunpack.c.l.b16 %v1560
        %v1951 = vunpack.c.h.b16 %v1560
        %v1952 = vunpack.c.l.b16 %v1561
        %v1953 = vunpack.c.h.b16 %v1561
        %v1954 = vunpack.c.l.b16 %v1562
        %v1955 = vunpack.c.h.b16 %v1562
        %v1956 = vunpack.c.l.b16 %v1563
        %v1957 = vunpack.c.h.b16 %v1563
        %v1958 = vpack.c.b16 %v1706, %v1702
        %v1959 = vpack.c.b16 %v1707, %v1703
        %v1960 = vpack.c.b16 %v1708, %v1704
        %v1961 = vpack.c.b16 %v1709, %v1705
        %v1962 = vpack.c.b16 %v1714, %v1710
        %v1963 = vpack.c.b16 %v1715, %v1711
        %v1964 = vpack.c.b16 %v1716, %v1712
        %v1965 = vpack.c.b16 %v1717, %v1713
        %v1966 = vpack.c.b16 %v1722, %v1718
        %v1967 = vpack.c.b16 %v1723, %v1719
        %v1968 = vpack.c.b16 %v1724, %v1720
        %v1969 = vpack.c.b16 %v1725, %v1721
        %v1970 = vpack.c.b16 %v1730, %v1726
        %v1971 = vpack.c.b16 %v1731, %v1727
        %v1972 = vpack.c.b16 %v1732, %v1728
        %v1973 = vpack.c.b16 %v1733, %v1729
        %v1974 = vpack.c.b16 %v1738, %v1734
        %v1975 = vpack.c.b16 %v1739, %v1735
        %v1976 = vpack.c.b16 %v1740, %v1736
        %v1977 = vpack.c.b16 %v1741, %v1737
        %v1978 = vpack.c.b16 %v1746, %v1742
        %v1979 = vpack.c.b16 %v1747, %v1743
        %v1980 = vpack.c.b16 %v1748, %v1744
        %v1981 = vpack.c.b16 %v1749, %v1745
        %v1982 = vpack.c.b16 %v1754, %v1750
        %v1983 = vpack.c.b16 %v1755, %v1751
        %v1984 = vpack.c.b16 %v1756, %v1752
        %v1985 = vpack.c.b16 %v1757, %v1753
        %v1986 = vpack.c.b16 %v1762, %v1758
        %v1987 = vpack.c.b16 %v1763, %v1759
        %v1988 = vpack.c.b16 %v1764, %v1760
        %v1989 = vpack.c.b16 %v1765, %v1761
        %v1990 = vpack.c.b16 %v1770, %v1766
        %v1991 = vpack.c.b16 %v1771, %v1767
        %v1992 = vpack.c.b16 %v1772, %v1768
        %v1993 = vpack.c.b16 %v1773, %v1769
        %v1994 = vpack.c.b16 %v1778, %v1774
        %v1995 = vpack.c.b16 %v1779, %v1775
        %v1996 = vpack.c.b16 %v1780, %v1776
        %v1997 = vpack.c.b16 %v1781, %v1777
        %v1998 = vpack.c.b16 %v1786, %v1782
        %v1999 = vpack.c.b16 %v1787, %v1783
        %v2000 = vpack.c.b16 %v1788, %v1784
        %v2001 = vpack.c.b16 %v1789, %v1785
        %v2002 = vpack.c.b16 %v1794, %v1790
        %v2003 = vpack.c.b16 %v1795, %v1791
        %v2004 = vpack.c.b16 %v1796, %v1792
        %v2005 = vpack.c.b16 %v1797, %v1793
        %v2006 = vpack.c.b16 %v1802, %v1798
        %v2007 = vpack.c.b16 %v1803, %v1799
        %v2008 = vpack.c.b16 %v1804, %v1800
        %v2009 = vpack.c.b16 %v1805, %v1801
        %v2010 = vpack.c.b16 %v1810, %v1806
        %v2011 = vpack.c.b16 %v1811, %v1807
        %v2012 = vpack.c.b16 %v1812, %v1808
        %v2013 = vpack.c.b16 %v1813, %v1809
        %v2014 = vpack.c.b16 %v1818, %v1814
        %v2015 = vpack.c.b16 %v1819, %v1815
        %v2016 = vpack.c.b16 %v1820, %v1816
        %v2017 = vpack.c.b16 %v1821, %v1817
        %v2018 = vpack.c.b16 %v1826, %v1822
        %v2019 = vpack.c.b16 %v1827, %v1823
        %v2020 = vpack.c.b16 %v1828, %v1824
        %v2021 = vpack.c.b16 %v1829, %v1825
        %v2022 = vpack.c.b16 %v1834, %v1830
        %v2023 = vpack.c.b16 %v1835, %v1831
        %v2024 = vpack.c.b16 %v1836, %v1832
        %v2025 = vpack.c.b16 %v1837, %v1833
        %v2026 = vpack.c.b16 %v1842, %v1838
        %v2027 = vpack.c.b16 %v1843, %v1839
        %v2028 = vpack.c.b16 %v1844, %v1840
        %v2029 = vpack.c.b16 %v1845, %v1841
        %v2030 = vpack.c.b16 %v1850, %v1846
        %v2031 = vpack.c.b16 %v1851, %v1847
        %v2032 = vpack.c.b16 %v1852, %v1848
        %v2033 = vpack.c.b16 %v1853, %v1849
        %v2034 = vpack.c.b16 %v1858, %v1854
        %v2035 = vpack.c.b16 %v1859, %v1855
        %v2036 = vpack.c.b16 %v1860, %v1856
        %v2037 = vpack.c.b16 %v1861, %v1857
        %v2038 = vpack.c.b16 %v1866, %v1862
        %v2039 = vpack.c.b16 %v1867, %v1863
        %v2040 = vpack.c.b16 %v1868, %v1864
        %v2041 = vpack.c.b16 %v1869, %v1865
        %v2042 = vpack.c.b16 %v1874, %v1870
        %v2043 = vpack.c.b16 %v1875, %v1871
        %v2044 = vpack.c.b16 %v1876, %v1872
        %v2045 = vpack.c.b16 %v1877, %v1873
        %v2046 = vpack.c.b16 %v1882, %v1878
        %v2047 = vpack.c.b16 %v1883, %v1879
        %v2048 = vpack.c.b16 %v1884, %v1880
        %v2049 = vpack.c.b16 %v1885, %v1881
        %v2050 = vpack.c.b16 %v1890, %v1886
        %v2051 = vpack.c.b16 %v1891, %v1887
        %v2052 = vpack.c.b16 %v1892, %v1888
        %v2053 = vpack.c.b16 %v1893, %v1889
        %v2054 = vpack.c.b16 %v1898, %v1894
        %v2055 = vpack.c.b16 %v1899, %v1895
        %v2056 = vpack.c.b16 %v1900, %v1896
        %v2057 = vpack.c.b16 %v1901, %v1897
        %v2058 = vpack.c.b16 %v1906, %v1902
        %v2059 = vpack.c.b16 %v1907, %v1903
        %v2060 = vpack.c.b16 %v1908, %v1904
        %v2061 = vpack.c.b16 %v1909, %v1905
        %v2062 = vpack.c.b16 %v1914, %v1910
        %v2063 = vpack.c.b16 %v1915, %v1911
        %v2064 = vpack.c.b16 %v1916, %v1912
        %v2065 = vpack.c.b16 %v1917, %v1913
        %v2066 = vpack.c.b16 %v1922, %v1918
        %v2067 = vpack.c.b16 %v1923, %v1919
        %v2068 = vpack.c.b16 %v1924, %v1920
        %v2069 = vpack.c.b16 %v1925, %v1921
        %v2070 = vpack.c.b16 %v1930, %v1926
        %v2071 = vpack.c.b16 %v1931, %v1927
        %v2072 = vpack.c.b16 %v1932, %v1928
        %v2073 = vpack.c.b16 %v1933, %v1929
        %v2074 = vpack.c.b16 %v1938, %v1934
        %v2075 = vpack.c.b16 %v1939, %v1935
        %v2076 = vpack.c.b16 %v1940, %v1936
        %v2077 = vpack.c.b16 %v1941, %v1937
        %v2078 = vpack.c.b16 %v1946, %v1942
        %v2079 = vpack.c.b16 %v1947, %v1943
        %v2080 = vpack.c.b16 %v1948, %v1944
        %v2081 = vpack.c.b16 %v1949, %v1945
        %v2082 = vpack.c.b16 %v1954, %v1950
        %v2083 = vpack.c.b16 %v1955, %v1951
        %v2084 = vpack.c.b16 %v1956, %v1952
        %v2085 = vpack.c.b16 %v1957, %v1953
        %2214 = vmatpush.bf16.msra.mxu0 %v1986
        %2215 = vmatpush.bf16.msra.mxu0 %v1982
        %2216 = vmatpush.bf16.msra.mxu0 %v1978
        %2217 = vmatpush.bf16.msra.mxu0 %v1974
        %2218 = vmatpush.bf16.msra.mxu0 %v1970
        %2219 = vmatpush.bf16.msra.mxu0 %v1966
        %2220 = vmatpush.bf16.msra.mxu0 %v1962
        %2221 = vmatpush.bf16.msra.mxu0 %v1958
        %2222 = vmatmul.bf16.gmra.mxu0 %v438
        %v2223 = vpop.f32.mrf.mxu0
        %v2224 = vadd.f32 %v1566, %v2223
        %v2225 = vpop.f32.mrf.mxu0
        %2226 = vdwg.mxu0
        %2227 = vmatpush.bf16.msra.mxu0 %v2018
        %2228 = vmatpush.bf16.msra.mxu0 %v2014
        %2229 = vmatpush.bf16.msra.mxu0 %v2010
        %2230 = vmatpush.bf16.msra.mxu0 %v2006
        %2231 = vmatpush.bf16.msra.mxu0 %v2002
        %2232 = vmatpush.bf16.msra.mxu0 %v1998
        %2233 = vmatpush.bf16.msra.mxu0 %v1994
        %2234 = vmatpush.bf16.msra.mxu0 %v1990
        %2235 = vmatmul.bf16.gmra.mxu0 %v439
        %v2236 = vpop.f32.mrf.mxu0
        %v2237 = vadd.f32 %v2224, %v2236
        %v2238 = vpop.f32.mrf.mxu0
        %2239 = vdwg.mxu0
        %2240 = vmatpush.bf16.msra.mxu0 %v2050
        %2241 = vmatpush.bf16.msra.mxu0 %v2046
        %2242 = vmatpush.bf16.msra.mxu0 %v2042
        %2243 = vmatpush.bf16.msra.mxu0 %v2038
        %2244 = vmatpush.bf16.msra.mxu0 %v2034
        %2245 = vmatpush.bf16.msra.mxu0 %v2030
        %2246 = vmatpush.bf16.msra.mxu0 %v2026
        %2247 = vmatpush.bf16.msra.mxu0 %v2022
        %2248 = vmatmul.bf16.gmra.mxu0 %v440
        %v2249 = vpop.f32.mrf.mxu0
        %v2250 = vadd.f32 %v2237, %v2249
        %v2251 = vpop.f32.mrf.mxu0
        %2252 = vdwg.mxu0
        %2253 = vmatpush.bf16.msra.mxu0 %v2082
        %2254 = vmatpush.bf16.msra.mxu0 %v2078
        %2255 = vmatpush.bf16.msra.mxu0 %v2074
        %2256 = vmatpush.bf16.msra.mxu0 %v2070
        %2257 = vmatpush.bf16.msra.mxu0 %v2066
        %2258 = vmatpush.bf16.msra.mxu0 %v2062
        %2259 = vmatpush.bf16.msra.mxu0 %v2058
        %2260 = vmatpush.bf16.msra.mxu0 %v2054
        %2261 = vmatmul.bf16.gmra.mxu0 %v441
        %v2262 = vpop.f32.mrf.mxu0
        %v2263 = vadd.f32 %v2250, %v2262
        %v2264 = vpop.f32.mrf.mxu0
        %2265 = vdwg.mxu0
        %2266 = vmatpush.bf16.msra.mxu0 %v1987
        %2267 = vmatpush.bf16.msra.mxu0 %v1983
        %2268 = vmatpush.bf16.msra.mxu0 %v1979
        %2269 = vmatpush.bf16.msra.mxu0 %v1975
        %2270 = vmatpush.bf16.msra.mxu0 %v1971
        %2271 = vmatpush.bf16.msra.mxu0 %v1967
        %2272 = vmatpush.bf16.msra.mxu0 %v1963
        %2273 = vmatpush.bf16.msra.mxu0 %v1959
        %2274 = vmatmul.bf16.gmra.mxu0 %v438
        %v2275 = vpop.f32.mrf.mxu0
        %v2276 = vadd.f32 %v1567, %v2275
        %v2277 = vpop.f32.mrf.mxu0
        %2278 = vdwg.mxu0
        %2279 = vmatpush.bf16.msra.mxu0 %v2019
        %2280 = vmatpush.bf16.msra.mxu0 %v2015
        %2281 = vmatpush.bf16.msra.mxu0 %v2011
        %2282 = vmatpush.bf16.msra.mxu0 %v2007
        %2283 = vmatpush.bf16.msra.mxu0 %v2003
        %2284 = vmatpush.bf16.msra.mxu0 %v1999
        %2285 = vmatpush.bf16.msra.mxu0 %v1995
        %2286 = vmatpush.bf16.msra.mxu0 %v1991
        %2287 = vmatmul.bf16.gmra.mxu0 %v439
        %v2288 = vpop.f32.mrf.mxu0
        %v2289 = vadd.f32 %v2276, %v2288
        %v2290 = vpop.f32.mrf.mxu0
        %2291 = vdwg.mxu0
        %2292 = vmatpush.bf16.msra.mxu0 %v2051
        %2293 = vmatpush.bf16.msra.mxu0 %v2047
        %2294 = vmatpush.bf16.msra.mxu0 %v2043
        %2295 = vmatpush.bf16.msra.mxu0 %v2039
        %2296 = vmatpush.bf16.msra.mxu0 %v2035
        %2297 = vmatpush.bf16.msra.mxu0 %v2031
        %2298 = vmatpush.bf16.msra.mxu0 %v2027
        %2299 = vmatpush.bf16.msra.mxu0 %v2023
        %2300 = vmatmul.bf16.gmra.mxu0 %v440
        %v2301 = vpop.f32.mrf.mxu0
        %v2302 = vadd.f32 %v2289, %v2301
        %v2303 = vpop.f32.mrf.mxu0
        %2304 = vdwg.mxu0
        %2305 = vmatpush.bf16.msra.mxu0 %v2083
        %2306 = vmatpush.bf16.msra.mxu0 %v2079
        %2307 = vmatpush.bf16.msra.mxu0 %v2075
        %2308 = vmatpush.bf16.msra.mxu0 %v2071
        %2309 = vmatpush.bf16.msra.mxu0 %v2067
        %2310 = vmatpush.bf16.msra.mxu0 %v2063
        %2311 = vmatpush.bf16.msra.mxu0 %v2059
        %2312 = vmatpush.bf16.msra.mxu0 %v2055
        %2313 = vmatmul.bf16.gmra.mxu0 %v441
        %v2314 = vpop.f32.mrf.mxu0
        %v2315 = vadd.f32 %v2302, %v2314
        %v2316 = vpop.f32.mrf.mxu0
        %2317 = vdwg.mxu0
        %2318 = vmatpush.bf16.msra.mxu0 %v1988
        %2319 = vmatpush.bf16.msra.mxu0 %v1984
        %2320 = vmatpush.bf16.msra.mxu0 %v1980
        %2321 = vmatpush.bf16.msra.mxu0 %v1976
        %2322 = vmatpush.bf16.msra.mxu0 %v1972
        %2323 = vmatpush.bf16.msra.mxu0 %v1968
        %2324 = vmatpush.bf16.msra.mxu0 %v1964
        %2325 = vmatpush.bf16.msra.mxu0 %v1960
        %2326 = vmatmul.bf16.gmra.mxu0 %v438
        %v2327 = vpop.f32.mrf.mxu0
        %v2328 = vadd.f32 %v1568, %v2327
        %v2329 = vpop.f32.mrf.mxu0
        %2330 = vdwg.mxu0
        %2331 = vmatpush.bf16.msra.mxu0 %v2020
        %2332 = vmatpush.bf16.msra.mxu0 %v2016
        %2333 = vmatpush.bf16.msra.mxu0 %v2012
        %2334 = vmatpush.bf16.msra.mxu0 %v2008
        %2335 = vmatpush.bf16.msra.mxu0 %v2004
        %2336 = vmatpush.bf16.msra.mxu0 %v2000
        %2337 = vmatpush.bf16.msra.mxu0 %v1996
        %2338 = vmatpush.bf16.msra.mxu0 %v1992
        %2339 = vmatmul.bf16.gmra.mxu0 %v439
        %v2340 = vpop.f32.mrf.mxu0
        %v2341 = vadd.f32 %v2328, %v2340
        %v2342 = vpop.f32.mrf.mxu0
        %2343 = vdwg.mxu0
        %2344 = vmatpush.bf16.msra.mxu0 %v2052
        %2345 = vmatpush.bf16.msra.mxu0 %v2048
        %2346 = vmatpush.bf16.msra.mxu0 %v2044
        %2347 = vmatpush.bf16.msra.mxu0 %v2040
        %2348 = vmatpush.bf16.msra.mxu0 %v2036
        %2349 = vmatpush.bf16.msra.mxu0 %v2032
        %2350 = vmatpush.bf16.msra.mxu0 %v2028
        %2351 = vmatpush.bf16.msra.mxu0 %v2024
        %2352 = vmatmul.bf16.gmra.mxu0 %v440
        %v2353 = vpop.f32.mrf.mxu0
        %v2354 = vadd.f32 %v2341, %v2353
        %v2355 = vpop.f32.mrf.mxu0
        %2356 = vdwg.mxu0
        %2357 = vmatpush.bf16.msra.mxu0 %v2084
        %2358 = vmatpush.bf16.msra.mxu0 %v2080
        %2359 = vmatpush.bf16.msra.mxu0 %v2076
        %2360 = vmatpush.bf16.msra.mxu0 %v2072
        %2361 = vmatpush.bf16.msra.mxu0 %v2068
        %2362 = vmatpush.bf16.msra.mxu0 %v2064
        %2363 = vmatpush.bf16.msra.mxu0 %v2060
        %2364 = vmatpush.bf16.msra.mxu0 %v2056
        %2365 = vmatmul.bf16.gmra.mxu0 %v441
        %v2366 = vpop.f32.mrf.mxu0
        %v2367 = vadd.f32 %v2354, %v2366
        %v2368 = vpop.f32.mrf.mxu0
        %2369 = vdwg.mxu0
        %2370 = vmatpush.bf16.msra.mxu0 %v1989
        %2371 = vmatpush.bf16.msra.mxu0 %v1985
        %2372 = vmatpush.bf16.msra.mxu0 %v1981
        %2373 = vmatpush.bf16.msra.mxu0 %v1977
        %2374 = vmatpush.bf16.msra.mxu0 %v1973
        %2375 = vmatpush.bf16.msra.mxu0 %v1969
        %2376 = vmatpush.bf16.msra.mxu0 %v1965
        %2377 = vmatpush.bf16.msra.mxu0 %v1961
        %2378 = vmatmul.bf16.gmra.mxu0 %v438
        %v2379 = vpop.f32.mrf.mxu0
        %v2380 = vadd.f32 %v1569, %v2379
        %v2381 = vpop.f32.mrf.mxu0
        %2382 = vdwg.mxu0
        %2383 = vmatpush.bf16.msra.mxu0 %v2021
        %2384 = vmatpush.bf16.msra.mxu0 %v2017
        %2385 = vmatpush.bf16.msra.mxu0 %v2013
        %2386 = vmatpush.bf16.msra.mxu0 %v2009
        %2387 = vmatpush.bf16.msra.mxu0 %v2005
        %2388 = vmatpush.bf16.msra.mxu0 %v2001
        %2389 = vmatpush.bf16.msra.mxu0 %v1997
        %2390 = vmatpush.bf16.msra.mxu0 %v1993
        %2391 = vmatmul.bf16.gmra.mxu0 %v439
        %v2392 = vpop.f32.mrf.mxu0
        %v2393 = vadd.f32 %v2380, %v2392
        %v2394 = vpop.f32.mrf.mxu0
        %2395 = vdwg.mxu0
        %2396 = vmatpush.bf16.msra.mxu0 %v2053
        %2397 = vmatpush.bf16.msra.mxu0 %v2049
        %2398 = vmatpush.bf16.msra.mxu0 %v2045
        %2399 = vmatpush.bf16.msra.mxu0 %v2041
        %2400 = vmatpush.bf16.msra.mxu0 %v2037
        %2401 = vmatpush.bf16.msra.mxu0 %v2033
        %2402 = vmatpush.bf16.msra.mxu0 %v2029
        %2403 = vmatpush.bf16.msra.mxu0 %v2025
        %2404 = vmatmul.bf16.gmra.mxu0 %v440
        %v2405 = vpop.f32.mrf.mxu0
        %v2406 = vadd.f32 %v2393, %v2405
        %v2407 = vpop.f32.mrf.mxu0
        %2408 = vdwg.mxu0
        %2409 = vmatpush.bf16.msra.mxu0 %v2085
        %2410 = vmatpush.bf16.msra.mxu0 %v2081
        %2411 = vmatpush.bf16.msra.mxu0 %v2077
        %2412 = vmatpush.bf16.msra.mxu0 %v2073
        %2413 = vmatpush.bf16.msra.mxu0 %v2069
        %2414 = vmatpush.bf16.msra.mxu0 %v2065
        %2415 = vmatpush.bf16.msra.mxu0 %v2061
        %2416 = vmatpush.bf16.msra.mxu0 %v2057
        %2417 = vmatmul.bf16.gmra.mxu0 %v441
        %v2418 = vpop.f32.mrf.mxu0
        %v2419 = vadd.f32 %v2406, %v2418
        %v2420 = vpop.f32.mrf.mxu0
        %2421 = vdwg.mxu0
        %v2422 = vld [vmem:[%s7] sm:$0xff]
        %v2423 = vld [vmem:[%s7 + $0x8] sm:$0xff]
        %v2424 = vld [vmem:[%s7 + $0x10] sm:$0xff]
        %v2425 = vld [vmem:[%s7 + $0x18] sm:$0xff]
        %v2426 = vld [vmem:[%s7 + $0x20] sm:$0xff]
        %v2427 = vld [vmem:[%s7 + $0x28] sm:$0xff]
        %v2428 = vld [vmem:[%s7 + $0x30] sm:$0xff]
        %v2429 = vld [vmem:[%s7 + $0x38] sm:$0xff]
        %v2430 = vld [vmem:[%s7 + $0x40] sm:$0xff]
        %v2431 = vld [vmem:[%s7 + $0x48] sm:$0xff]
        %v2432 = vld [vmem:[%s7 + $0x50] sm:$0xff]
        %v2433 = vld [vmem:[%s7 + $0x58] sm:$0xff]
        %v2434 = vld [vmem:[%s7 + $0x60] sm:$0xff]
        %v2435 = vld [vmem:[%s7 + $0x68] sm:$0xff]
        %v2436 = vld [vmem:[%s7 + $0x70] sm:$0xff]
        %v2437 = vld [vmem:[%s7 + $0x78] sm:$0xff]
        %v2438 = vld [vmem:[%s7 + $0x80] sm:$0xff]
        %v2439 = vld [vmem:[%s7 + $0x88] sm:$0xff]
        %v2440 = vld [vmem:[%s7 + $0x90] sm:$0xff]
        %v2441 = vld [vmem:[%s7 + $0x98] sm:$0xff]
        %v2442 = vld [vmem:[%s7 + $0xa0] sm:$0xff]
        %v2443 = vld [vmem:[%s7 + $0xa8] sm:$0xff]
        %v2444 = vld [vmem:[%s7 + $0xb0] sm:$0xff]
        %v2445 = vld [vmem:[%s7 + $0xb8] sm:$0xff]
        %v2446 = vld [vmem:[%s7 + $0xc0] sm:$0xff]
        %v2447 = vld [vmem:[%s7 + $0xc8] sm:$0xff]
        %v2448 = vld [vmem:[%s7 + $0xd0] sm:$0xff]
        %v2449 = vld [vmem:[%s7 + $0xd8] sm:$0xff]
        %v2450 = vld [vmem:[%s7 + $0xe0] sm:$0xff]
        %v2451 = vld [vmem:[%s7 + $0xe8] sm:$0xff]
        %v2452 = vld [vmem:[%s7 + $0xf0] sm:$0xff]
        %v2453 = vld [vmem:[%s7 + $0xf8] sm:$0xff]
        %v2454 = vld [vmem:[%s7 + $0x100] sm:$0xff]
        %v2455 = vld [vmem:[%s7 + $0x108] sm:$0xff]
        %v2456 = vld [vmem:[%s7 + $0x110] sm:$0xff]
        %v2457 = vld [vmem:[%s7 + $0x118] sm:$0xff]
        %v2458 = vld [vmem:[%s7 + $0x120] sm:$0xff]
        %v2459 = vld [vmem:[%s7 + $0x128] sm:$0xff]
        %v2460 = vld [vmem:[%s7 + $0x130] sm:$0xff]
        %v2461 = vld [vmem:[%s7 + $0x138] sm:$0xff]
        %v2462 = vld [vmem:[%s7 + $0x140] sm:$0xff]
        %v2463 = vld [vmem:[%s7 + $0x148] sm:$0xff]
        %v2464 = vld [vmem:[%s7 + $0x150] sm:$0xff]
        %v2465 = vld [vmem:[%s7 + $0x158] sm:$0xff]
        %v2466 = vld [vmem:[%s7 + $0x160] sm:$0xff]
        %v2467 = vld [vmem:[%s7 + $0x168] sm:$0xff]
        %v2468 = vld [vmem:[%s7 + $0x170] sm:$0xff]
        %v2469 = vld [vmem:[%s7 + $0x178] sm:$0xff]
        %v2470 = vld [vmem:[%s7 + $0x180] sm:$0xff]
        %v2471 = vld [vmem:[%s7 + $0x188] sm:$0xff]
        %v2472 = vld [vmem:[%s7 + $0x190] sm:$0xff]
        %v2473 = vld [vmem:[%s7 + $0x198] sm:$0xff]
        %v2474 = vld [vmem:[%s7 + $0x1a0] sm:$0xff]
        %v2475 = vld [vmem:[%s7 + $0x1a8] sm:$0xff]
        %v2476 = vld [vmem:[%s7 + $0x1b0] sm:$0xff]
        %v2477 = vld [vmem:[%s7 + $0x1b8] sm:$0xff]
        %v2478 = vld [vmem:[%s7 + $0x1c0] sm:$0xff]
        %v2479 = vld [vmem:[%s7 + $0x1c8] sm:$0xff]
        %v2480 = vld [vmem:[%s7 + $0x1d0] sm:$0xff]
        %v2481 = vld [vmem:[%s7 + $0x1d8] sm:$0xff]
        %v2482 = vld [vmem:[%s7 + $0x1e0] sm:$0xff]
        %v2483 = vld [vmem:[%s7 + $0x1e8] sm:$0xff]
        %v2484 = vld [vmem:[%s7 + $0x1f0] sm:$0xff]
        %v2485 = vld [vmem:[%s7 + $0x1f8] sm:$0xff]
        %v2486 = vld [vmem:[%s7 + $0x200] sm:$0xff]
        %v2487 = vld [vmem:[%s7 + $0x208] sm:$0xff]
        %v2488 = vld [vmem:[%s7 + $0x210] sm:$0xff]
        %v2489 = vld [vmem:[%s7 + $0x218] sm:$0xff]
        %v2490 = vld [vmem:[%s7 + $0x220] sm:$0xff]
        %v2491 = vld [vmem:[%s7 + $0x228] sm:$0xff]
        %v2492 = vld [vmem:[%s7 + $0x230] sm:$0xff]
        %v2493 = vld [vmem:[%s7 + $0x238] sm:$0xff]
        %v2494 = vld [vmem:[%s7 + $0x240] sm:$0xff]
        %v2495 = vld [vmem:[%s7 + $0x248] sm:$0xff]
        %v2496 = vld [vmem:[%s7 + $0x250] sm:$0xff]
        %v2497 = vld [vmem:[%s7 + $0x258] sm:$0xff]
        %v2498 = vld [vmem:[%s7 + $0x260] sm:$0xff]
        %v2499 = vld [vmem:[%s7 + $0x268] sm:$0xff]
        %v2500 = vld [vmem:[%s7 + $0x270] sm:$0xff]
        %v2501 = vld [vmem:[%s7 + $0x278] sm:$0xff]
        %v2502 = vld [vmem:[%s7 + $0x280] sm:$0xff]
        %v2503 = vld [vmem:[%s7 + $0x288] sm:$0xff]
        %v2504 = vld [vmem:[%s7 + $0x290] sm:$0xff]
        %v2505 = vld [vmem:[%s7 + $0x298] sm:$0xff]
        %v2506 = vld [vmem:[%s7 + $0x2a0] sm:$0xff]
        %v2507 = vld [vmem:[%s7 + $0x2a8] sm:$0xff]
        %v2508 = vld [vmem:[%s7 + $0x2b0] sm:$0xff]
        %v2509 = vld [vmem:[%s7 + $0x2b8] sm:$0xff]
        %v2510 = vld [vmem:[%s7 + $0x2c0] sm:$0xff]
        %v2511 = vld [vmem:[%s7 + $0x2c8] sm:$0xff]
        %v2512 = vld [vmem:[%s7 + $0x2d0] sm:$0xff]
        %v2513 = vld [vmem:[%s7 + $0x2d8] sm:$0xff]
        %v2514 = vld [vmem:[%s7 + $0x2e0] sm:$0xff]
        %v2515 = vld [vmem:[%s7 + $0x2e8] sm:$0xff]
        %v2516 = vld [vmem:[%s7 + $0x2f0] sm:$0xff]
        %v2517 = vld [vmem:[%s7 + $0x2f8] sm:$0xff]
        %v2518 = vld [vmem:[%s7 + $0x300] sm:$0xff]
        %v2519 = vld [vmem:[%s7 + $0x308] sm:$0xff]
        %v2520 = vld [vmem:[%s7 + $0x310] sm:$0xff]
        %v2521 = vld [vmem:[%s7 + $0x318] sm:$0xff]
        %v2522 = vld [vmem:[%s7 + $0x320] sm:$0xff]
        %v2523 = vld [vmem:[%s7 + $0x328] sm:$0xff]
        %v2524 = vld [vmem:[%s7 + $0x330] sm:$0xff]
        %v2525 = vld [vmem:[%s7 + $0x338] sm:$0xff]
        %v2526 = vld [vmem:[%s7 + $0x340] sm:$0xff]
        %v2527 = vld [vmem:[%s7 + $0x348] sm:$0xff]
        %v2528 = vld [vmem:[%s7 + $0x350] sm:$0xff]
        %v2529 = vld [vmem:[%s7 + $0x358] sm:$0xff]
        %v2530 = vld [vmem:[%s7 + $0x360] sm:$0xff]
        %v2531 = vld [vmem:[%s7 + $0x368] sm:$0xff]
        %v2532 = vld [vmem:[%s7 + $0x370] sm:$0xff]
        %v2533 = vld [vmem:[%s7 + $0x378] sm:$0xff]
        %v2534 = vld [vmem:[%s7 + $0x380] sm:$0xff]
        %v2535 = vld [vmem:[%s7 + $0x388] sm:$0xff]
        %v2536 = vld [vmem:[%s7 + $0x390] sm:$0xff]
        %v2537 = vld [vmem:[%s7 + $0x398] sm:$0xff]
        %v2538 = vld [vmem:[%s7 + $0x3a0] sm:$0xff]
        %v2539 = vld [vmem:[%s7 + $0x3a8] sm:$0xff]
        %v2540 = vld [vmem:[%s7 + $0x3b0] sm:$0xff]
        %v2541 = vld [vmem:[%s7 + $0x3b8] sm:$0xff]
        %v2542 = vld [vmem:[%s7 + $0x3c0] sm:$0xff]
        %v2543 = vld [vmem:[%s7 + $0x3c8] sm:$0xff]
        %v2544 = vld [vmem:[%s7 + $0x3d0] sm:$0xff]
        %v2545 = vld [vmem:[%s7 + $0x3d8] sm:$0xff]
        %v2546 = vld [vmem:[%s7 + $0x3e0] sm:$0xff]
        %v2547 = vld [vmem:[%s7 + $0x3e8] sm:$0xff]
        %v2548 = vld [vmem:[%s7 + $0x3f0] sm:$0xff]
        %v2549 = vld [vmem:[%s7 + $0x3f8] sm:$0xff]
        %v2550 = vld [vmem:[%s8] sm:$0xf]
        %v2552 = vperm.slane %v2550, 0
        %v2553 = vperm.slane %v2550, 1
        %v2554 = vperm.slane %v2550, 2
        %v2555 = vperm.slane %v2550, 3
        %v2688 = vunpack.c.l.b16 %v2422
        %v2689 = vunpack.c.h.b16 %v2422
        %v2690 = vunpack.c.l.b16 %v2423
        %v2691 = vunpack.c.h.b16 %v2423
        %v2692 = vunpack.c.l.b16 %v2424
        %v2693 = vunpack.c.h.b16 %v2424
        %v2694 = vunpack.c.l.b16 %v2425
        %v2695 = vunpack.c.h.b16 %v2425
        %v2696 = vunpack.c.l.b16 %v2426
        %v2697 = vunpack.c.h.b16 %v2426
        %v2698 = vunpack.c.l.b16 %v2427
        %v2699 = vunpack.c.h.b16 %v2427
        %v2700 = vunpack.c.l.b16 %v2428
        %v2701 = vunpack.c.h.b16 %v2428
        %v2702 = vunpack.c.l.b16 %v2429
        %v2703 = vunpack.c.h.b16 %v2429
        %v2704 = vunpack.c.l.b16 %v2430
        %v2705 = vunpack.c.h.b16 %v2430
        %v2706 = vunpack.c.l.b16 %v2431
        %v2707 = vunpack.c.h.b16 %v2431
        %v2708 = vunpack.c.l.b16 %v2432
        %v2709 = vunpack.c.h.b16 %v2432
        %v2710 = vunpack.c.l.b16 %v2433
        %v2711 = vunpack.c.h.b16 %v2433
        %v2712 = vunpack.c.l.b16 %v2434
        %v2713 = vunpack.c.h.b16 %v2434
        %v2714 = vunpack.c.l.b16 %v2435
        %v2715 = vunpack.c.h.b16 %v2435
        %v2716 = vunpack.c.l.b16 %v2436
        %v2717 = vunpack.c.h.b16 %v2436
        %v2718 = vunpack.c.l.b16 %v2437
        %v2719 = vunpack.c.h.b16 %v2437
        %v2720 = vunpack.c.l.b16 %v2438
        %v2721 = vunpack.c.h.b16 %v2438
        %v2722 = vunpack.c.l.b16 %v2439
        %v2723 = vunpack.c.h.b16 %v2439
        %v2724 = vunpack.c.l.b16 %v2440
        %v2725 = vunpack.c.h.b16 %v2440
        %v2726 = vunpack.c.l.b16 %v2441
        %v2727 = vunpack.c.h.b16 %v2441
        %v2728 = vunpack.c.l.b16 %v2442
        %v2729 = vunpack.c.h.b16 %v2442
        %v2730 = vunpack.c.l.b16 %v2443
        %v2731 = vunpack.c.h.b16 %v2443
        %v2732 = vunpack.c.l.b16 %v2444
        %v2733 = vunpack.c.h.b16 %v2444
        %v2734 = vunpack.c.l.b16 %v2445
        %v2735 = vunpack.c.h.b16 %v2445
        %v2736 = vunpack.c.l.b16 %v2446
        %v2737 = vunpack.c.h.b16 %v2446
        %v2738 = vunpack.c.l.b16 %v2447
        %v2739 = vunpack.c.h.b16 %v2447
        %v2740 = vunpack.c.l.b16 %v2448
        %v2741 = vunpack.c.h.b16 %v2448
        %v2742 = vunpack.c.l.b16 %v2449
        %v2743 = vunpack.c.h.b16 %v2449
        %v2744 = vunpack.c.l.b16 %v2450
        %v2745 = vunpack.c.h.b16 %v2450
        %v2746 = vunpack.c.l.b16 %v2451
        %v2747 = vunpack.c.h.b16 %v2451
        %v2748 = vunpack.c.l.b16 %v2452
        %v2749 = vunpack.c.h.b16 %v2452
        %v2750 = vunpack.c.l.b16 %v2453
        %v2751 = vunpack.c.h.b16 %v2453
        %v2752 = vunpack.c.l.b16 %v2454
        %v2753 = vunpack.c.h.b16 %v2454
        %v2754 = vunpack.c.l.b16 %v2455
        %v2755 = vunpack.c.h.b16 %v2455
        %v2756 = vunpack.c.l.b16 %v2456
        %v2757 = vunpack.c.h.b16 %v2456
        %v2758 = vunpack.c.l.b16 %v2457
        %v2759 = vunpack.c.h.b16 %v2457
        %v2760 = vunpack.c.l.b16 %v2458
        %v2761 = vunpack.c.h.b16 %v2458
        %v2762 = vunpack.c.l.b16 %v2459
        %v2763 = vunpack.c.h.b16 %v2459
        %v2764 = vunpack.c.l.b16 %v2460
        %v2765 = vunpack.c.h.b16 %v2460
        %v2766 = vunpack.c.l.b16 %v2461
        %v2767 = vunpack.c.h.b16 %v2461
        %v2768 = vunpack.c.l.b16 %v2462
        %v2769 = vunpack.c.h.b16 %v2462
        %v2770 = vunpack.c.l.b16 %v2463
        %v2771 = vunpack.c.h.b16 %v2463
        %v2772 = vunpack.c.l.b16 %v2464
        %v2773 = vunpack.c.h.b16 %v2464
        %v2774 = vunpack.c.l.b16 %v2465
        %v2775 = vunpack.c.h.b16 %v2465
        %v2776 = vunpack.c.l.b16 %v2466
        %v2777 = vunpack.c.h.b16 %v2466
        %v2778 = vunpack.c.l.b16 %v2467
        %v2779 = vunpack.c.h.b16 %v2467
        %v2780 = vunpack.c.l.b16 %v2468
        %v2781 = vunpack.c.h.b16 %v2468
        %v2782 = vunpack.c.l.b16 %v2469
        %v2783 = vunpack.c.h.b16 %v2469
        %v2784 = vunpack.c.l.b16 %v2470
        %v2785 = vunpack.c.h.b16 %v2470
        %v2786 = vunpack.c.l.b16 %v2471
        %v2787 = vunpack.c.h.b16 %v2471
        %v2788 = vunpack.c.l.b16 %v2472
        %v2789 = vunpack.c.h.b16 %v2472
        %v2790 = vunpack.c.l.b16 %v2473
        %v2791 = vunpack.c.h.b16 %v2473
        %v2792 = vunpack.c.l.b16 %v2474
        %v2793 = vunpack.c.h.b16 %v2474
        %v2794 = vunpack.c.l.b16 %v2475
        %v2795 = vunpack.c.h.b16 %v2475
        %v2796 = vunpack.c.l.b16 %v2476
        %v2797 = vunpack.c.h.b16 %v2476
        %v2798 = vunpack.c.l.b16 %v2477
        %v2799 = vunpack.c.h.b16 %v2477
        %v2800 = vunpack.c.l.b16 %v2478
        %v2801 = vunpack.c.h.b16 %v2478
        %v2802 = vunpack.c.l.b16 %v2479
        %v2803 = vunpack.c.h.b16 %v2479
        %v2804 = vunpack.c.l.b16 %v2480
        %v2805 = vunpack.c.h.b16 %v2480
        %v2806 = vunpack.c.l.b16 %v2481
        %v2807 = vunpack.c.h.b16 %v2481
        %v2808 = vunpack.c.l.b16 %v2482
        %v2809 = vunpack.c.h.b16 %v2482
        %v2810 = vunpack.c.l.b16 %v2483
        %v2811 = vunpack.c.h.b16 %v2483
        %v2812 = vunpack.c.l.b16 %v2484
        %v2813 = vunpack.c.h.b16 %v2484
        %v2814 = vunpack.c.l.b16 %v2485
        %v2815 = vunpack.c.h.b16 %v2485
        %v2816 = vunpack.c.l.b16 %v2486
        %v2817 = vunpack.c.h.b16 %v2486
        %v2818 = vunpack.c.l.b16 %v2487
        %v2819 = vunpack.c.h.b16 %v2487
        %v2820 = vunpack.c.l.b16 %v2488
        %v2821 = vunpack.c.h.b16 %v2488
        %v2822 = vunpack.c.l.b16 %v2489
        %v2823 = vunpack.c.h.b16 %v2489
        %v2824 = vunpack.c.l.b16 %v2490
        %v2825 = vunpack.c.h.b16 %v2490
        %v2826 = vunpack.c.l.b16 %v2491
        %v2827 = vunpack.c.h.b16 %v2491
        %v2828 = vunpack.c.l.b16 %v2492
        %v2829 = vunpack.c.h.b16 %v2492
        %v2830 = vunpack.c.l.b16 %v2493
        %v2831 = vunpack.c.h.b16 %v2493
        %v2832 = vunpack.c.l.b16 %v2494
        %v2833 = vunpack.c.h.b16 %v2494
        %v2834 = vunpack.c.l.b16 %v2495
        %v2835 = vunpack.c.h.b16 %v2495
        %v2836 = vunpack.c.l.b16 %v2496
        %v2837 = vunpack.c.h.b16 %v2496
        %v2838 = vunpack.c.l.b16 %v2497
        %v2839 = vunpack.c.h.b16 %v2497
        %v2840 = vunpack.c.l.b16 %v2498
        %v2841 = vunpack.c.h.b16 %v2498
        %v2842 = vunpack.c.l.b16 %v2499
        %v2843 = vunpack.c.h.b16 %v2499
        %v2844 = vunpack.c.l.b16 %v2500
        %v2845 = vunpack.c.h.b16 %v2500
        %v2846 = vunpack.c.l.b16 %v2501
        %v2847 = vunpack.c.h.b16 %v2501
        %v2848 = vunpack.c.l.b16 %v2502
        %v2849 = vunpack.c.h.b16 %v2502
        %v2850 = vunpack.c.l.b16 %v2503
        %v2851 = vunpack.c.h.b16 %v2503
        %v2852 = vunpack.c.l.b16 %v2504
        %v2853 = vunpack.c.h.b16 %v2504
        %v2854 = vunpack.c.l.b16 %v2505
        %v2855 = vunpack.c.h.b16 %v2505
        %v2856 = vunpack.c.l.b16 %v2506
        %v2857 = vunpack.c.h.b16 %v2506
        %v2858 = vunpack.c.l.b16 %v2507
        %v2859 = vunpack.c.h.b16 %v2507
        %v2860 = vunpack.c.l.b16 %v2508
        %v2861 = vunpack.c.h.b16 %v2508
        %v2862 = vunpack.c.l.b16 %v2509
        %v2863 = vunpack.c.h.b16 %v2509
        %v2864 = vunpack.c.l.b16 %v2510
        %v2865 = vunpack.c.h.b16 %v2510
        %v2866 = vunpack.c.l.b16 %v2511
        %v2867 = vunpack.c.h.b16 %v2511
        %v2868 = vunpack.c.l.b16 %v2512
        %v2869 = vunpack.c.h.b16 %v2512
        %v2870 = vunpack.c.l.b16 %v2513
        %v2871 = vunpack.c.h.b16 %v2513
        %v2872 = vunpack.c.l.b16 %v2514
        %v2873 = vunpack.c.h.b16 %v2514
        %v2874 = vunpack.c.l.b16 %v2515
        %v2875 = vunpack.c.h.b16 %v2515
        %v2876 = vunpack.c.l.b16 %v2516
        %v2877 = vunpack.c.h.b16 %v2516
        %v2878 = vunpack.c.l.b16 %v2517
        %v2879 = vunpack.c.h.b16 %v2517
        %v2880 = vunpack.c.l.b16 %v2518
        %v2881 = vunpack.c.h.b16 %v2518
        %v2882 = vunpack.c.l.b16 %v2519
        %v2883 = vunpack.c.h.b16 %v2519
        %v2884 = vunpack.c.l.b16 %v2520
        %v2885 = vunpack.c.h.b16 %v2520
        %v2886 = vunpack.c.l.b16 %v2521
        %v2887 = vunpack.c.h.b16 %v2521
        %v2888 = vunpack.c.l.b16 %v2522
        %v2889 = vunpack.c.h.b16 %v2522
        %v2890 = vunpack.c.l.b16 %v2523
        %v2891 = vunpack.c.h.b16 %v2523
        %v2892 = vunpack.c.l.b16 %v2524
        %v2893 = vunpack.c.h.b16 %v2524
        %v2894 = vunpack.c.l.b16 %v2525
        %v2895 = vunpack.c.h.b16 %v2525
        %v2896 = vunpack.c.l.b16 %v2526
        %v2897 = vunpack.c.h.b16 %v2526
        %v2898 = vunpack.c.l.b16 %v2527
        %v2899 = vunpack.c.h.b16 %v2527
        %v2900 = vunpack.c.l.b16 %v2528
        %v2901 = vunpack.c.h.b16 %v2528
        %v2902 = vunpack.c.l.b16 %v2529
        %v2903 = vunpack.c.h.b16 %v2529
        %v2904 = vunpack.c.l.b16 %v2530
        %v2905 = vunpack.c.h.b16 %v2530
        %v2906 = vunpack.c.l.b16 %v2531
        %v2907 = vunpack.c.h.b16 %v2531
        %v2908 = vunpack.c.l.b16 %v2532
        %v2909 = vunpack.c.h.b16 %v2532
        %v2910 = vunpack.c.l.b16 %v2533
        %v2911 = vunpack.c.h.b16 %v2533
        %v2912 = vunpack.c.l.b16 %v2534
        %v2913 = vunpack.c.h.b16 %v2534
        %v2914 = vunpack.c.l.b16 %v2535
        %v2915 = vunpack.c.h.b16 %v2535
        %v2916 = vunpack.c.l.b16 %v2536
        %v2917 = vunpack.c.h.b16 %v2536
        %v2918 = vunpack.c.l.b16 %v2537
        %v2919 = vunpack.c.h.b16 %v2537
        %v2920 = vunpack.c.l.b16 %v2538
        %v2921 = vunpack.c.h.b16 %v2538
        %v2922 = vunpack.c.l.b16 %v2539
        %v2923 = vunpack.c.h.b16 %v2539
        %v2924 = vunpack.c.l.b16 %v2540
        %v2925 = vunpack.c.h.b16 %v2540
        %v2926 = vunpack.c.l.b16 %v2541
        %v2927 = vunpack.c.h.b16 %v2541
        %v2928 = vunpack.c.l.b16 %v2542
        %v2929 = vunpack.c.h.b16 %v2542
        %v2930 = vunpack.c.l.b16 %v2543
        %v2931 = vunpack.c.h.b16 %v2543
        %v2932 = vunpack.c.l.b16 %v2544
        %v2933 = vunpack.c.h.b16 %v2544
        %v2934 = vunpack.c.l.b16 %v2545
        %v2935 = vunpack.c.h.b16 %v2545
        %v2936 = vunpack.c.l.b16 %v2546
        %v2937 = vunpack.c.h.b16 %v2546
        %v2938 = vunpack.c.l.b16 %v2547
        %v2939 = vunpack.c.h.b16 %v2547
        %v2940 = vunpack.c.l.b16 %v2548
        %v2941 = vunpack.c.h.b16 %v2548
        %v2942 = vunpack.c.l.b16 %v2549
        %v2943 = vunpack.c.h.b16 %v2549
        %v2944 = vpack.c.b16 %v2692, %v2688
        %v2945 = vpack.c.b16 %v2693, %v2689
        %v2946 = vpack.c.b16 %v2694, %v2690
        %v2947 = vpack.c.b16 %v2695, %v2691
        %v2948 = vpack.c.b16 %v2700, %v2696
        %v2949 = vpack.c.b16 %v2701, %v2697
        %v2950 = vpack.c.b16 %v2702, %v2698
        %v2951 = vpack.c.b16 %v2703, %v2699
        %v2952 = vpack.c.b16 %v2708, %v2704
        %v2953 = vpack.c.b16 %v2709, %v2705
        %v2954 = vpack.c.b16 %v2710, %v2706
        %v2955 = vpack.c.b16 %v2711, %v2707
        %v2956 = vpack.c.b16 %v2716, %v2712
        %v2957 = vpack.c.b16 %v2717, %v2713
        %v2958 = vpack.c.b16 %v2718, %v2714
        %v2959 = vpack.c.b16 %v2719, %v2715
        %v2960 = vpack.c.b16 %v2724, %v2720
        %v2961 = vpack.c.b16 %v2725, %v2721
        %v2962 = vpack.c.b16 %v2726, %v2722
        %v2963 = vpack.c.b16 %v2727, %v2723
        %v2964 = vpack.c.b16 %v2732, %v2728
        %v2965 = vpack.c.b16 %v2733, %v2729
        %v2966 = vpack.c.b16 %v2734, %v2730
        %v2967 = vpack.c.b16 %v2735, %v2731
        %v2968 = vpack.c.b16 %v2740, %v2736
        %v2969 = vpack.c.b16 %v2741, %v2737
        %v2970 = vpack.c.b16 %v2742, %v2738
        %v2971 = vpack.c.b16 %v2743, %v2739
        %v2972 = vpack.c.b16 %v2748, %v2744
        %v2973 = vpack.c.b16 %v2749, %v2745
        %v2974 = vpack.c.b16 %v2750, %v2746
        %v2975 = vpack.c.b16 %v2751, %v2747
        %v2976 = vpack.c.b16 %v2756, %v2752
        %v2977 = vpack.c.b16 %v2757, %v2753
        %v2978 = vpack.c.b16 %v2758, %v2754
        %v2979 = vpack.c.b16 %v2759, %v2755
        %v2980 = vpack.c.b16 %v2764, %v2760
        %v2981 = vpack.c.b16 %v2765, %v2761
        %v2982 = vpack.c.b16 %v2766, %v2762
        %v2983 = vpack.c.b16 %v2767, %v2763
        %v2984 = vpack.c.b16 %v2772, %v2768
        %v2985 = vpack.c.b16 %v2773, %v2769
        %v2986 = vpack.c.b16 %v2774, %v2770
        %v2987 = vpack.c.b16 %v2775, %v2771
        %v2988 = vpack.c.b16 %v2780, %v2776
        %v2989 = vpack.c.b16 %v2781, %v2777
        %v2990 = vpack.c.b16 %v2782, %v2778
        %v2991 = vpack.c.b16 %v2783, %v2779
        %v2992 = vpack.c.b16 %v2788, %v2784
        %v2993 = vpack.c.b16 %v2789, %v2785
        %v2994 = vpack.c.b16 %v2790, %v2786
        %v2995 = vpack.c.b16 %v2791, %v2787
        %v2996 = vpack.c.b16 %v2796, %v2792
        %v2997 = vpack.c.b16 %v2797, %v2793
        %v2998 = vpack.c.b16 %v2798, %v2794
        %v2999 = vpack.c.b16 %v2799, %v2795
        %v3000 = vpack.c.b16 %v2804, %v2800
        %v3001 = vpack.c.b16 %v2805, %v2801
        %v3002 = vpack.c.b16 %v2806, %v2802
        %v3003 = vpack.c.b16 %v2807, %v2803
        %v3004 = vpack.c.b16 %v2812, %v2808
        %v3005 = vpack.c.b16 %v2813, %v2809
        %v3006 = vpack.c.b16 %v2814, %v2810
        %v3007 = vpack.c.b16 %v2815, %v2811
        %v3008 = vpack.c.b16 %v2820, %v2816
        %v3009 = vpack.c.b16 %v2821, %v2817
        %v3010 = vpack.c.b16 %v2822, %v2818
        %v3011 = vpack.c.b16 %v2823, %v2819
        %v3012 = vpack.c.b16 %v2828, %v2824
        %v3013 = vpack.c.b16 %v2829, %v2825
        %v3014 = vpack.c.b16 %v2830, %v2826
        %v3015 = vpack.c.b16 %v2831, %v2827
        %v3016 = vpack.c.b16 %v2836, %v2832
        %v3017 = vpack.c.b16 %v2837, %v2833
        %v3018 = vpack.c.b16 %v2838, %v2834
        %v3019 = vpack.c.b16 %v2839, %v2835
        %v3020 = vpack.c.b16 %v2844, %v2840
        %v3021 = vpack.c.b16 %v2845, %v2841
        %v3022 = vpack.c.b16 %v2846, %v2842
        %v3023 = vpack.c.b16 %v2847, %v2843
        %v3024 = vpack.c.b16 %v2852, %v2848
        %v3025 = vpack.c.b16 %v2853, %v2849
        %v3026 = vpack.c.b16 %v2854, %v2850
        %v3027 = vpack.c.b16 %v2855, %v2851
        %v3028 = vpack.c.b16 %v2860, %v2856
        %v3029 = vpack.c.b16 %v2861, %v2857
        %v3030 = vpack.c.b16 %v2862, %v2858
        %v3031 = vpack.c.b16 %v2863, %v2859
        %v3032 = vpack.c.b16 %v2868, %v2864
        %v3033 = vpack.c.b16 %v2869, %v2865
        %v3034 = vpack.c.b16 %v2870, %v2866
        %v3035 = vpack.c.b16 %v2871, %v2867
        %v3036 = vpack.c.b16 %v2876, %v2872
        %v3037 = vpack.c.b16 %v2877, %v2873
        %v3038 = vpack.c.b16 %v2878, %v2874
        %v3039 = vpack.c.b16 %v2879, %v2875
        %v3040 = vpack.c.b16 %v2884, %v2880
        %v3041 = vpack.c.b16 %v2885, %v2881
        %v3042 = vpack.c.b16 %v2886, %v2882
        %v3043 = vpack.c.b16 %v2887, %v2883
        %v3044 = vpack.c.b16 %v2892, %v2888
        %v3045 = vpack.c.b16 %v2893, %v2889
        %v3046 = vpack.c.b16 %v2894, %v2890
        %v3047 = vpack.c.b16 %v2895, %v2891
        %v3048 = vpack.c.b16 %v2900, %v2896
        %v3049 = vpack.c.b16 %v2901, %v2897
        %v3050 = vpack.c.b16 %v2902, %v2898
        %v3051 = vpack.c.b16 %v2903, %v2899
        %v3052 = vpack.c.b16 %v2908, %v2904
        %v3053 = vpack.c.b16 %v2909, %v2905
        %v3054 = vpack.c.b16 %v2910, %v2906
        %v3055 = vpack.c.b16 %v2911, %v2907
        %v3056 = vpack.c.b16 %v2916, %v2912
        %v3057 = vpack.c.b16 %v2917, %v2913
        %v3058 = vpack.c.b16 %v2918, %v2914
        %v3059 = vpack.c.b16 %v2919, %v2915
        %v3060 = vpack.c.b16 %v2924, %v2920
        %v3061 = vpack.c.b16 %v2925, %v2921
        %v3062 = vpack.c.b16 %v2926, %v2922
        %v3063 = vpack.c.b16 %v2927, %v2923
        %v3064 = vpack.c.b16 %v2932, %v2928
        %v3065 = vpack.c.b16 %v2933, %v2929
        %v3066 = vpack.c.b16 %v2934, %v2930
        %v3067 = vpack.c.b16 %v2935, %v2931
        %v3068 = vpack.c.b16 %v2940, %v2936
        %v3069 = vpack.c.b16 %v2941, %v2937
        %v3070 = vpack.c.b16 %v2942, %v2938
        %v3071 = vpack.c.b16 %v2943, %v2939
        %3200 = vmatpush.bf16.msra.mxu0 %v2972
        %3201 = vmatpush.bf16.msra.mxu0 %v2968
        %3202 = vmatpush.bf16.msra.mxu0 %v2964
        %3203 = vmatpush.bf16.msra.mxu0 %v2960
        %3204 = vmatpush.bf16.msra.mxu0 %v2956
        %3205 = vmatpush.bf16.msra.mxu0 %v2952
        %3206 = vmatpush.bf16.msra.mxu0 %v2948
        %3207 = vmatpush.bf16.msra.mxu0 %v2944
        %3208 = vmatmul.bf16.gmra.mxu0 %v446
        %v3209 = vpop.f32.mrf.mxu0
        %v3210 = vadd.f32 %v2552, %v3209
        %v3211 = vpop.f32.mrf.mxu0
        %3212 = vdwg.mxu0
        %3213 = vmatpush.bf16.msra.mxu0 %v3004
        %3214 = vmatpush.bf16.msra.mxu0 %v3000
        %3215 = vmatpush.bf16.msra.mxu0 %v2996
        %3216 = vmatpush.bf16.msra.mxu0 %v2992
        %3217 = vmatpush.bf16.msra.mxu0 %v2988
        %3218 = vmatpush.bf16.msra.mxu0 %v2984
        %3219 = vmatpush.bf16.msra.mxu0 %v2980
        %3220 = vmatpush.bf16.msra.mxu0 %v2976
        %3221 = vmatmul.bf16.gmra.mxu0 %v447
        %v3222 = vpop.f32.mrf.mxu0
        %v3223 = vadd.f32 %v3210, %v3222
        %v3224 = vpop.f32.mrf.mxu0
        %3225 = vdwg.mxu0
        %3226 = vmatpush.bf16.msra.mxu0 %v3036
        %3227 = vmatpush.bf16.msra.mxu0 %v3032
        %3228 = vmatpush.bf16.msra.mxu0 %v3028
        %3229 = vmatpush.bf16.msra.mxu0 %v3024
        %3230 = vmatpush.bf16.msra.mxu0 %v3020
        %3231 = vmatpush.bf16.msra.mxu0 %v3016
        %3232 = vmatpush.bf16.msra.mxu0 %v3012
        %3233 = vmatpush.bf16.msra.mxu0 %v3008
        %3234 = vmatmul.bf16.gmra.mxu0 %v448
        %v3235 = vpop.f32.mrf.mxu0
        %v3236 = vadd.f32 %v3223, %v3235
        %v3237 = vpop.f32.mrf.mxu0
        %3238 = vdwg.mxu0
        %3239 = vmatpush.bf16.msra.mxu0 %v3068
        %3240 = vmatpush.bf16.msra.mxu0 %v3064
        %3241 = vmatpush.bf16.msra.mxu0 %v3060
        %3242 = vmatpush.bf16.msra.mxu0 %v3056
        %3243 = vmatpush.bf16.msra.mxu0 %v3052
        %3244 = vmatpush.bf16.msra.mxu0 %v3048
        %3245 = vmatpush.bf16.msra.mxu0 %v3044
        %3246 = vmatpush.bf16.msra.mxu0 %v3040
        %3247 = vmatmul.bf16.gmra.mxu0 %v449
        %v3248 = vpop.f32.mrf.mxu0
        %v3249 = vadd.f32 %v3236, %v3248
        %v3250 = vpop.f32.mrf.mxu0
        %3251 = vdwg.mxu0
        %3252 = vmatpush.bf16.msra.mxu0 %v2973
        %3253 = vmatpush.bf16.msra.mxu0 %v2969
        %3254 = vmatpush.bf16.msra.mxu0 %v2965
        %3255 = vmatpush.bf16.msra.mxu0 %v2961
        %3256 = vmatpush.bf16.msra.mxu0 %v2957
        %3257 = vmatpush.bf16.msra.mxu0 %v2953
        %3258 = vmatpush.bf16.msra.mxu0 %v2949
        %3259 = vmatpush.bf16.msra.mxu0 %v2945
        %3260 = vmatmul.bf16.gmra.mxu0 %v446
        %v3261 = vpop.f32.mrf.mxu0
        %v3262 = vadd.f32 %v2553, %v3261
        %v3263 = vpop.f32.mrf.mxu0
        %3264 = vdwg.mxu0
        %3265 = vmatpush.bf16.msra.mxu0 %v3005
        %3266 = vmatpush.bf16.msra.mxu0 %v3001
        %3267 = vmatpush.bf16.msra.mxu0 %v2997
        %3268 = vmatpush.bf16.msra.mxu0 %v2993
        %3269 = vmatpush.bf16.msra.mxu0 %v2989
        %3270 = vmatpush.bf16.msra.mxu0 %v2985
        %3271 = vmatpush.bf16.msra.mxu0 %v2981
        %3272 = vmatpush.bf16.msra.mxu0 %v2977
        %3273 = vmatmul.bf16.gmra.mxu0 %v447
        %v3274 = vpop.f32.mrf.mxu0
        %v3275 = vadd.f32 %v3262, %v3274
        %v3276 = vpop.f32.mrf.mxu0
        %3277 = vdwg.mxu0
        %3278 = vmatpush.bf16.msra.mxu0 %v3037
        %3279 = vmatpush.bf16.msra.mxu0 %v3033
        %3280 = vmatpush.bf16.msra.mxu0 %v3029
        %3281 = vmatpush.bf16.msra.mxu0 %v3025
        %3282 = vmatpush.bf16.msra.mxu0 %v3021
        %3283 = vmatpush.bf16.msra.mxu0 %v3017
        %3284 = vmatpush.bf16.msra.mxu0 %v3013
        %3285 = vmatpush.bf16.msra.mxu0 %v3009
        %3286 = vmatmul.bf16.gmra.mxu0 %v448
        %v3287 = vpop.f32.mrf.mxu0
        %v3288 = vadd.f32 %v3275, %v3287
        %v3289 = vpop.f32.mrf.mxu0
        %3290 = vdwg.mxu0
        %3291 = vmatpush.bf16.msra.mxu0 %v3069
        %3292 = vmatpush.bf16.msra.mxu0 %v3065
        %3293 = vmatpush.bf16.msra.mxu0 %v3061
        %3294 = vmatpush.bf16.msra.mxu0 %v3057
        %3295 = vmatpush.bf16.msra.mxu0 %v3053
        %3296 = vmatpush.bf16.msra.mxu0 %v3049
        %3297 = vmatpush.bf16.msra.mxu0 %v3045
        %3298 = vmatpush.bf16.msra.mxu0 %v3041
        %3299 = vmatmul.bf16.gmra.mxu0 %v449
        %v3300 = vpop.f32.mrf.mxu0
        %v3301 = vadd.f32 %v3288, %v3300
        %v3302 = vpop.f32.mrf.mxu0
        %3303 = vdwg.mxu0
        %3304 = vmatpush.bf16.msra.mxu0 %v2974
        %3305 = vmatpush.bf16.msra.mxu0 %v2970
        %3306 = vmatpush.bf16.msra.mxu0 %v2966
        %3307 = vmatpush.bf16.msra.mxu0 %v2962
        %3308 = vmatpush.bf16.msra.mxu0 %v2958
        %3309 = vmatpush.bf16.msra.mxu0 %v2954
        %3310 = vmatpush.bf16.msra.mxu0 %v2950
        %3311 = vmatpush.bf16.msra.mxu0 %v2946
        %3312 = vmatmul.bf16.gmra.mxu0 %v446
        %v3313 = vpop.f32.mrf.mxu0
        %v3314 = vadd.f32 %v2554, %v3313
        %v3315 = vpop.f32.mrf.mxu0
        %3316 = vdwg.mxu0
        %3317 = vmatpush.bf16.msra.mxu0 %v3006
        %3318 = vmatpush.bf16.msra.mxu0 %v3002
        %3319 = vmatpush.bf16.msra.mxu0 %v2998
        %3320 = vmatpush.bf16.msra.mxu0 %v2994
        %3321 = vmatpush.bf16.msra.mxu0 %v2990
        %3322 = vmatpush.bf16.msra.mxu0 %v2986
        %3323 = vmatpush.bf16.msra.mxu0 %v2982
        %3324 = vmatpush.bf16.msra.mxu0 %v2978
        %3325 = vmatmul.bf16.gmra.mxu0 %v447
        %v3326 = vpop.f32.mrf.mxu0
        %v3327 = vadd.f32 %v3314, %v3326
        %v3328 = vpop.f32.mrf.mxu0
        %3329 = vdwg.mxu0
        %3330 = vmatpush.bf16.msra.mxu0 %v3038
        %3331 = vmatpush.bf16.msra.mxu0 %v3034
        %3332 = vmatpush.bf16.msra.mxu0 %v3030
        %3333 = vmatpush.bf16.msra.mxu0 %v3026
        %3334 = vmatpush.bf16.msra.mxu0 %v3022
        %3335 = vmatpush.bf16.msra.mxu0 %v3018
        %3336 = vmatpush.bf16.msra.mxu0 %v3014
        %3337 = vmatpush.bf16.msra.mxu0 %v3010
        %3338 = vmatmul.bf16.gmra.mxu0 %v448
        %v3339 = vpop.f32.mrf.mxu0
        %v3340 = vadd.f32 %v3327, %v3339
        %v3341 = vpop.f32.mrf.mxu0
        %3342 = vdwg.mxu0
        %3343 = vmatpush.bf16.msra.mxu0 %v3070
        %3344 = vmatpush.bf16.msra.mxu0 %v3066
        %3345 = vmatpush.bf16.msra.mxu0 %v3062
        %3346 = vmatpush.bf16.msra.mxu0 %v3058
        %3347 = vmatpush.bf16.msra.mxu0 %v3054
        %3348 = vmatpush.bf16.msra.mxu0 %v3050
        %3349 = vmatpush.bf16.msra.mxu0 %v3046
        %3350 = vmatpush.bf16.msra.mxu0 %v3042
        %3351 = vmatmul.bf16.gmra.mxu0 %v449
        %v3352 = vpop.f32.mrf.mxu0
        %v3353 = vadd.f32 %v3340, %v3352
        %v3354 = vpop.f32.mrf.mxu0
        %3355 = vdwg.mxu0
        %3356 = vmatpush.bf16.msra.mxu0 %v2975
        %3357 = vmatpush.bf16.msra.mxu0 %v2971
        %3358 = vmatpush.bf16.msra.mxu0 %v2967
        %3359 = vmatpush.bf16.msra.mxu0 %v2963
        %3360 = vmatpush.bf16.msra.mxu0 %v2959
        %3361 = vmatpush.bf16.msra.mxu0 %v2955
        %3362 = vmatpush.bf16.msra.mxu0 %v2951
        %3363 = vmatpush.bf16.msra.mxu0 %v2947
        %3364 = vmatmul.bf16.gmra.mxu0 %v446
        %v3365 = vpop.f32.mrf.mxu0
        %v3366 = vadd.f32 %v2555, %v3365
        %v3367 = vpop.f32.mrf.mxu0
        %3368 = vdwg.mxu0
        %3369 = vmatpush.bf16.msra.mxu0 %v3007
        %3370 = vmatpush.bf16.msra.mxu0 %v3003
        %3371 = vmatpush.bf16.msra.mxu0 %v2999
        %3372 = vmatpush.bf16.msra.mxu0 %v2995
        %3373 = vmatpush.bf16.msra.mxu0 %v2991
        %3374 = vmatpush.bf16.msra.mxu0 %v2987
        %3375 = vmatpush.bf16.msra.mxu0 %v2983
        %3376 = vmatpush.bf16.msra.mxu0 %v2979
        %3377 = vmatmul.bf16.gmra.mxu0 %v447
        %v3378 = vpop.f32.mrf.mxu0
        %v3379 = vadd.f32 %v3366, %v3378
        %v3380 = vpop.f32.mrf.mxu0
        %3381 = vdwg.mxu0
        %3382 = vmatpush.bf16.msra.mxu0 %v3039
        %3383 = vmatpush.bf16.msra.mxu0 %v3035
        %3384 = vmatpush.bf16.msra.mxu0 %v3031
        %3385 = vmatpush.bf16.msra.mxu0 %v3027
        %3386 = vmatpush.bf16.msra.mxu0 %v3023
        %3387 = vmatpush.bf16.msra.mxu0 %v3019
        %3388 = vmatpush.bf16.msra.mxu0 %v3015
        %3389 = vmatpush.bf16.msra.mxu0 %v3011
        %3390 = vmatmul.bf16.gmra.mxu0 %v448
        %v3391 = vpop.f32.mrf.mxu0
        %v3392 = vadd.f32 %v3379, %v3391
        %v3393 = vpop.f32.mrf.mxu0
        %3394 = vdwg.mxu0
        %3395 = vmatpush.bf16.msra.mxu0 %v3071
        %3396 = vmatpush.bf16.msra.mxu0 %v3067
        %3397 = vmatpush.bf16.msra.mxu0 %v3063
        %3398 = vmatpush.bf16.msra.mxu0 %v3059
        %3399 = vmatpush.bf16.msra.mxu0 %v3055
        %3400 = vmatpush.bf16.msra.mxu0 %v3051
        %3401 = vmatpush.bf16.msra.mxu0 %v3047
        %3402 = vmatpush.bf16.msra.mxu0 %v3043
        %3403 = vmatmul.bf16.gmra.mxu0 %v449
        %v3404 = vpop.f32.mrf.mxu0
        %v3405 = vadd.f32 %v3392, %v3404
        %v3406 = vpop.f32.mrf.mxu0
        %3407 = vdwg.mxu0
        %v3408 = vmul.f32 %v1277, 0.088388346
        %v3409 = vmul.f32 %v1329, 0.088388346
        %v3410 = vmul.f32 %v1381, 0.088388346
        %v3411 = vmul.f32 %v1433, 0.088388346
        %v3412 = vpack.c.bf16 %v3409, %v3408
        %v3413 = vpack.c.bf16 %v3411, %v3410
        %v3414 = vpack.c.bf16 %v2315, %v2263
        %v3415 = vpack.c.bf16 %v2419, %v2367
        %v3416 = vpack.c.bf16 %v3301, %v3249
        %v3417 = vpack.c.bf16 %v3405, %v3353
        %3418 = vmatpush.bf16.xpose.msra.mxu0 0
        %3419 = vmatpush.bf16.xpose.msra.mxu0 0
        %3420 = vmatpush.bf16.xpose.msra.mxu0 0
        %3421 = vmatpush.bf16.xpose.msra.mxu0 0
        %3422 = vmatpush.bf16.xpose.msra.mxu0 0
        %3423 = vmatpush.bf16.xpose.msra.mxu0 0
        %3424 = vmatpush.bf16.xpose.msra.mxu0 0
        %3425 = vmatpush.bf16.xpose.msra.mxu0 %v3414
        %3426 = vmatmul.bf16.gmra.mxu0 %v3412
        %v3427 = vpop.f32.mrf.mxu0
        %v3428 = vadd.f32 0.0, %v3427
        %v3429 = vpop.f32.mrf.mxu0
        %3430 = vdwg.mxu0
        %vm3431 = vcmask 64512
        %v3432 = vsel %vm3431, %v3428, -inf
        %3433 = vmax.xlane.f32.xlu0 %v3432
        %v3434 = vpop.xlane.xlu0 %3433
        %v3435 = vsub.f32 %v3428, %v3434
        %v3436 = vmul.f32 %v3435, 1.442695
        %v3437 = vpow.pop %v3436
        %v3438 = vsel %vm3431, %v3437, 0.0
        %3439 = vadd.xlane.f32.xlu0 %v3438
        %v3440 = vpop.xlane.xlu0 %3439
        %v3441 = vrcp.pop %v3440
        %v3442 = vmul.f32 %v3437, %v3441
        %v3443 = vpack.c.bf16 %v3442, %v3442
        %v3445 = vsel %vm3431, %v3443, 0
        %vm3447 = vcmask 1043456
        %v3449 = vsel %vm3447, %v3416, 0
        %3451 = vmatpush.bf16.msra.mxu0 0
        %3452 = vmatpush.bf16.msra.mxu0 0
        %3453 = vmatpush.bf16.msra.mxu0 0
        %3454 = vmatpush.bf16.msra.mxu0 0
        %3455 = vmatpush.bf16.msra.mxu0 0
        %3456 = vmatpush.bf16.msra.mxu0 0
        %3457 = vmatpush.bf16.msra.mxu0 0
        %3458 = vmatpush.bf16.msra.mxu0 %v3449
        %3459 = vmatmul.bf16.gmra.mxu0 %v3445
        %v3460 = vpop.f32.mrf.mxu0
        %v3461 = vadd.f32 0.0, %v3460
        %v3462 = vpop.f32.mrf.mxu0
        %3463 = vdwg.mxu0
        %v3464 = vld [vmem:[%s9] sm:$0xff]
        %v3465 = vld [vmem:[%s9 + $0x8] sm:$0xff]
        %v3466 = vld [vmem:[%s9 + $0x10] sm:$0xff]
        %v3467 = vld [vmem:[%s9 + $0x18] sm:$0xff]
        %v3468 = vld [vmem:[%s9 + $0x20] sm:$0xff]
        %v3469 = vld [vmem:[%s9 + $0x28] sm:$0xff]
        %v3470 = vld [vmem:[%s9 + $0x30] sm:$0xff]
        %v3471 = vld [vmem:[%s9 + $0x38] sm:$0xff]
        %v3472 = vld [vmem:[%s9 + $0x40] sm:$0xff]
        %v3473 = vld [vmem:[%s9 + $0x48] sm:$0xff]
        %v3474 = vld [vmem:[%s9 + $0x50] sm:$0xff]
        %v3475 = vld [vmem:[%s9 + $0x58] sm:$0xff]
        %v3476 = vld [vmem:[%s9 + $0x60] sm:$0xff]
        %v3477 = vld [vmem:[%s9 + $0x68] sm:$0xff]
        %v3478 = vld [vmem:[%s9 + $0x70] sm:$0xff]
        %v3479 = vld [vmem:[%s9 + $0x78] sm:$0xff]
        %v3480 = vld [vmem:[%s9 + $0x80] sm:$0xff]
        %v3481 = vld [vmem:[%s9 + $0x88] sm:$0xff]
        %v3482 = vld [vmem:[%s9 + $0x90] sm:$0xff]
        %v3483 = vld [vmem:[%s9 + $0x98] sm:$0xff]
        %v3484 = vld [vmem:[%s9 + $0xa0] sm:$0xff]
        %v3485 = vld [vmem:[%s9 + $0xa8] sm:$0xff]
        %v3486 = vld [vmem:[%s9 + $0xb0] sm:$0xff]
        %v3487 = vld [vmem:[%s9 + $0xb8] sm:$0xff]
        %v3488 = vld [vmem:[%s9 + $0xc0] sm:$0xff]
        %v3489 = vld [vmem:[%s9 + $0xc8] sm:$0xff]
        %v3490 = vld [vmem:[%s9 + $0xd0] sm:$0xff]
        %v3491 = vld [vmem:[%s9 + $0xd8] sm:$0xff]
        %v3492 = vld [vmem:[%s9 + $0xe0] sm:$0xff]
        %v3493 = vld [vmem:[%s9 + $0xe8] sm:$0xff]
        %v3494 = vld [vmem:[%s9 + $0xf0] sm:$0xff]
        %v3495 = vld [vmem:[%s9 + $0xf8] sm:$0xff]
        %v3496 = vpack.c.bf16 %v3461, %v3461
        %v3498 = vrot.slane %v3412, 4
        %v3501 = vrot.slane %v3414, 4
        %3503 = vmatpush.bf16.xpose.msra.mxu0 0
        %3504 = vmatpush.bf16.xpose.msra.mxu0 0
        %3505 = vmatpush.bf16.xpose.msra.mxu0 0
        %3506 = vmatpush.bf16.xpose.msra.mxu0 0
        %3507 = vmatpush.bf16.xpose.msra.mxu0 0
        %3508 = vmatpush.bf16.xpose.msra.mxu0 0
        %3509 = vmatpush.bf16.xpose.msra.mxu0 0
        %3510 = vmatpush.bf16.xpose.msra.mxu0 %v3501
        %3511 = vmatmul.bf16.gmra.mxu0 %v3498
        %v3512 = vpop.f32.mrf.mxu0
        %v3513 = vadd.f32 0.0, %v3512
        %v3514 = vpop.f32.mrf.mxu0
        %3515 = vdwg.mxu0
        %v3516 = vsel %vm3431, %v3513, -inf
        %3517 = vmax.xlane.f32.xlu0 %v3516
        %v3518 = vpop.xlane.xlu0 %3517
        %v3519 = vsub.f32 %v3513, %v3518
        %v3520 = vmul.f32 %v3519, 1.442695
        %v3521 = vpow.pop %v3520
        %v3522 = vsel %vm3431, %v3521, 0.0
        %3523 = vadd.xlane.f32.xlu0 %v3522
        %v3524 = vpop.xlane.xlu0 %3523
        %v3525 = vrcp.pop %v3524
        %v3526 = vmul.f32 %v3521, %v3525
        %v3527 = vpack.c.bf16 %v3526, %v3526
        %v3529 = vrot.slane %v3416, 4
        %v3531 = vsel %vm3431, %v3527, 0
        %v3534 = vsel %vm3447, %v3529, 0
        %3536 = vmatpush.bf16.msra.mxu0 0
        %3537 = vmatpush.bf16.msra.mxu0 0
        %3538 = vmatpush.bf16.msra.mxu0 0
        %3539 = vmatpush.bf16.msra.mxu0 0
        %3540 = vmatpush.bf16.msra.mxu0 0
        %3541 = vmatpush.bf16.msra.mxu0 0
        %3542 = vmatpush.bf16.msra.mxu0 0
        %3543 = vmatpush.bf16.msra.mxu0 %v3534
        %3544 = vmatmul.bf16.gmra.mxu0 %v3531
        %v3545 = vpop.f32.mrf.mxu0
        %v3546 = vadd.f32 0.0, %v3545
        %v3547 = vpop.f32.mrf.mxu0
        %3548 = vdwg.mxu0
        %v3549 = vld [vmem:[%s9 + $0x100] sm:$0xff]
        %v3550 = vld [vmem:[%s9 + $0x108] sm:$0xff]
        %v3551 = vld [vmem:[%s9 + $0x110] sm:$0xff]
        %v3552 = vld [vmem:[%s9 + $0x118] sm:$0xff]
        %v3553 = vld [vmem:[%s9 + $0x120] sm:$0xff]
        %v3554 = vld [vmem:[%s9 + $0x128] sm:$0xff]
        %v3555 = vld [vmem:[%s9 + $0x130] sm:$0xff]
        %v3556 = vld [vmem:[%s9 + $0x138] sm:$0xff]
        %v3557 = vld [vmem:[%s9 + $0x140] sm:$0xff]
        %v3558 = vld [vmem:[%s9 + $0x148] sm:$0xff]
        %v3559 = vld [vmem:[%s9 + $0x150] sm:$0xff]
        %v3560 = vld [vmem:[%s9 + $0x158] sm:$0xff]
        %v3561 = vld [vmem:[%s9 + $0x160] sm:$0xff]
        %v3562 = vld [vmem:[%s9 + $0x168] sm:$0xff]
        %v3563 = vld [vmem:[%s9 + $0x170] sm:$0xff]
        %v3564 = vld [vmem:[%s9 + $0x178] sm:$0xff]
        %v3565 = vld [vmem:[%s9 + $0x180] sm:$0xff]
        %v3566 = vld [vmem:[%s9 + $0x188] sm:$0xff]
        %v3567 = vld [vmem:[%s9 + $0x190] sm:$0xff]
        %v3568 = vld [vmem:[%s9 + $0x198] sm:$0xff]
        %v3569 = vld [vmem:[%s9 + $0x1a0] sm:$0xff]
        %v3570 = vld [vmem:[%s9 + $0x1a8] sm:$0xff]
        %v3571 = vld [vmem:[%s9 + $0x1b0] sm:$0xff]
        %v3572 = vld [vmem:[%s9 + $0x1b8] sm:$0xff]
        %v3573 = vld [vmem:[%s9 + $0x1c0] sm:$0xff]
        %v3574 = vld [vmem:[%s9 + $0x1c8] sm:$0xff]
        %v3575 = vld [vmem:[%s9 + $0x1d0] sm:$0xff]
        %v3576 = vld [vmem:[%s9 + $0x1d8] sm:$0xff]
        %v3577 = vld [vmem:[%s9 + $0x1e0] sm:$0xff]
        %v3578 = vld [vmem:[%s9 + $0x1e8] sm:$0xff]
        %v3579 = vld [vmem:[%s9 + $0x1f0] sm:$0xff]
        %v3580 = vld [vmem:[%s9 + $0x1f8] sm:$0xff]
        %v3581 = vpack.c.bf16 %v3546, %v3546
        %v3614 = vunpack.c.l.b16 %v3549
        %v3615 = vunpack.c.h.b16 %v3549
        %v3616 = vunpack.c.l.b16 %v3550
        %v3617 = vunpack.c.h.b16 %v3550
        %v3618 = vunpack.c.l.b16 %v3551
        %v3619 = vunpack.c.h.b16 %v3551
        %v3620 = vunpack.c.l.b16 %v3552
        %v3621 = vunpack.c.h.b16 %v3552
        %v3622 = vunpack.c.l.b16 %v3553
        %v3623 = vunpack.c.h.b16 %v3553
        %v3624 = vunpack.c.l.b16 %v3554
        %v3625 = vunpack.c.h.b16 %v3554
        %v3626 = vunpack.c.l.b16 %v3555
        %v3627 = vunpack.c.h.b16 %v3555
        %v3628 = vunpack.c.l.b16 %v3556
        %v3629 = vunpack.c.h.b16 %v3556
        %v3630 = vunpack.c.l.b16 %v3557
        %v3631 = vunpack.c.h.b16 %v3557
        %v3632 = vunpack.c.l.b16 %v3558
        %v3633 = vunpack.c.h.b16 %v3558
        %v3634 = vunpack.c.l.b16 %v3559
        %v3635 = vunpack.c.h.b16 %v3559
        %v3636 = vunpack.c.l.b16 %v3560
        %v3637 = vunpack.c.h.b16 %v3560
        %v3638 = vunpack.c.l.b16 %v3561
        %v3639 = vunpack.c.h.b16 %v3561
        %v3640 = vunpack.c.l.b16 %v3562
        %v3641 = vunpack.c.h.b16 %v3562
        %v3642 = vunpack.c.l.b16 %v3563
        %v3643 = vunpack.c.h.b16 %v3563
        %v3644 = vunpack.c.l.b16 %v3564
        %v3645 = vunpack.c.h.b16 %v3564
        %v3646 = vunpack.c.l.b16 %v3565
        %v3647 = vunpack.c.h.b16 %v3565
        %v3648 = vunpack.c.l.b16 %v3566
        %v3649 = vunpack.c.h.b16 %v3566
        %v3650 = vunpack.c.l.b16 %v3567
        %v3651 = vunpack.c.h.b16 %v3567
        %v3652 = vunpack.c.l.b16 %v3568
        %v3653 = vunpack.c.h.b16 %v3568
        %v3654 = vunpack.c.l.b16 %v3569
        %v3655 = vunpack.c.h.b16 %v3569
        %v3656 = vunpack.c.l.b16 %v3570
        %v3657 = vunpack.c.h.b16 %v3570
        %v3658 = vunpack.c.l.b16 %v3571
        %v3659 = vunpack.c.h.b16 %v3571
        %v3660 = vunpack.c.l.b16 %v3572
        %v3661 = vunpack.c.h.b16 %v3572
        %v3662 = vunpack.c.l.b16 %v3573
        %v3663 = vunpack.c.h.b16 %v3573
        %v3664 = vunpack.c.l.b16 %v3574
        %v3665 = vunpack.c.h.b16 %v3574
        %v3666 = vunpack.c.l.b16 %v3575
        %v3667 = vunpack.c.h.b16 %v3575
        %v3668 = vunpack.c.l.b16 %v3576
        %v3669 = vunpack.c.h.b16 %v3576
        %v3670 = vunpack.c.l.b16 %v3577
        %v3671 = vunpack.c.h.b16 %v3577
        %v3672 = vunpack.c.l.b16 %v3578
        %v3673 = vunpack.c.h.b16 %v3578
        %v3674 = vunpack.c.l.b16 %v3579
        %v3675 = vunpack.c.h.b16 %v3579
        %v3676 = vunpack.c.l.b16 %v3580
        %v3677 = vunpack.c.h.b16 %v3580
        %v3678 = vpack.c.b16 %v3618, %v3614
        %v3679 = vpack.c.b16 %v3619, %v3615
        %v3680 = vpack.c.b16 %v3620, %v3616
        %v3681 = vpack.c.b16 %v3621, %v3617
        %v3682 = vpack.c.b16 %v3626, %v3622
        %v3683 = vpack.c.b16 %v3627, %v3623
        %v3684 = vpack.c.b16 %v3628, %v3624
        %v3685 = vpack.c.b16 %v3629, %v3625
        %v3686 = vpack.c.b16 %v3634, %v3630
        %v3687 = vpack.c.b16 %v3635, %v3631
        %v3688 = vpack.c.b16 %v3636, %v3632
        %v3689 = vpack.c.b16 %v3637, %v3633
        %v3690 = vpack.c.b16 %v3642, %v3638
        %v3691 = vpack.c.b16 %v3643, %v3639
        %v3692 = vpack.c.b16 %v3644, %v3640
        %v3693 = vpack.c.b16 %v3645, %v3641
        %v3694 = vpack.c.b16 %v3650, %v3646
        %v3695 = vpack.c.b16 %v3651, %v3647
        %v3696 = vpack.c.b16 %v3652, %v3648
        %v3697 = vpack.c.b16 %v3653, %v3649
        %v3698 = vpack.c.b16 %v3658, %v3654
        %v3699 = vpack.c.b16 %v3659, %v3655
        %v3700 = vpack.c.b16 %v3660, %v3656
        %v3701 = vpack.c.b16 %v3661, %v3657
        %v3702 = vpack.c.b16 %v3666, %v3662
        %v3703 = vpack.c.b16 %v3667, %v3663
        %v3704 = vpack.c.b16 %v3668, %v3664
        %v3705 = vpack.c.b16 %v3669, %v3665
        %v3706 = vpack.c.b16 %v3674, %v3670
        %v3707 = vpack.c.b16 %v3675, %v3671
        %v3708 = vpack.c.b16 %v3676, %v3672
        %v3709 = vpack.c.b16 %v3677, %v3673
        %3742 = vmatpush.bf16.msra.mxu0 %v3706
        %3743 = vmatpush.bf16.msra.mxu0 %v3702
        %3744 = vmatpush.bf16.msra.mxu0 %v3698
        %3745 = vmatpush.bf16.msra.mxu0 %v3694
        %3746 = vmatpush.bf16.msra.mxu0 %v3690
        %3747 = vmatpush.bf16.msra.mxu0 %v3686
        %3748 = vmatpush.bf16.msra.mxu0 %v3682
        %3749 = vmatpush.bf16.msra.mxu0 %v3678
        %3750 = vmatmul.bf16.gmra.mxu0 %v3581
        %v3751 = vpop.f32.mrf.mxu0
        %v3752 = vadd.f32 0.0, %v3751
        %v3753 = vpop.f32.mrf.mxu0
        %3754 = vdwg.mxu0
        %3755 = vmatpush.bf16.msra.mxu0 %v3707
        %3756 = vmatpush.bf16.msra.mxu0 %v3703
        %3757 = vmatpush.bf16.msra.mxu0 %v3699
        %3758 = vmatpush.bf16.msra.mxu0 %v3695
        %3759 = vmatpush.bf16.msra.mxu0 %v3691
        %3760 = vmatpush.bf16.msra.mxu0 %v3687
        %3761 = vmatpush.bf16.msra.mxu0 %v3683
        %3762 = vmatpush.bf16.msra.mxu0 %v3679
        %3763 = vmatmul.bf16.gmra.mxu0 %v3581
        %v3764 = vpop.f32.mrf.mxu0
        %v3765 = vadd.f32 0.0, %v3764
        %v3766 = vpop.f32.mrf.mxu0
        %3767 = vdwg.mxu0
        %3768 = vmatpush.bf16.msra.mxu0 %v3708
        %3769 = vmatpush.bf16.msra.mxu0 %v3704
        %3770 = vmatpush.bf16.msra.mxu0 %v3700
        %3771 = vmatpush.bf16.msra.mxu0 %v3696
        %3772 = vmatpush.bf16.msra.mxu0 %v3692
        %3773 = vmatpush.bf16.msra.mxu0 %v3688
        %3774 = vmatpush.bf16.msra.mxu0 %v3684
        %3775 = vmatpush.bf16.msra.mxu0 %v3680
        %3776 = vmatmul.bf16.gmra.mxu0 %v3581
        %v3777 = vpop.f32.mrf.mxu0
        %v3778 = vadd.f32 0.0, %v3777
        %v3779 = vpop.f32.mrf.mxu0
        %3780 = vdwg.mxu0
        %3781 = vmatpush.bf16.msra.mxu0 %v3709
        %3782 = vmatpush.bf16.msra.mxu0 %v3705
        %3783 = vmatpush.bf16.msra.mxu0 %v3701
        %3784 = vmatpush.bf16.msra.mxu0 %v3697
        %3785 = vmatpush.bf16.msra.mxu0 %v3693
        %3786 = vmatpush.bf16.msra.mxu0 %v3689
        %3787 = vmatpush.bf16.msra.mxu0 %v3685
        %3788 = vmatpush.bf16.msra.mxu0 %v3681
        %3789 = vmatmul.bf16.gmra.mxu0 %v3581
        %v3790 = vpop.f32.mrf.mxu0
        %v3791 = vadd.f32 0.0, %v3790
        %v3792 = vpop.f32.mrf.mxu0
        %3793 = vdwg.mxu0
        %v3826 = vunpack.c.l.b16 %v3464
        %v3827 = vunpack.c.h.b16 %v3464
        %v3828 = vunpack.c.l.b16 %v3465
        %v3829 = vunpack.c.h.b16 %v3465
        %v3830 = vunpack.c.l.b16 %v3466
        %v3831 = vunpack.c.h.b16 %v3466
        %v3832 = vunpack.c.l.b16 %v3467
        %v3833 = vunpack.c.h.b16 %v3467
        %v3834 = vunpack.c.l.b16 %v3468
        %v3835 = vunpack.c.h.b16 %v3468
        %v3836 = vunpack.c.l.b16 %v3469
        %v3837 = vunpack.c.h.b16 %v3469
        %v3838 = vunpack.c.l.b16 %v3470
        %v3839 = vunpack.c.h.b16 %v3470
        %v3840 = vunpack.c.l.b16 %v3471
        %v3841 = vunpack.c.h.b16 %v3471
        %v3842 = vunpack.c.l.b16 %v3472
        %v3843 = vunpack.c.h.b16 %v3472
        %v3844 = vunpack.c.l.b16 %v3473
        %v3845 = vunpack.c.h.b16 %v3473
        %v3846 = vunpack.c.l.b16 %v3474
        %v3847 = vunpack.c.h.b16 %v3474
        %v3848 = vunpack.c.l.b16 %v3475
        %v3849 = vunpack.c.h.b16 %v3475
        %v3850 = vunpack.c.l.b16 %v3476
        %v3851 = vunpack.c.h.b16 %v3476
        %v3852 = vunpack.c.l.b16 %v3477
        %v3853 = vunpack.c.h.b16 %v3477
        %v3854 = vunpack.c.l.b16 %v3478
        %v3855 = vunpack.c.h.b16 %v3478
        %v3856 = vunpack.c.l.b16 %v3479
        %v3857 = vunpack.c.h.b16 %v3479
        %v3858 = vunpack.c.l.b16 %v3480
        %v3859 = vunpack.c.h.b16 %v3480
        %v3860 = vunpack.c.l.b16 %v3481
        %v3861 = vunpack.c.h.b16 %v3481
        %v3862 = vunpack.c.l.b16 %v3482
        %v3863 = vunpack.c.h.b16 %v3482
        %v3864 = vunpack.c.l.b16 %v3483
        %v3865 = vunpack.c.h.b16 %v3483
        %v3866 = vunpack.c.l.b16 %v3484
        %v3867 = vunpack.c.h.b16 %v3484
        %v3868 = vunpack.c.l.b16 %v3485
        %v3869 = vunpack.c.h.b16 %v3485
        %v3870 = vunpack.c.l.b16 %v3486
        %v3871 = vunpack.c.h.b16 %v3486
        %v3872 = vunpack.c.l.b16 %v3487
        %v3873 = vunpack.c.h.b16 %v3487
        %v3874 = vunpack.c.l.b16 %v3488
        %v3875 = vunpack.c.h.b16 %v3488
        %v3876 = vunpack.c.l.b16 %v3489
        %v3877 = vunpack.c.h.b16 %v3489
        %v3878 = vunpack.c.l.b16 %v3490
        %v3879 = vunpack.c.h.b16 %v3490
        %v3880 = vunpack.c.l.b16 %v3491
        %v3881 = vunpack.c.h.b16 %v3491
        %v3882 = vunpack.c.l.b16 %v3492
        %v3883 = vunpack.c.h.b16 %v3492
        %v3884 = vunpack.c.l.b16 %v3493
        %v3885 = vunpack.c.h.b16 %v3493
        %v3886 = vunpack.c.l.b16 %v3494
        %v3887 = vunpack.c.h.b16 %v3494
        %v3888 = vunpack.c.l.b16 %v3495
        %v3889 = vunpack.c.h.b16 %v3495
        %v3890 = vpack.c.b16 %v3830, %v3826
        %v3891 = vpack.c.b16 %v3831, %v3827
        %v3892 = vpack.c.b16 %v3832, %v3828
        %v3893 = vpack.c.b16 %v3833, %v3829
        %v3894 = vpack.c.b16 %v3838, %v3834
        %v3895 = vpack.c.b16 %v3839, %v3835
        %v3896 = vpack.c.b16 %v3840, %v3836
        %v3897 = vpack.c.b16 %v3841, %v3837
        %v3898 = vpack.c.b16 %v3846, %v3842
        %v3899 = vpack.c.b16 %v3847, %v3843
        %v3900 = vpack.c.b16 %v3848, %v3844
        %v3901 = vpack.c.b16 %v3849, %v3845
        %v3902 = vpack.c.b16 %v3854, %v3850
        %v3903 = vpack.c.b16 %v3855, %v3851
        %v3904 = vpack.c.b16 %v3856, %v3852
        %v3905 = vpack.c.b16 %v3857, %v3853
        %v3906 = vpack.c.b16 %v3862, %v3858
        %v3907 = vpack.c.b16 %v3863, %v3859
        %v3908 = vpack.c.b16 %v3864, %v3860
        %v3909 = vpack.c.b16 %v3865, %v3861
        %v3910 = vpack.c.b16 %v3870, %v3866
        %v3911 = vpack.c.b16 %v3871, %v3867
        %v3912 = vpack.c.b16 %v3872, %v3868
        %v3913 = vpack.c.b16 %v3873, %v3869
        %v3914 = vpack.c.b16 %v3878, %v3874
        %v3915 = vpack.c.b16 %v3879, %v3875
        %v3916 = vpack.c.b16 %v3880, %v3876
        %v3917 = vpack.c.b16 %v3881, %v3877
        %v3918 = vpack.c.b16 %v3886, %v3882
        %v3919 = vpack.c.b16 %v3887, %v3883
        %v3920 = vpack.c.b16 %v3888, %v3884
        %v3921 = vpack.c.b16 %v3889, %v3885
        %3954 = vmatpush.bf16.msra.mxu0 %v3918
        %3955 = vmatpush.bf16.msra.mxu0 %v3914
        %3956 = vmatpush.bf16.msra.mxu0 %v3910
        %3957 = vmatpush.bf16.msra.mxu0 %v3906
        %3958 = vmatpush.bf16.msra.mxu0 %v3902
        %3959 = vmatpush.bf16.msra.mxu0 %v3898
        %3960 = vmatpush.bf16.msra.mxu0 %v3894
        %3961 = vmatpush.bf16.msra.mxu0 %v3890
        %3962 = vmatmul.bf16.gmra.mxu0 %v3496
        %v3963 = vpop.f32.mrf.mxu0
        %v3964 = vadd.f32 %v3752, %v3963
        %v3965 = vpop.f32.mrf.mxu0
        %3966 = vdwg.mxu0
        %3967 = vmatpush.bf16.msra.mxu0 %v3919
        %3968 = vmatpush.bf16.msra.mxu0 %v3915
        %3969 = vmatpush.bf16.msra.mxu0 %v3911
        %3970 = vmatpush.bf16.msra.mxu0 %v3907
        %3971 = vmatpush.bf16.msra.mxu0 %v3903
        %3972 = vmatpush.bf16.msra.mxu0 %v3899
        %3973 = vmatpush.bf16.msra.mxu0 %v3895
        %3974 = vmatpush.bf16.msra.mxu0 %v3891
        %3975 = vmatmul.bf16.gmra.mxu0 %v3496
        %v3976 = vpop.f32.mrf.mxu0
        %v3977 = vadd.f32 %v3765, %v3976
        %v3978 = vpop.f32.mrf.mxu0
        %3979 = vdwg.mxu0
        %3980 = vmatpush.bf16.msra.mxu0 %v3920
        %3981 = vmatpush.bf16.msra.mxu0 %v3916
        %3982 = vmatpush.bf16.msra.mxu0 %v3912
        %3983 = vmatpush.bf16.msra.mxu0 %v3908
        %3984 = vmatpush.bf16.msra.mxu0 %v3904
        %3985 = vmatpush.bf16.msra.mxu0 %v3900
        %3986 = vmatpush.bf16.msra.mxu0 %v3896
        %3987 = vmatpush.bf16.msra.mxu0 %v3892
        %3988 = vmatmul.bf16.gmra.mxu0 %v3496
        %v3989 = vpop.f32.mrf.mxu0
        %v3990 = vadd.f32 %v3778, %v3989
        %v3991 = vpop.f32.mrf.mxu0
        %3992 = vdwg.mxu0
        %3993 = vmatpush.bf16.msra.mxu0 %v3921
        %3994 = vmatpush.bf16.msra.mxu0 %v3917
        %3995 = vmatpush.bf16.msra.mxu0 %v3913
        %3996 = vmatpush.bf16.msra.mxu0 %v3909
        %3997 = vmatpush.bf16.msra.mxu0 %v3905
        %3998 = vmatpush.bf16.msra.mxu0 %v3901
        %3999 = vmatpush.bf16.msra.mxu0 %v3897
        %4000 = vmatpush.bf16.msra.mxu0 %v3893
        %4001 = vmatmul.bf16.gmra.mxu0 %v3496
        %v4002 = vpop.f32.mrf.mxu0
        %v4003 = vadd.f32 %v3791, %v4002
        %v4004 = vpop.f32.mrf.mxu0
        %4005 = vdwg.mxu0
        %4006 = vmatpush.bf16.xpose.msra.mxu0 0
        %4007 = vmatpush.bf16.xpose.msra.mxu0 0
        %4008 = vmatpush.bf16.xpose.msra.mxu0 0
        %4009 = vmatpush.bf16.xpose.msra.mxu0 0
        %4010 = vmatpush.bf16.xpose.msra.mxu0 0
        %4011 = vmatpush.bf16.xpose.msra.mxu0 0
        %4012 = vmatpush.bf16.xpose.msra.mxu0 0
        %4013 = vmatpush.bf16.xpose.msra.mxu0 %v3415
        %4014 = vmatmul.bf16.gmra.mxu0 %v3413
        %v4015 = vpop.f32.mrf.mxu0
        %v4016 = vadd.f32 0.0, %v4015
        %v4017 = vpop.f32.mrf.mxu0
        %4018 = vdwg.mxu0
        %v4019 = vsel %vm3431, %v4016, -inf
        %4020 = vmax.xlane.f32.xlu0 %v4019
        %v4021 = vpop.xlane.xlu0 %4020
        %v4022 = vsub.f32 %v4016, %v4021
        %v4023 = vmul.f32 %v4022, 1.442695
        %v4024 = vpow.pop %v4023
        %v4025 = vsel %vm3431, %v4024, 0.0
        %4026 = vadd.xlane.f32.xlu0 %v4025
        %v4027 = vpop.xlane.xlu0 %4026
        %v4028 = vrcp.pop %v4027
        %v4029 = vmul.f32 %v4024, %v4028
        %v4030 = vpack.c.bf16 %v4029, %v4029
        %v4032 = vsel %vm3431, %v4030, 0
        %v4035 = vsel %vm3447, %v3417, 0
        %4037 = vmatpush.bf16.msra.mxu0 0
        %4038 = vmatpush.bf16.msra.mxu0 0
        %4039 = vmatpush.bf16.msra.mxu0 0
        %4040 = vmatpush.bf16.msra.mxu0 0
        %4041 = vmatpush.bf16.msra.mxu0 0
        %4042 = vmatpush.bf16.msra.mxu0 0
        %4043 = vmatpush.bf16.msra.mxu0 0
        %4044 = vmatpush.bf16.msra.mxu0 %v4035
        %4045 = vmatmul.bf16.gmra.mxu0 %v4032
        %v4046 = vpop.f32.mrf.mxu0
        %v4047 = vadd.f32 0.0, %v4046
        %v4048 = vpop.f32.mrf.mxu0
        %4049 = vdwg.mxu0
        %v4050 = vld [vmem:[%s9 + $0x200] sm:$0xff]
        %v4051 = vld [vmem:[%s9 + $0x208] sm:$0xff]
        %v4052 = vld [vmem:[%s9 + $0x210] sm:$0xff]
        %v4053 = vld [vmem:[%s9 + $0x218] sm:$0xff]
        %v4054 = vld [vmem:[%s9 + $0x220] sm:$0xff]
        %v4055 = vld [vmem:[%s9 + $0x228] sm:$0xff]
        %v4056 = vld [vmem:[%s9 + $0x230] sm:$0xff]
        %v4057 = vld [vmem:[%s9 + $0x238] sm:$0xff]
        %v4058 = vld [vmem:[%s9 + $0x240] sm:$0xff]
        %v4059 = vld [vmem:[%s9 + $0x248] sm:$0xff]
        %v4060 = vld [vmem:[%s9 + $0x250] sm:$0xff]
        %v4061 = vld [vmem:[%s9 + $0x258] sm:$0xff]
        %v4062 = vld [vmem:[%s9 + $0x260] sm:$0xff]
        %v4063 = vld [vmem:[%s9 + $0x268] sm:$0xff]
        %v4064 = vld [vmem:[%s9 + $0x270] sm:$0xff]
        %v4065 = vld [vmem:[%s9 + $0x278] sm:$0xff]
        %v4066 = vld [vmem:[%s9 + $0x280] sm:$0xff]
        %v4067 = vld [vmem:[%s9 + $0x288] sm:$0xff]
        %v4068 = vld [vmem:[%s9 + $0x290] sm:$0xff]
        %v4069 = vld [vmem:[%s9 + $0x298] sm:$0xff]
        %v4070 = vld [vmem:[%s9 + $0x2a0] sm:$0xff]
        %v4071 = vld [vmem:[%s9 + $0x2a8] sm:$0xff]
        %v4072 = vld [vmem:[%s9 + $0x2b0] sm:$0xff]
        %v4073 = vld [vmem:[%s9 + $0x2b8] sm:$0xff]
        %v4074 = vld [vmem:[%s9 + $0x2c0] sm:$0xff]
        %v4075 = vld [vmem:[%s9 + $0x2c8] sm:$0xff]
        %v4076 = vld [vmem:[%s9 + $0x2d0] sm:$0xff]
        %v4077 = vld [vmem:[%s9 + $0x2d8] sm:$0xff]
        %v4078 = vld [vmem:[%s9 + $0x2e0] sm:$0xff]
        %v4079 = vld [vmem:[%s9 + $0x2e8] sm:$0xff]
        %v4080 = vld [vmem:[%s9 + $0x2f0] sm:$0xff]
        %v4081 = vld [vmem:[%s9 + $0x2f8] sm:$0xff]
        %v4082 = vpack.c.bf16 %v4047, %v4047
        %v4115 = vunpack.c.l.b16 %v4050
        %v4116 = vunpack.c.h.b16 %v4050
        %v4117 = vunpack.c.l.b16 %v4051
        %v4118 = vunpack.c.h.b16 %v4051
        %v4119 = vunpack.c.l.b16 %v4052
        %v4120 = vunpack.c.h.b16 %v4052
        %v4121 = vunpack.c.l.b16 %v4053
        %v4122 = vunpack.c.h.b16 %v4053
        %v4123 = vunpack.c.l.b16 %v4054
        %v4124 = vunpack.c.h.b16 %v4054
        %v4125 = vunpack.c.l.b16 %v4055
        %v4126 = vunpack.c.h.b16 %v4055
        %v4127 = vunpack.c.l.b16 %v4056
        %v4128 = vunpack.c.h.b16 %v4056
        %v4129 = vunpack.c.l.b16 %v4057
        %v4130 = vunpack.c.h.b16 %v4057
        %v4131 = vunpack.c.l.b16 %v4058
        %v4132 = vunpack.c.h.b16 %v4058
        %v4133 = vunpack.c.l.b16 %v4059
        %v4134 = vunpack.c.h.b16 %v4059
        %v4135 = vunpack.c.l.b16 %v4060
        %v4136 = vunpack.c.h.b16 %v4060
        %v4137 = vunpack.c.l.b16 %v4061
        %v4138 = vunpack.c.h.b16 %v4061
        %v4139 = vunpack.c.l.b16 %v4062
        %v4140 = vunpack.c.h.b16 %v4062
        %v4141 = vunpack.c.l.b16 %v4063
        %v4142 = vunpack.c.h.b16 %v4063
        %v4143 = vunpack.c.l.b16 %v4064
        %v4144 = vunpack.c.h.b16 %v4064
        %v4145 = vunpack.c.l.b16 %v4065
        %v4146 = vunpack.c.h.b16 %v4065
        %v4147 = vunpack.c.l.b16 %v4066
        %v4148 = vunpack.c.h.b16 %v4066
        %v4149 = vunpack.c.l.b16 %v4067
        %v4150 = vunpack.c.h.b16 %v4067
        %v4151 = vunpack.c.l.b16 %v4068
        %v4152 = vunpack.c.h.b16 %v4068
        %v4153 = vunpack.c.l.b16 %v4069
        %v4154 = vunpack.c.h.b16 %v4069
        %v4155 = vunpack.c.l.b16 %v4070
        %v4156 = vunpack.c.h.b16 %v4070
        %v4157 = vunpack.c.l.b16 %v4071
        %v4158 = vunpack.c.h.b16 %v4071
        %v4159 = vunpack.c.l.b16 %v4072
        %v4160 = vunpack.c.h.b16 %v4072
        %v4161 = vunpack.c.l.b16 %v4073
        %v4162 = vunpack.c.h.b16 %v4073
        %v4163 = vunpack.c.l.b16 %v4074
        %v4164 = vunpack.c.h.b16 %v4074
        %v4165 = vunpack.c.l.b16 %v4075
        %v4166 = vunpack.c.h.b16 %v4075
        %v4167 = vunpack.c.l.b16 %v4076
        %v4168 = vunpack.c.h.b16 %v4076
        %v4169 = vunpack.c.l.b16 %v4077
        %v4170 = vunpack.c.h.b16 %v4077
        %v4171 = vunpack.c.l.b16 %v4078
        %v4172 = vunpack.c.h.b16 %v4078
        %v4173 = vunpack.c.l.b16 %v4079
        %v4174 = vunpack.c.h.b16 %v4079
        %v4175 = vunpack.c.l.b16 %v4080
        %v4176 = vunpack.c.h.b16 %v4080
        %v4177 = vunpack.c.l.b16 %v4081
        %v4178 = vunpack.c.h.b16 %v4081
        %v4179 = vpack.c.b16 %v4119, %v4115
        %v4180 = vpack.c.b16 %v4120, %v4116
        %v4181 = vpack.c.b16 %v4121, %v4117
        %v4182 = vpack.c.b16 %v4122, %v4118
        %v4183 = vpack.c.b16 %v4127, %v4123
        %v4184 = vpack.c.b16 %v4128, %v4124
        %v4185 = vpack.c.b16 %v4129, %v4125
        %v4186 = vpack.c.b16 %v4130, %v4126
        %v4187 = vpack.c.b16 %v4135, %v4131
        %v4188 = vpack.c.b16 %v4136, %v4132
        %v4189 = vpack.c.b16 %v4137, %v4133
        %v4190 = vpack.c.b16 %v4138, %v4134
        %v4191 = vpack.c.b16 %v4143, %v4139
        %v4192 = vpack.c.b16 %v4144, %v4140
        %v4193 = vpack.c.b16 %v4145, %v4141
        %v4194 = vpack.c.b16 %v4146, %v4142
        %v4195 = vpack.c.b16 %v4151, %v4147
        %v4196 = vpack.c.b16 %v4152, %v4148
        %v4197 = vpack.c.b16 %v4153, %v4149
        %v4198 = vpack.c.b16 %v4154, %v4150
        %v4199 = vpack.c.b16 %v4159, %v4155
        %v4200 = vpack.c.b16 %v4160, %v4156
        %v4201 = vpack.c.b16 %v4161, %v4157
        %v4202 = vpack.c.b16 %v4162, %v4158
        %v4203 = vpack.c.b16 %v4167, %v4163
        %v4204 = vpack.c.b16 %v4168, %v4164
        %v4205 = vpack.c.b16 %v4169, %v4165
        %v4206 = vpack.c.b16 %v4170, %v4166
        %v4207 = vpack.c.b16 %v4175, %v4171
        %v4208 = vpack.c.b16 %v4176, %v4172
        %v4209 = vpack.c.b16 %v4177, %v4173
        %v4210 = vpack.c.b16 %v4178, %v4174
        %4243 = vmatpush.bf16.msra.mxu0 %v4207
        %4244 = vmatpush.bf16.msra.mxu0 %v4203
        %4245 = vmatpush.bf16.msra.mxu0 %v4199
        %4246 = vmatpush.bf16.msra.mxu0 %v4195
        %4247 = vmatpush.bf16.msra.mxu0 %v4191
        %4248 = vmatpush.bf16.msra.mxu0 %v4187
        %4249 = vmatpush.bf16.msra.mxu0 %v4183
        %4250 = vmatpush.bf16.msra.mxu0 %v4179
        %4251 = vmatmul.bf16.gmra.mxu0 %v4082
        %v4252 = vpop.f32.mrf.mxu0
        %v4253 = vadd.f32 0.0, %v4252
        %v4254 = vpop.f32.mrf.mxu0
        %4255 = vdwg.mxu0
        %4256 = vmatpush.bf16.msra.mxu0 %v4208
        %4257 = vmatpush.bf16.msra.mxu0 %v4204
        %4258 = vmatpush.bf16.msra.mxu0 %v4200
        %4259 = vmatpush.bf16.msra.mxu0 %v4196
        %4260 = vmatpush.bf16.msra.mxu0 %v4192
        %4261 = vmatpush.bf16.msra.mxu0 %v4188
        %4262 = vmatpush.bf16.msra.mxu0 %v4184
        %4263 = vmatpush.bf16.msra.mxu0 %v4180
        %4264 = vmatmul.bf16.gmra.mxu0 %v4082
        %v4265 = vpop.f32.mrf.mxu0
        %v4266 = vadd.f32 0.0, %v4265
        %v4267 = vpop.f32.mrf.mxu0
        %4268 = vdwg.mxu0
        %4269 = vmatpush.bf16.msra.mxu0 %v4209
        %4270 = vmatpush.bf16.msra.mxu0 %v4205
        %4271 = vmatpush.bf16.msra.mxu0 %v4201
        %4272 = vmatpush.bf16.msra.mxu0 %v4197
        %4273 = vmatpush.bf16.msra.mxu0 %v4193
        %4274 = vmatpush.bf16.msra.mxu0 %v4189
        %4275 = vmatpush.bf16.msra.mxu0 %v4185
        %4276 = vmatpush.bf16.msra.mxu0 %v4181
        %4277 = vmatmul.bf16.gmra.mxu0 %v4082
        %v4278 = vpop.f32.mrf.mxu0
        %v4279 = vadd.f32 0.0, %v4278
        %v4280 = vpop.f32.mrf.mxu0
        %4281 = vdwg.mxu0
        %4282 = vmatpush.bf16.msra.mxu0 %v4210
        %4283 = vmatpush.bf16.msra.mxu0 %v4206
        %4284 = vmatpush.bf16.msra.mxu0 %v4202
        %4285 = vmatpush.bf16.msra.mxu0 %v4198
        %4286 = vmatpush.bf16.msra.mxu0 %v4194
        %4287 = vmatpush.bf16.msra.mxu0 %v4190
        %4288 = vmatpush.bf16.msra.mxu0 %v4186
        %4289 = vmatpush.bf16.msra.mxu0 %v4182
        %4290 = vmatmul.bf16.gmra.mxu0 %v4082
        %v4291 = vpop.f32.mrf.mxu0
        %v4292 = vadd.f32 0.0, %v4291
        %v4293 = vpop.f32.mrf.mxu0
        %4294 = vdwg.mxu0
        %v4295 = vadd.f32 %v3964, %v4253
        %v4296 = vadd.f32 %v3977, %v4266
        %v4297 = vadd.f32 %v3990, %v4279
        %v4298 = vadd.f32 %v4003, %v4292
        %v4300 = vrot.slane %v3413, 4
        %v4303 = vrot.slane %v3415, 4
        %4305 = vmatpush.bf16.xpose.msra.mxu0 0
        %4306 = vmatpush.bf16.xpose.msra.mxu0 0
        %4307 = vmatpush.bf16.xpose.msra.mxu0 0
        %4308 = vmatpush.bf16.xpose.msra.mxu0 0
        %4309 = vmatpush.bf16.xpose.msra.mxu0 0
        %4310 = vmatpush.bf16.xpose.msra.mxu0 0
        %4311 = vmatpush.bf16.xpose.msra.mxu0 0
        %4312 = vmatpush.bf16.xpose.msra.mxu0 %v4303
        %4313 = vmatmul.bf16.gmra.mxu0 %v4300
        %v4314 = vpop.f32.mrf.mxu0
        %v4315 = vadd.f32 0.0, %v4314
        %v4316 = vpop.f32.mrf.mxu0
        %4317 = vdwg.mxu0
        %v4318 = vsel %vm3431, %v4315, -inf
        %4319 = vmax.xlane.f32.xlu0 %v4318
        %v4320 = vpop.xlane.xlu0 %4319
        %v4321 = vsub.f32 %v4315, %v4320
        %v4322 = vmul.f32 %v4321, 1.442695
        %v4323 = vpow.pop %v4322
        %v4324 = vsel %vm3431, %v4323, 0.0
        %4325 = vadd.xlane.f32.xlu0 %v4324
        %v4326 = vpop.xlane.xlu0 %4325
        %v4327 = vrcp.pop %v4326
        %v4328 = vmul.f32 %v4323, %v4327
        %v4329 = vpack.c.bf16 %v4328, %v4328
        %v4331 = vrot.slane %v3417, 4
        %v4333 = vsel %vm3431, %v4329, 0
        %v4336 = vsel %vm3447, %v4331, 0
        %4338 = vmatpush.bf16.msra.mxu0 0
        %4339 = vmatpush.bf16.msra.mxu0 0
        %4340 = vmatpush.bf16.msra.mxu0 0
        %4341 = vmatpush.bf16.msra.mxu0 0
        %4342 = vmatpush.bf16.msra.mxu0 0
        %4343 = vmatpush.bf16.msra.mxu0 0
        %4344 = vmatpush.bf16.msra.mxu0 0
        %4345 = vmatpush.bf16.msra.mxu0 %v4336
        %4346 = vmatmul.bf16.gmra.mxu0 %v4333
        %v4347 = vpop.f32.mrf.mxu0
        %v4348 = vadd.f32 0.0, %v4347
        %v4349 = vpop.f32.mrf.mxu0
        %4350 = vdwg.mxu0
        %v4351 = vld [vmem:[%s9 + $0x300] sm:$0xff]
        %v4352 = vld [vmem:[%s9 + $0x308] sm:$0xff]
        %v4353 = vld [vmem:[%s9 + $0x310] sm:$0xff]
        %v4354 = vld [vmem:[%s9 + $0x318] sm:$0xff]
        %v4355 = vld [vmem:[%s9 + $0x320] sm:$0xff]
        %v4356 = vld [vmem:[%s9 + $0x328] sm:$0xff]
        %v4357 = vld [vmem:[%s9 + $0x330] sm:$0xff]
        %v4358 = vld [vmem:[%s9 + $0x338] sm:$0xff]
        %v4359 = vld [vmem:[%s9 + $0x340] sm:$0xff]
        %v4360 = vld [vmem:[%s9 + $0x348] sm:$0xff]
        %v4361 = vld [vmem:[%s9 + $0x350] sm:$0xff]
        %v4362 = vld [vmem:[%s9 + $0x358] sm:$0xff]
        %v4363 = vld [vmem:[%s9 + $0x360] sm:$0xff]
        %v4364 = vld [vmem:[%s9 + $0x368] sm:$0xff]
        %v4365 = vld [vmem:[%s9 + $0x370] sm:$0xff]
        %v4366 = vld [vmem:[%s9 + $0x378] sm:$0xff]
        %v4367 = vld [vmem:[%s9 + $0x380] sm:$0xff]
        %v4368 = vld [vmem:[%s9 + $0x388] sm:$0xff]
        %v4369 = vld [vmem:[%s9 + $0x390] sm:$0xff]
        %v4370 = vld [vmem:[%s9 + $0x398] sm:$0xff]
        %v4371 = vld [vmem:[%s9 + $0x3a0] sm:$0xff]
        %v4372 = vld [vmem:[%s9 + $0x3a8] sm:$0xff]
        %v4373 = vld [vmem:[%s9 + $0x3b0] sm:$0xff]
        %v4374 = vld [vmem:[%s9 + $0x3b8] sm:$0xff]
        %v4375 = vld [vmem:[%s9 + $0x3c0] sm:$0xff]
        %v4376 = vld [vmem:[%s9 + $0x3c8] sm:$0xff]
        %v4377 = vld [vmem:[%s9 + $0x3d0] sm:$0xff]
        %v4378 = vld [vmem:[%s9 + $0x3d8] sm:$0xff]
        %v4379 = vld [vmem:[%s9 + $0x3e0] sm:$0xff]
        %v4380 = vld [vmem:[%s9 + $0x3e8] sm:$0xff]
        %v4381 = vld [vmem:[%s9 + $0x3f0] sm:$0xff]
        %v4382 = vld [vmem:[%s9 + $0x3f8] sm:$0xff]
        %v4383 = vpack.c.bf16 %v4348, %v4348
        %v4416 = vunpack.c.l.b16 %v4351
        %v4417 = vunpack.c.h.b16 %v4351
        %v4418 = vunpack.c.l.b16 %v4352
        %v4419 = vunpack.c.h.b16 %v4352
        %v4420 = vunpack.c.l.b16 %v4353
        %v4421 = vunpack.c.h.b16 %v4353
        %v4422 = vunpack.c.l.b16 %v4354
        %v4423 = vunpack.c.h.b16 %v4354
        %v4424 = vunpack.c.l.b16 %v4355
        %v4425 = vunpack.c.h.b16 %v4355
        %v4426 = vunpack.c.l.b16 %v4356
        %v4427 = vunpack.c.h.b16 %v4356
        %v4428 = vunpack.c.l.b16 %v4357
        %v4429 = vunpack.c.h.b16 %v4357
        %v4430 = vunpack.c.l.b16 %v4358
        %v4431 = vunpack.c.h.b16 %v4358
        %v4432 = vunpack.c.l.b16 %v4359
        %v4433 = vunpack.c.h.b16 %v4359
        %v4434 = vunpack.c.l.b16 %v4360
        %v4435 = vunpack.c.h.b16 %v4360
        %v4436 = vunpack.c.l.b16 %v4361
        %v4437 = vunpack.c.h.b16 %v4361
        %v4438 = vunpack.c.l.b16 %v4362
        %v4439 = vunpack.c.h.b16 %v4362
        %v4440 = vunpack.c.l.b16 %v4363
        %v4441 = vunpack.c.h.b16 %v4363
        %v4442 = vunpack.c.l.b16 %v4364
        %v4443 = vunpack.c.h.b16 %v4364
        %v4444 = vunpack.c.l.b16 %v4365
        %v4445 = vunpack.c.h.b16 %v4365
        %v4446 = vunpack.c.l.b16 %v4366
        %v4447 = vunpack.c.h.b16 %v4366
        %v4448 = vunpack.c.l.b16 %v4367
        %v4449 = vunpack.c.h.b16 %v4367
        %v4450 = vunpack.c.l.b16 %v4368
        %v4451 = vunpack.c.h.b16 %v4368
        %v4452 = vunpack.c.l.b16 %v4369
        %v4453 = vunpack.c.h.b16 %v4369
        %v4454 = vunpack.c.l.b16 %v4370
        %v4455 = vunpack.c.h.b16 %v4370
        %v4456 = vunpack.c.l.b16 %v4371
        %v4457 = vunpack.c.h.b16 %v4371
        %v4458 = vunpack.c.l.b16 %v4372
        %v4459 = vunpack.c.h.b16 %v4372
        %v4460 = vunpack.c.l.b16 %v4373
        %v4461 = vunpack.c.h.b16 %v4373
        %v4462 = vunpack.c.l.b16 %v4374
        %v4463 = vunpack.c.h.b16 %v4374
        %v4464 = vunpack.c.l.b16 %v4375
        %v4465 = vunpack.c.h.b16 %v4375
        %v4466 = vunpack.c.l.b16 %v4376
        %v4467 = vunpack.c.h.b16 %v4376
        %v4468 = vunpack.c.l.b16 %v4377
        %v4469 = vunpack.c.h.b16 %v4377
        %v4470 = vunpack.c.l.b16 %v4378
        %v4471 = vunpack.c.h.b16 %v4378
        %v4472 = vunpack.c.l.b16 %v4379
        %v4473 = vunpack.c.h.b16 %v4379
        %v4474 = vunpack.c.l.b16 %v4380
        %v4475 = vunpack.c.h.b16 %v4380
        %v4476 = vunpack.c.l.b16 %v4381
        %v4477 = vunpack.c.h.b16 %v4381
        %v4478 = vunpack.c.l.b16 %v4382
        %v4479 = vunpack.c.h.b16 %v4382
        %v4480 = vpack.c.b16 %v4420, %v4416
        %v4481 = vpack.c.b16 %v4421, %v4417
        %v4482 = vpack.c.b16 %v4422, %v4418
        %v4483 = vpack.c.b16 %v4423, %v4419
        %v4484 = vpack.c.b16 %v4428, %v4424
        %v4485 = vpack.c.b16 %v4429, %v4425
        %v4486 = vpack.c.b16 %v4430, %v4426
        %v4487 = vpack.c.b16 %v4431, %v4427
        %v4488 = vpack.c.b16 %v4436, %v4432
        %v4489 = vpack.c.b16 %v4437, %v4433
        %v4490 = vpack.c.b16 %v4438, %v4434
        %v4491 = vpack.c.b16 %v4439, %v4435
        %v4492 = vpack.c.b16 %v4444, %v4440
        %v4493 = vpack.c.b16 %v4445, %v4441
        %v4494 = vpack.c.b16 %v4446, %v4442
        %v4495 = vpack.c.b16 %v4447, %v4443
        %v4496 = vpack.c.b16 %v4452, %v4448
        %v4497 = vpack.c.b16 %v4453, %v4449
        %v4498 = vpack.c.b16 %v4454, %v4450
        %v4499 = vpack.c.b16 %v4455, %v4451
        %v4500 = vpack.c.b16 %v4460, %v4456
        %v4501 = vpack.c.b16 %v4461, %v4457
        %v4502 = vpack.c.b16 %v4462, %v4458
        %v4503 = vpack.c.b16 %v4463, %v4459
        %v4504 = vpack.c.b16 %v4468, %v4464
        %v4505 = vpack.c.b16 %v4469, %v4465
        %v4506 = vpack.c.b16 %v4470, %v4466
        %v4507 = vpack.c.b16 %v4471, %v4467
        %v4508 = vpack.c.b16 %v4476, %v4472
        %v4509 = vpack.c.b16 %v4477, %v4473
        %v4510 = vpack.c.b16 %v4478, %v4474
        %v4511 = vpack.c.b16 %v4479, %v4475
        %4544 = vmatpush.bf16.msra.mxu0 %v4508
        %4545 = vmatpush.bf16.msra.mxu0 %v4504
        %4546 = vmatpush.bf16.msra.mxu0 %v4500
        %4547 = vmatpush.bf16.msra.mxu0 %v4496
        %4548 = vmatpush.bf16.msra.mxu0 %v4492
        %4549 = vmatpush.bf16.msra.mxu0 %v4488
        %4550 = vmatpush.bf16.msra.mxu0 %v4484
        %4551 = vmatpush.bf16.msra.mxu0 %v4480
        %4552 = vmatmul.bf16.gmra.mxu0 %v4383
        %v4553 = vpop.f32.mrf.mxu0
        %v4554 = vadd.f32 0.0, %v4553
        %v4555 = vpop.f32.mrf.mxu0
        %4556 = vdwg.mxu0
        %4557 = vmatpush.bf16.msra.mxu0 %v4509
        %4558 = vmatpush.bf16.msra.mxu0 %v4505
        %4559 = vmatpush.bf16.msra.mxu0 %v4501
        %4560 = vmatpush.bf16.msra.mxu0 %v4497
        %4561 = vmatpush.bf16.msra.mxu0 %v4493
        %4562 = vmatpush.bf16.msra.mxu0 %v4489
        %4563 = vmatpush.bf16.msra.mxu0 %v4485
        %4564 = vmatpush.bf16.msra.mxu0 %v4481
        %4565 = vmatmul.bf16.gmra.mxu0 %v4383
        %v4566 = vpop.f32.mrf.mxu0
        %v4567 = vadd.f32 0.0, %v4566
        %v4568 = vpop.f32.mrf.mxu0
        %4569 = vdwg.mxu0
        %4570 = vmatpush.bf16.msra.mxu0 %v4510
        %4571 = vmatpush.bf16.msra.mxu0 %v4506
        %4572 = vmatpush.bf16.msra.mxu0 %v4502
        %4573 = vmatpush.bf16.msra.mxu0 %v4498
        %4574 = vmatpush.bf16.msra.mxu0 %v4494
        %4575 = vmatpush.bf16.msra.mxu0 %v4490
        %4576 = vmatpush.bf16.msra.mxu0 %v4486
        %4577 = vmatpush.bf16.msra.mxu0 %v4482
        %4578 = vmatmul.bf16.gmra.mxu0 %v4383
        %v4579 = vpop.f32.mrf.mxu0
        %v4580 = vadd.f32 0.0, %v4579
        %v4581 = vpop.f32.mrf.mxu0
        %4582 = vdwg.mxu0
        %4583 = vmatpush.bf16.msra.mxu0 %v4511
        %4584 = vmatpush.bf16.msra.mxu0 %v4507
        %4585 = vmatpush.bf16.msra.mxu0 %v4503
        %4586 = vmatpush.bf16.msra.mxu0 %v4499
        %4587 = vmatpush.bf16.msra.mxu0 %v4495
        %4588 = vmatpush.bf16.msra.mxu0 %v4491
        %4589 = vmatpush.bf16.msra.mxu0 %v4487
        %4590 = vmatpush.bf16.msra.mxu0 %v4483
        %4591 = vmatmul.bf16.gmra.mxu0 %v4383
        %v4592 = vpop.f32.mrf.mxu0
        %v4593 = vadd.f32 0.0, %v4592
        %v4594 = vpop.f32.mrf.mxu0
        %4595 = vdwg.mxu0
        %v4596 = vadd.f32 %v4295, %v4554
        %v4597 = vadd.f32 %v4296, %v4567
        %v4598 = vadd.f32 %v4297, %v4580
        %v4599 = vadd.f32 %v4298, %v4593
        %v4600 = vld [vmem:[%s10] sm:$0xf]
        %v4602 = vperm.slane %v4600, 0
        %v4603 = vperm.slane %v4600, 1
        %v4604 = vperm.slane %v4600, 2
        %v4605 = vperm.slane %v4600, 3
        %v4610 = vadd.f32 %v4596, %v4602
        %v4611 = vadd.f32 %v4597, %v4603
        %v4612 = vadd.f32 %v4598, %v4604
        %v4613 = vadd.f32 %v4599, %v4605
        %4614 = vst [vmem:[%s409] sm:$0xff] %v4610
        %4615 = vst [vmem:[%s409 + $0x8] sm:$0xff] %v4611
        %4616 = vst [vmem:[%s409 + $0x10] sm:$0xff] %v4612
        %4617 = vst [vmem:[%s409 + $0x18] sm:$0xff] %v4613
        %s4618 = sand.u32 %s279, 1
        %s4619 = scalar_lea.sflag [#allocation3], %s4618
        %s4620 = sand.u32 %s279, 1
        %s4621 = smul.addr %s4620, 32
        %s4622 = scalar_lea.vmem [#allocation2], %s4621
        // Predicated region
        $region65: #{multihead_attention.1} parent=63 // pred_check
          %p4623 = pneg %p289
        $region66: #{multihead_attention.1} parent=63 // pred_check_branch
          %4625 = sbr.rel (%p4623) target = $region68
        $region67: #{multihead_attention.1} parent=63 // pred_region
          %4627 = vsyncadd %s4619, 0
          %s4628 = smul.addr %s25, 4
          %s4629 = smul.addr %s4628, 8
          %s4630 = scalar_lea.hbm %s11, %s4629
          %s4632 = sshll.u32 %s4622, 4
          %s4633 = int_to_ptr.vmem [resolvable:$true] %s4632
          %s4634 = sshll.u32 %s4630, 4
          %s4635 = int_to_ptr.hbm [resolvable:$true] %s4634
          %4637 = dma.vmem_to_hbm [thread:$0]  %s4633, 512, %s4635, %s4619
        $region68: #{multihead_attention.1} parent=63 // pred_fallthru
          _
      $region64: #{multihead_attention.1} parent=5 // pred_fallthru
        _
      %p4638 = scmp.le.s32.totalorder 2, %s20
      // Predicated region
      $region69: #{multihead_attention.1} parent=5 // pred_check
        %p4639 = pneg %p4638
      $region70: #{multihead_attention.1} parent=5 // pred_check_branch
        %4641 = sbr.rel (%p4639) target = $region72
      $region71: #{multihead_attention.1} parent=5 // pred_region
        %s4642 = ssub.s32 %s20, 2
        // Predicated region
        $region73: #{multihead_attention.1} parent=71 // pred_check
          %p4643 = pneg %p295
        $region74: #{multihead_attention.1} parent=71 // pred_check_branch
          %4645 = sbr.rel (%p4643) target = $region76
        $region75: #{multihead_attention.1} parent=71 // pred_region
          %s4646 = sand.u32 %s280, 1
          %s4647 = scalar_lea.sflag [#allocation3], %s4646
          %s4648 = sand.u32 %s280, 1
          %s4649 = smul.addr %s4648, 32
          %s4650 = scalar_lea.vmem [#allocation2], %s4649
          %4652 = dma.done %s4647, 512
        $region76: #{multihead_attention.1} parent=71 // pred_fallthru
          _
      $region72: #{multihead_attention.1} parent=5 // pred_fallthru
        _
    $region6: #{multihead_attention.1} parent=1 // loop_footer
      %s24 = sadd.s32 1, %s20
    $region7: #{multihead_attention.1} parent=1 // loop_footer_branch
      %19 = sbr.rel target = $region3
    $region8: #{multihead_attention.1} parent=1 // loop_exit
      _
    %4653 = vsyncpa [#allocation3], 1
    %s4654 = scalar_lea.sflag [#allocation3], 1
    %4655 = vsyncpa %s4654, 1

</llo_original>
